<compile_context>
chip_gen: v7x
topology: tpu7x:2x2x1
jax: 0.10.0
libtpu: 0.0.40
codegen_flags: <defaults>
</compile_context>

<pallas_src>
import jax
import jax.numpy as jnp
from jax.experimental import pallas as pl
from jax.experimental.pallas import tpu as pltpu

LANE = 128


def _round_up(n, m):
    return (n + m - 1) // m * m


def _cdiv(a, b):
    return -(-a // b)


def _generator_kernel(x_ref,
                      w1_ref, b1_ref,
                      w2_ref, b2_ref,
                      w3_ref, b3_ref,
                      w4_ref, b4_ref,
                      w5_ref, b5_ref,
                      o_ref):
    # Fused 5-layer MLP on one (TB, shape1) batch tile.  The tile is split into
    # two independent M-halves so MXU work of one half overlaps VPU/EUP work of
    # the other.  Weights are bf16 and resident in VMEM across all grid steps
    # (constant index_map); every matmul feeds the MXU with bf16 operands and
    # an f32 accumulator; bias-add/ReLU (VPU) and tanh (EUP) stay in f32.
    half = x_ref.shape[0] // 2
    layers = ((w1_ref, b1_ref, "relu"),
              (w2_ref, b2_ref, "relu"),
              (w3_ref, b3_ref, "relu"),
              (w4_ref, b4_ref, "tanh"),
              (w5_ref, b5_ref, None))

    hs = [x_ref[pl.ds(m * half, half), :].astype(jnp.bfloat16) for m in range(2)]
    for w_ref, b_ref, act in layers:
        w = w_ref[...]
        b = b_ref[...]
        # Matmul for both halves first (independent MXU pushes), then epilogues.
        accs = [jnp.dot(h, w, preferred_element_type=jnp.float32) + b for h in hs]
        if act == "relu":
            hs = [jnp.maximum(a, 0.0).astype(jnp.bfloat16) for a in accs]
        elif act == "tanh":
            # Note: a bf16 tanh would be ~2x faster on v6e/v7x (bf16 EUP), but
            # f32 is kept so the same kernel stays on the exact path on v5e.
            hs = [jnp.tanh(a).astype(jnp.bfloat16) for a in accs]
        else:
            hs = accs  # final layer: keep the f32 accumulator

    for m in range(2):
        o_ref[pl.ds(m * half, half), :] = hs[m].astype(o_ref.dtype)


def init_generator_params(key, shape1, dtype=jnp.float32):
    """Deterministic init mimicking PyTorch nn.Linear default
    (U[-1/sqrt(fan_in), 1/sqrt(fan_in)]).  Weights stored [in, out]."""
    dims = [shape1, 128, 256, 512, 1024, shape1]
    params = []
    for i in range(5):
        fan_in, fan_out = dims[i], dims[i + 1]
        key, kw, kb = jax.random.split(key, 3)
        bound = float(fan_in) ** -0.5
        w = jax.random.uniform(kw, (fan_in, fan_out), dtype, -bound, bound)
        b = jax.random.uniform(kb, (1, fan_out), dtype, -bound, bound)
        params.append((w, b))
    return params


def pack_generator_params(params, lane=LANE):
    """Cast weights to bf16.  Only the last-layer output dim is zero-padded to
    a lane multiple (lane-dense final store); zero padding does not change the
    math and the wrapper slices it off."""
    (w1, b1), (w2, b2), (w3, b3), (w4, b4), (w5, b5) = params
    f_out = w5.shape[1]
    f_out_pad = _round_up(f_out, lane)
    w5p = jnp.zeros((w5.shape[0], f_out_pad), w5.dtype).at[:, :f_out].set(w5)
    b5p = jnp.zeros((1, f_out_pad), b5.dtype).at[:, :f_out].set(b5)
    packed = [(w1, b1), (w2, b2), (w3, b3), (w4, b4), (w5p, b5p)]
    return [(w.astype(jnp.bfloat16), b.astype(jnp.float32)) for w, b in packed]


def _choose_tiling(B, tb_max=1024):
    """Pick (tile_rows, grid_steps).  Small batch -> one big tile (best on
    single-TC v5e/v6e).  Large batch -> at least 2 grid steps so the
    'parallel' batch axis can be sharded across v7x's 2 TensorCores, with the
    tile capped at tb_max rows and rounded to 16 (two 8-row M-halves)."""
    b16 = _round_up(max(B, 1), 16)
    if b16 < 256:
        return b16, 1
    steps = max(2, _cdiv(b16, tb_max))
    tb = _round_up(_cdiv(b16, steps), 16)
    return tb, steps


def generator_forward(noise, real_data, packed_params, *, tb=None):
    """Pallas equivalent of Generator.forward(noise, real_data)."""
    del real_data  # unused when FIXED_GENERATOR is False (reference semantics)
    B, shape1 = noise.shape
    f_out_pad = packed_params[-1][0].shape[1]

    if tb is None:
        tb, steps = _choose_tiling(B)
    else:
        tb = _round_up(max(int(tb), 16), 16)
        steps = _cdiv(_round_up(B, 16), tb)
    b_pad = tb * steps

    x = noise
    if b_pad != B:
        x = jnp.pad(noise, ((0, b_pad - B), (0, 0)))  # batch padding only

    flat_args = [x]
    in_specs = [pl.BlockSpec((tb, shape1), lambda i: (i, 0))]
    for w, b in packed_params:
        flat_args += [w, b]
        # Full-shape blocks with constant index_map -> weights stay resident
        # in VMEM across all grid steps (~1.7 MB bf16 total, negligible).
        in_specs += [pl.BlockSpec(w.shape, lambda i: (0, 0)),
                     pl.BlockSpec(b.shape, lambda i: (0, 0))]

    flops = 2 * b_pad * sum(int(w.shape[0]) * int(w.shape[1])
                            for w, _ in packed_params)
    bytes_accessed = (x.size * x.dtype.itemsize
                      + sum(w.size * w.dtype.itemsize + b.size * b.dtype.itemsize
                            for w, b in packed_params)
                      + b_pad * f_out_pad * noise.dtype.itemsize)
    cost = pl.CostEstimate(flops=flops,
                           transcendentals=b_pad * 1024,      # tanh layer
                           bytes_accessed=bytes_accessed)

    out = pl.pallas_call(
        _generator_kernel,
        out_shape=jax.ShapeDtypeStruct((b_pad, f_out_pad), noise.dtype),
        grid=(steps,),
        in_specs=in_specs,
        out_specs=pl.BlockSpec((tb, f_out_pad), lambda i: (i, 0)),
        compiler_params=pltpu.CompilerParams(
            dimension_semantics=("parallel",),
            # Large tiles must also fit v5e's 16 MiB scoped-VMEM default.
            vmem_limit_bytes=32 * 1024 * 1024),
        cost_estimate=cost,
    )(*flat_args)

    return out[:B, :shape1]


def generator_reference(noise, params):
    """Pure-JAX reference mimicking the kernel's mixed precision
    (bf16 matmul operands, f32 accumulation, f32 activations)."""
    h = noise
    for i, (w, b) in enumerate(params):
        h = jnp.dot(h.astype(jnp.bfloat16), w.astype(jnp.bfloat16),
                    preferred_element_type=jnp.float32) + b
        if i < 3:
            h = jnp.maximum(h, 0.0)
        elif i == 3:
            h = jnp.tanh(h)
    return h


if __name__ == "__main__":
    key = jax.random.PRNGKey(0)
    k_data, k_param = jax.random.split(key)

    shape1 = 32   # feature dim of the generator input/output
    params = init_generator_params(k_param, shape1)
    packed = pack_generator_params(params)

    fwd = jax.jit(generator_forward)

    # Two cases: small batch (single-tile path) and an awkward batch size
    # (two grid steps + batch padding path).
    for B in (64, 300):
        k_n, k_r = jax.random.split(jax.random.fold_in(k_data, B))
        noise = jax.random.normal(k_n, (B, shape1), jnp.float32)
        real_data = jax.random.normal(k_r, (B, shape1), jnp.float32)

        out = jax.block_until_ready(fwd(noise, real_data, packed))
        ref = generator_reference(noise, params)

        assert out.shape == (B, shape1)
        err = float(jnp.max(jnp.abs(out - ref)))
        assert jnp.allclose(out, ref, atol=2e-2, rtol=2e-2), err

    print("KERNEL_OK")
</pallas_src>

<mosaic_0001>
module attributes {stable_mosaic.version = 11 : i64} {
  func.func @_generator_kernel(%arg0: i32, %arg1: memref<64x32xf32, #tpu.memory_space<vmem>>, %arg2: memref<32x128xbf16, #tpu.memory_space<vmem>>, %arg3: memref<1x128xf32, #tpu.memory_space<vmem>>, %arg4: memref<128x256xbf16, #tpu.memory_space<vmem>>, %arg5: memref<1x256xf32, #tpu.memory_space<vmem>>, %arg6: memref<256x512xbf16, #tpu.memory_space<vmem>>, %arg7: memref<1x512xf32, #tpu.memory_space<vmem>>, %arg8: memref<512x1024xbf16, #tpu.memory_space<vmem>>, %arg9: memref<1x1024xf32, #tpu.memory_space<vmem>>, %arg10: memref<1024x128xbf16, #tpu.memory_space<vmem>>, %arg11: memref<1x128xf32, #tpu.memory_space<vmem>>, %arg12: memref<64x128xf32, #tpu.memory_space<vmem>>) attributes {dimension_semantics = [#tpu.dimension_semantics<parallel>], iteration_bounds = array<i64: 1>, scalar_prefetch = 0 : i64, scratch_operands = 0 : i64, tpu.core_type = #tpu.core_type<tc>, window_params = [{transform_indices = @transform_0, window_bounds = array<i64: 64, 32>}, {pipeline_mode = #tpu.pipeline_mode<synchronous>, transform_indices = @transform_1, window_bounds = array<i64: 32, 128>}, {pipeline_mode = #tpu.pipeline_mode<synchronous>, transform_indices = @transform_2, window_bounds = array<i64: 1, 128>}, {pipeline_mode = #tpu.pipeline_mode<synchronous>, transform_indices = @transform_3, window_bounds = array<i64: 128, 256>}, {pipeline_mode = #tpu.pipeline_mode<synchronous>, transform_indices = @transform_4, window_bounds = array<i64: 1, 256>}, {pipeline_mode = #tpu.pipeline_mode<synchronous>, transform_indices = @transform_5, window_bounds = array<i64: 256, 512>}, {pipeline_mode = #tpu.pipeline_mode<synchronous>, transform_indices = @transform_6, window_bounds = array<i64: 1, 512>}, {pipeline_mode = #tpu.pipeline_mode<synchronous>, transform_indices = @transform_7, window_bounds = array<i64: 512, 1024>}, {pipeline_mode = #tpu.pipeline_mode<synchronous>, transform_indices = @transform_8, window_bounds = array<i64: 1, 1024>}, {pipeline_mode = #tpu.pipeline_mode<synchronous>, transform_indices = @transform_9, window_bounds = array<i64: 1024, 128>}, {pipeline_mode = #tpu.pipeline_mode<synchronous>, transform_indices = @transform_10, window_bounds = array<i64: 1, 128>}, {transform_indices = @transform_11, window_bounds = array<i64: 64, 128>}]} {
    %c0 = arith.constant 0 : index
    %c0_0 = arith.constant 0 : index
    %0 = vector.load %arg1[%c0, %c0_0] : memref<64x32xf32, #tpu.memory_space<vmem>>, vector<32x32xf32>
    %1 = arith.truncf %0 : vector<32x32xf32> to vector<32x32xbf16>
    %c32 = arith.constant 32 : index
    %c0_1 = arith.constant 0 : index
    %2 = vector.load %arg1[%c32, %c0_1] : memref<64x32xf32, #tpu.memory_space<vmem>>, vector<32x32xf32>
    %3 = arith.truncf %2 : vector<32x32xf32> to vector<32x32xbf16>
    %c0_2 = arith.constant 0 : index
    %c0_3 = arith.constant 0 : index
    %4 = vector.load %arg2[%c0_2, %c0_3] : memref<32x128xbf16, #tpu.memory_space<vmem>>, vector<32x128xbf16>
    %c0_4 = arith.constant 0 : index
    %c0_5 = arith.constant 0 : index
    %5 = vector.load %arg3[%c0_4, %c0_5] : memref<1x128xf32, #tpu.memory_space<vmem>>, vector<1x128xf32>
    %cst = arith.constant dense<0.000000e+00> : vector<32x128xf32>
    %6 = tpu.matmul %1, %4, %cst {dimension_numbers = #tpu.dot_dimension_numbers<[1], [0], [0], [1], [0, 0, 1, 1], [], []>} : vector<32x32xbf16>, vector<32x128xbf16>, vector<32x128xf32> -> vector<32x128xf32>
    %7 = vector.broadcast %5 : vector<1x128xf32> to vector<32x128xf32>
    %8 = arith.addf %6, %7 : vector<32x128xf32>
    %cst_6 = arith.constant dense<0.000000e+00> : vector<32x128xf32>
    %9 = tpu.matmul %3, %4, %cst_6 {dimension_numbers = #tpu.dot_dimension_numbers<[1], [0], [0], [1], [0, 0, 1, 1], [], []>} : vector<32x32xbf16>, vector<32x128xbf16>, vector<32x128xf32> -> vector<32x128xf32>
    %10 = vector.broadcast %5 : vector<1x128xf32> to vector<32x128xf32>
    %11 = arith.addf %9, %10 : vector<32x128xf32>
    %cst_7 = arith.constant 0.000000e+00 : f32
    %12 = vector.broadcast %cst_7 : f32 to vector<32x128xf32>
    %13 = arith.maximumf %8, %12 : vector<32x128xf32>
    %14 = arith.truncf %13 : vector<32x128xf32> to vector<32x128xbf16>
    %cst_8 = arith.constant 0.000000e+00 : f32
    %15 = vector.broadcast %cst_8 : f32 to vector<32x128xf32>
    %16 = arith.maximumf %11, %15 : vector<32x128xf32>
    %17 = arith.truncf %16 : vector<32x128xf32> to vector<32x128xbf16>
    %c0_9 = arith.constant 0 : index
    %c0_10 = arith.constant 0 : index
    %18 = vector.load %arg4[%c0_9, %c0_10] : memref<128x256xbf16, #tpu.memory_space<vmem>>, vector<128x256xbf16>
    %c0_11 = arith.constant 0 : index
    %c0_12 = arith.constant 0 : index
    %19 = vector.load %arg5[%c0_11, %c0_12] : memref<1x256xf32, #tpu.memory_space<vmem>>, vector<1x256xf32>
    %cst_13 = arith.constant dense<0.000000e+00> : vector<32x256xf32>
    %20 = tpu.matmul %14, %18, %cst_13 {dimension_numbers = #tpu.dot_dimension_numbers<[1], [0], [0], [1], [0, 0, 1, 1], [], []>} : vector<32x128xbf16>, vector<128x256xbf16>, vector<32x256xf32> -> vector<32x256xf32>
    %21 = vector.broadcast %19 : vector<1x256xf32> to vector<32x256xf32>
    %22 = arith.addf %20, %21 : vector<32x256xf32>
    %cst_14 = arith.constant dense<0.000000e+00> : vector<32x256xf32>
    %23 = tpu.matmul %17, %18, %cst_14 {dimension_numbers = #tpu.dot_dimension_numbers<[1], [0], [0], [1], [0, 0, 1, 1], [], []>} : vector<32x128xbf16>, vector<128x256xbf16>, vector<32x256xf32> -> vector<32x256xf32>
    %24 = vector.broadcast %19 : vector<1x256xf32> to vector<32x256xf32>
    %25 = arith.addf %23, %24 : vector<32x256xf32>
    %cst_15 = arith.constant 0.000000e+00 : f32
    %26 = vector.broadcast %cst_15 : f32 to vector<32x256xf32>
    %27 = arith.maximumf %22, %26 : vector<32x256xf32>
    %28 = arith.truncf %27 : vector<32x256xf32> to vector<32x256xbf16>
    %cst_16 = arith.constant 0.000000e+00 : f32
    %29 = vector.broadcast %cst_16 : f32 to vector<32x256xf32>
    %30 = arith.maximumf %25, %29 : vector<32x256xf32>
    %31 = arith.truncf %30 : vector<32x256xf32> to vector<32x256xbf16>
    %c0_17 = arith.constant 0 : index
    %c0_18 = arith.constant 0 : index
    %32 = vector.load %arg6[%c0_17, %c0_18] : memref<256x512xbf16, #tpu.memory_space<vmem>>, vector<256x512xbf16>
    %c0_19 = arith.constant 0 : index
    %c0_20 = arith.constant 0 : index
    %33 = vector.load %arg7[%c0_19, %c0_20] : memref<1x512xf32, #tpu.memory_space<vmem>>, vector<1x512xf32>
    %cst_21 = arith.constant dense<0.000000e+00> : vector<32x512xf32>
    %34 = tpu.matmul %28, %32, %cst_21 {dimension_numbers = #tpu.dot_dimension_numbers<[1], [0], [0], [1], [0, 0, 1, 1], [], []>} : vector<32x256xbf16>, vector<256x512xbf16>, vector<32x512xf32> -> vector<32x512xf32>
    %35 = vector.broadcast %33 : vector<1x512xf32> to vector<32x512xf32>
    %36 = arith.addf %34, %35 : vector<32x512xf32>
    %cst_22 = arith.constant dense<0.000000e+00> : vector<32x512xf32>
    %37 = tpu.matmul %31, %32, %cst_22 {dimension_numbers = #tpu.dot_dimension_numbers<[1], [0], [0], [1], [0, 0, 1, 1], [], []>} : vector<32x256xbf16>, vector<256x512xbf16>, vector<32x512xf32> -> vector<32x512xf32>
    %38 = vector.broadcast %33 : vector<1x512xf32> to vector<32x512xf32>
    %39 = arith.addf %37, %38 : vector<32x512xf32>
    %cst_23 = arith.constant 0.000000e+00 : f32
    %40 = vector.broadcast %cst_23 : f32 to vector<32x512xf32>
    %41 = arith.maximumf %36, %40 : vector<32x512xf32>
    %42 = arith.truncf %41 : vector<32x512xf32> to vector<32x512xbf16>
    %cst_24 = arith.constant 0.000000e+00 : f32
    %43 = vector.broadcast %cst_24 : f32 to vector<32x512xf32>
    %44 = arith.maximumf %39, %43 : vector<32x512xf32>
    %45 = arith.truncf %44 : vector<32x512xf32> to vector<32x512xbf16>
    %c0_25 = arith.constant 0 : index
    %c0_26 = arith.constant 0 : index
    %46 = vector.load %arg8[%c0_25, %c0_26] : memref<512x1024xbf16, #tpu.memory_space<vmem>>, vector<512x1024xbf16>
    %c0_27 = arith.constant 0 : index
    %c0_28 = arith.constant 0 : index
    %47 = vector.load %arg9[%c0_27, %c0_28] : memref<1x1024xf32, #tpu.memory_space<vmem>>, vector<1x1024xf32>
    %cst_29 = arith.constant dense<0.000000e+00> : vector<32x1024xf32>
    %48 = tpu.matmul %42, %46, %cst_29 {dimension_numbers = #tpu.dot_dimension_numbers<[1], [0], [0], [1], [0, 0, 1, 1], [], []>} : vector<32x512xbf16>, vector<512x1024xbf16>, vector<32x1024xf32> -> vector<32x1024xf32>
    %49 = vector.broadcast %47 : vector<1x1024xf32> to vector<32x1024xf32>
    %50 = arith.addf %48, %49 : vector<32x1024xf32>
    %cst_30 = arith.constant dense<0.000000e+00> : vector<32x1024xf32>
    %51 = tpu.matmul %45, %46, %cst_30 {dimension_numbers = #tpu.dot_dimension_numbers<[1], [0], [0], [1], [0, 0, 1, 1], [], []>} : vector<32x512xbf16>, vector<512x1024xbf16>, vector<32x1024xf32> -> vector<32x1024xf32>
    %52 = vector.broadcast %47 : vector<1x1024xf32> to vector<32x1024xf32>
    %53 = arith.addf %51, %52 : vector<32x1024xf32>
    %54 = math.tanh %50 : vector<32x1024xf32>
    %55 = arith.truncf %54 : vector<32x1024xf32> to vector<32x1024xbf16>
    %56 = math.tanh %53 : vector<32x1024xf32>
    %57 = arith.truncf %56 : vector<32x1024xf32> to vector<32x1024xbf16>
    %c0_31 = arith.constant 0 : index
    %c0_32 = arith.constant 0 : index
    %58 = vector.load %arg10[%c0_31, %c0_32] : memref<1024x128xbf16, #tpu.memory_space<vmem>>, vector<1024x128xbf16>
    %c0_33 = arith.constant 0 : index
    %c0_34 = arith.constant 0 : index
    %59 = vector.load %arg11[%c0_33, %c0_34] : memref<1x128xf32, #tpu.memory_space<vmem>>, vector<1x128xf32>
    %cst_35 = arith.constant dense<0.000000e+00> : vector<32x128xf32>
    %60 = tpu.matmul %55, %58, %cst_35 {dimension_numbers = #tpu.dot_dimension_numbers<[1], [0], [0], [1], [0, 0, 1, 1], [], []>} : vector<32x1024xbf16>, vector<1024x128xbf16>, vector<32x128xf32> -> vector<32x128xf32>
    %61 = vector.broadcast %59 : vector<1x128xf32> to vector<32x128xf32>
    %62 = arith.addf %60, %61 : vector<32x128xf32>
    %cst_36 = arith.constant dense<0.000000e+00> : vector<32x128xf32>
    %63 = tpu.matmul %57, %58, %cst_36 {dimension_numbers = #tpu.dot_dimension_numbers<[1], [0], [0], [1], [0, 0, 1, 1], [], []>} : vector<32x1024xbf16>, vector<1024x128xbf16>, vector<32x128xf32> -> vector<32x128xf32>
    %64 = vector.broadcast %59 : vector<1x128xf32> to vector<32x128xf32>
    %65 = arith.addf %63, %64 : vector<32x128xf32>
    %c0_37 = arith.constant 0 : index
    %c0_38 = arith.constant 0 : index
    %66 = vector.load %arg12[%c0_37, %c0_38] : memref<64x128xf32, #tpu.memory_space<vmem>>, vector<32x128xf32>
    tpu.vector_store %arg12[%c0_37, %c0_38], %62 {strides = array<i32>} : memref<64x128xf32, #tpu.memory_space<vmem>>, vector<32x128xf32>,
    %c32_39 = arith.constant 32 : index
    %c0_40 = arith.constant 0 : index
    %67 = vector.load %arg12[%c32_39, %c0_40] : memref<64x128xf32, #tpu.memory_space<vmem>>, vector<32x128xf32>
    tpu.vector_store %arg12[%c32_39, %c0_40], %65 {strides = array<i32>} : memref<64x128xf32, #tpu.memory_space<vmem>>, vector<32x128xf32>,
    return
  }
  func.func @transform_0(%arg0: i32) -> (i32, i32) {
    %c0_i32 = arith.constant 0 : i32
    %c0_i32_0 = arith.constant 0 : i32
    return %arg0, %c0_i32 : i32, i32
  }
  func.func @transform_1(%arg0: i32) -> (i32, i32) {
    %c0_i32 = arith.constant 0 : i32
    %c0_i32_0 = arith.constant 0 : i32
    %c0_i32_1 = arith.constant 0 : i32
    return %c0_i32, %c0_i32_0 : i32, i32
  }
  func.func @transform_2(%arg0: i32) -> (i32, i32) {
    %c0_i32 = arith.constant 0 : i32
    %c0_i32_0 = arith.constant 0 : i32
    %c0_i32_1 = arith.constant 0 : i32
    return %c0_i32, %c0_i32_0 : i32, i32
  }
  func.func @transform_3(%arg0: i32) -> (i32, i32) {
    %c0_i32 = arith.constant 0 : i32
    %c0_i32_0 = arith.constant 0 : i32
    %c0_i32_1 = arith.constant 0 : i32
    return %c0_i32, %c0_i32_0 : i32, i32
  }
  func.func @transform_4(%arg0: i32) -> (i32, i32) {
    %c0_i32 = arith.constant 0 : i32
    %c0_i32_0 = arith.constant 0 : i32
    %c0_i32_1 = arith.constant 0 : i32
    return %c0_i32, %c0_i32_0 : i32, i32
  }
  func.func @transform_5(%arg0: i32) -> (i32, i32) {
    %c0_i32 = arith.constant 0 : i32
    %c0_i32_0 = arith.constant 0 : i32
    %c0_i32_1 = arith.constant 0 : i32
    return %c0_i32, %c0_i32_0 : i32, i32
  }
  func.func @transform_6(%arg0: i32) -> (i32, i32) {
    %c0_i32 = arith.constant 0 : i32
    %c0_i32_0 = arith.constant 0 : i32
    %c0_i32_1 = arith.constant 0 : i32
    return %c0_i32, %c0_i32_0 : i32, i32
  }
  func.func @transform_7(%arg0: i32) -> (i32, i32) {
    %c0_i32 = arith.constant 0 : i32
    %c0_i32_0 = arith.constant 0 : i32
    %c0_i32_1 = arith.constant 0 : i32
    return %c0_i32, %c0_i32_0 : i32, i32
  }
  func.func @transform_8(%arg0: i32) -> (i32, i32) {
    %c0_i32 = arith.constant 0 : i32
    %c0_i32_0 = arith.constant 0 : i32
    %c0_i32_1 = arith.constant 0 : i32
    return %c0_i32, %c0_i32_0 : i32, i32
  }
  func.func @transform_9(%arg0: i32) -> (i32, i32) {
    %c0_i32 = arith.constant 0 : i32
    %c0_i32_0 = arith.constant 0 : i32
    %c0_i32_1 = arith.constant 0 : i32
    return %c0_i32, %c0_i32_0 : i32, i32
  }
  func.func @transform_10(%arg0: i32) -> (i32, i32) {
    %c0_i32 = arith.constant 0 : i32
    %c0_i32_0 = arith.constant 0 : i32
    %c0_i32_1 = arith.constant 0 : i32
    return %c0_i32, %c0_i32_0 : i32, i32
  }
  func.func @transform_11(%arg0: i32) -> (i32, i32) {
    %c0_i32 = arith.constant 0 : i32
    %c0_i32_0 = arith.constant 0 : i32
    return %arg0, %c0_i32 : i32, i32
  }
}

</mosaic_0001>

<llo_original>
// kernel: generator_forward.1
$region0: #{generator_forward.1}
  #allocation0 [shape = 'u32[]', space=smem, size = 0x4, offset = 0x4, fixed_abs, tag = 'smem constant byte address 0x4 - core index']
  #allocation1 [shape = 'u32[144,128]{1,0:T(1,128)}', space=vmem, size = 0x12000, scoped, tag = 'internal scratch']
  %s0 = inlined_call_operand.vmem [shape: f32[64,32], index: 0, kind: input, shape index: {}]
  %s1 = inlined_call_operand.vmem [shape: bf16[32,128], index: 1, kind: input, shape index: {}]
  %s2 = inlined_call_operand.vmem [shape: f32[1,128], index: 2, kind: input, shape index: {}]
  %s3 = inlined_call_operand.hbm [shape: bf16[128,256], index: 3, kind: input, shape index: {}]
  %s4 = inlined_call_operand.vmem [shape: f32[1,256], index: 4, kind: input, shape index: {}]
  %s5 = inlined_call_operand.hbm [shape: bf16[256,512], index: 5, kind: input, shape index: {}]
  %s6 = inlined_call_operand.vmem [shape: f32[1,512], index: 6, kind: input, shape index: {}]
  %s7 = inlined_call_operand.hbm [shape: bf16[512,1024], index: 7, kind: input, shape index: {}]
  %s8 = inlined_call_operand.vmem [shape: f32[1,1024], index: 8, kind: input, shape index: {}]
  %s9 = inlined_call_operand.hbm [shape: bf16[1024,128], index: 9, kind: input, shape index: {}]
  %s10 = inlined_call_operand.vmem [shape: f32[1,128], index: 10, kind: input, shape index: {}]
  %s11 = inlined_call_operand.vmem [shape: f32[64,128], index: 11, kind: output, shape index: {}]
  %s12 = sld [smem:[#allocation0]]
  $region70: #{generator_forward.1} parent=0
    _
  %s14 = ssub.s32 1, %s12
  %s15 = scalar_select 0, %s14, %s12
  $region1: #{generator_forward.1} parent=0
    #allocation2 [shape = 'u8[65536]{0}', space=vmem, size = 0x10000, scoped, tag = 'input window, operand 3, single buffered']
    #allocation3 [shape = 's32[1]{0}', space=sflag, size = 0x4, scoped, tag = 'scoped memory for generator_forward.1']
    #allocation4 [shape = 'u8[262144]{0}', space=vmem, size = 0x40000, scoped, tag = 'input window, operand 5, single buffered']
    #allocation5 [shape = 's32[1]{0}', space=sflag, size = 0x4, scoped, tag = 'scoped memory for generator_forward.1']
    #allocation6 [shape = 'u8[1048576]{0}', space=vmem, size = 0x100000, scoped, tag = 'input window, operand 7, single buffered']
    #allocation7 [shape = 'u8[262144]{0}', space=vmem, size = 0x40000, scoped, tag = 'input window, operand 9, single buffered']
    #allocation8 [shape = 's32[1]{0}', space=sflag, size = 0x4, scoped, tag = 'scoped memory for generator_forward.1']
    %16 = vsyncpa [#allocation3], 0
    %17 = vsyncpa [#allocation5], 0
    %18 = vsyncpa [#allocation8], 0
    // Predicated region
    $region2: #{generator_forward.1} parent=1 // pred_check
      _
    $region3: #{generator_forward.1} parent=1 // pred_check_branch
      %20 = sbr.rel (0) target = $region5
    $region4: #{generator_forward.1} parent=1 // pred_region
      _
    $region5: #{generator_forward.1} parent=1 // pred_fallthru
      _
    // Predicated region
    $region6: #{generator_forward.1} parent=1 // pred_check
      _
    $region7: #{generator_forward.1} parent=1 // pred_check_branch
      %22 = sbr.rel (0) target = $region9
    $region8: #{generator_forward.1} parent=1 // pred_region
      _
    $region9: #{generator_forward.1} parent=1 // pred_fallthru
      _
    // Predicated region
    $region10: #{generator_forward.1} parent=1 // pred_check
      _
    $region11: #{generator_forward.1} parent=1 // pred_check_branch
      %24 = sbr.rel (0) target = $region13
    $region12: #{generator_forward.1} parent=1 // pred_region
      _
    $region13: #{generator_forward.1} parent=1 // pred_fallthru
      _
    // Predicated region
    $region14: #{generator_forward.1} parent=1 // pred_check
      _
    $region15: #{generator_forward.1} parent=1 // pred_check_branch
      %26 = sbr.rel (0) target = $region17
    $region16: #{generator_forward.1} parent=1 // pred_region
      %s28 = ssub.s32 2048, 2048
      %29 = vsyncadd [#allocation3], %s28
      %s30 = sshll.u32 [#allocation2], 4
      %s31 = int_to_ptr.vmem [resolvable:$true] %s30
      %36 = dma.hbm_to_vmem [thread:$0]  %s3, 2048, %s31, [#allocation3], 128, 128, 8
    $region17: #{generator_forward.1} parent=1 // pred_fallthru
      _
    // Predicated region
    $region18: #{generator_forward.1} parent=1 // pred_check
      _
    $region19: #{generator_forward.1} parent=1 // pred_check_branch
      %38 = sbr.rel (0) target = $region21
    $region20: #{generator_forward.1} parent=1 // pred_region
      _
    $region21: #{generator_forward.1} parent=1 // pred_fallthru
      _
    // Predicated region
    $region22: #{generator_forward.1} parent=1 // pred_check
      _
    $region23: #{generator_forward.1} parent=1 // pred_check_branch
      %40 = sbr.rel (0) target = $region25
    $region24: #{generator_forward.1} parent=1 // pred_region
      %s42 = ssub.s32 8192, 8192
      %43 = vsyncadd [#allocation5], %s42
      %s44 = sshll.u32 [#allocation4], 4
      %s45 = int_to_ptr.vmem [resolvable:$true] %s44
      %50 = dma.hbm_to_vmem [thread:$0]  %s5, 8192, %s45, [#allocation5], 256, 256, 16
    $region25: #{generator_forward.1} parent=1 // pred_fallthru
      _
    // Predicated region
    $region26: #{generator_forward.1} parent=1 // pred_check
      _
    $region27: #{generator_forward.1} parent=1 // pred_check_branch
      %52 = sbr.rel (0) target = $region29
    $region28: #{generator_forward.1} parent=1 // pred_region
      _
    $region29: #{generator_forward.1} parent=1 // pred_fallthru
      _
    // Predicated region
    $region30: #{generator_forward.1} parent=1 // pred_check
      _
    $region31: #{generator_forward.1} parent=1 // pred_check_branch
      %54 = sbr.rel (0) target = $region33
    $region32: #{generator_forward.1} parent=1 // pred_region
      %s56 = ssub.s32 32768, 32768
      %57 = vsyncadd [#allocation5], %s56
      %s58 = sshll.u32 [#allocation6], 4
      %s59 = int_to_ptr.vmem [resolvable:$true] %s58
      %64 = dma.hbm_to_vmem [thread:$0]  %s7, 32768, %s59, [#allocation5], 512, 512, 32
    $region33: #{generator_forward.1} parent=1 // pred_fallthru
      _
    // Predicated region
    $region34: #{generator_forward.1} parent=1 // pred_check
      _
    $region35: #{generator_forward.1} parent=1 // pred_check_branch
      %66 = sbr.rel (0) target = $region37
    $region36: #{generator_forward.1} parent=1 // pred_region
      _
    $region37: #{generator_forward.1} parent=1 // pred_fallthru
      _
    // Predicated region
    $region38: #{generator_forward.1} parent=1 // pred_check
      _
    $region39: #{generator_forward.1} parent=1 // pred_check_branch
      %68 = sbr.rel (0) target = $region41
    $region40: #{generator_forward.1} parent=1 // pred_region
      %s70 = ssub.s32 8192, 8192
      %71 = vsyncadd [#allocation8], %s70
      %s72 = sshll.u32 [#allocation7], 4
      %s73 = int_to_ptr.vmem [resolvable:$true] %s72
      %78 = dma.hbm_to_vmem [thread:$0]  %s9, 8192, %s73, [#allocation8], 64, 64, 4
    $region41: #{generator_forward.1} parent=1 // pred_fallthru
      _
    // Predicated region
    $region42: #{generator_forward.1} parent=1 // pred_check
      _
    $region43: #{generator_forward.1} parent=1 // pred_check_branch
      %80 = sbr.rel (0) target = $region45
    $region44: #{generator_forward.1} parent=1 // pred_region
      _
    $region45: #{generator_forward.1} parent=1 // pred_fallthru
      _
    // Predicated region
    $region46: #{generator_forward.1} parent=1 // pred_check
      _
    $region47: #{generator_forward.1} parent=1 // pred_check_branch
      %82 = sbr.rel (0) target = $region49
    $region48: #{generator_forward.1} parent=1 // pred_region
      %83 = dma.done [#allocation3], 2048
    $region49: #{generator_forward.1} parent=1 // pred_fallthru
      _
    // Predicated region
    $region50: #{generator_forward.1} parent=1 // pred_check
      _
    $region51: #{generator_forward.1} parent=1 // pred_check_branch
      %85 = sbr.rel (0) target = $region53
    $region52: #{generator_forward.1} parent=1 // pred_region
      %86 = dma.done [#allocation5], 8192
    $region53: #{generator_forward.1} parent=1 // pred_fallthru
      _
    // Predicated region
    $region54: #{generator_forward.1} parent=1 // pred_check
      _
    $region55: #{generator_forward.1} parent=1 // pred_check_branch
      %88 = sbr.rel (0) target = $region57
    $region56: #{generator_forward.1} parent=1 // pred_region
      %89 = dma.done [#allocation5], 32768
    $region57: #{generator_forward.1} parent=1 // pred_fallthru
      _
    // Predicated region
    $region58: #{generator_forward.1} parent=1 // pred_check
      _
    $region59: #{generator_forward.1} parent=1 // pred_check_branch
      %91 = sbr.rel (0) target = $region61
    $region60: #{generator_forward.1} parent=1 // pred_region
      %92 = dma.done [#allocation8], 8192
    $region61: #{generator_forward.1} parent=1 // pred_fallthru
      _
    %v94 = vld [vmem:[%s0] sm:$0xff]
    %v95 = vld [vmem:[%s0 + $0x8] sm:$0xff]
    %v96 = vld [vmem:[%s0 + $0x10] sm:$0xff]
    %v97 = vld [vmem:[%s0 + $0x18] sm:$0xff]
    %v98 = vpack.c.bf16 %v95, %v94
    %v99 = vpack.c.bf16 %v97, %v96
    %v100 = vld [vmem:[%s0 + $0x20] sm:$0xff]
    %v101 = vld [vmem:[%s0 + $0x28] sm:$0xff]
    %v102 = vld [vmem:[%s0 + $0x30] sm:$0xff]
    %v103 = vld [vmem:[%s0 + $0x38] sm:$0xff]
    %v104 = vpack.c.bf16 %v101, %v100
    %v105 = vpack.c.bf16 %v103, %v102
    %v106 = vld [vmem:[%s1] sm:$0xf]
    %v107 = vld [vmem:[%s1 + $0x4] sm:$0xf]
    %v108 = vld [vmem:[%s1 + $0x8] sm:$0xf]
    %v109 = vld [vmem:[%s1 + $0xc] sm:$0xf]
    %v110 = vld [vmem:[%s2] sm:$0x1]
    %v112 = vlaneseq
    %v113 = vshrl.u32 %v112, 7
    %v114 = vsub.s32 0, %v113
    %v115 = vrot.slane %v110, %v114
    %v121 = vunpack.c.l.b16 %v106
    %v122 = vunpack.c.l.b16 %v107
    %v123 = vunpack.c.l.b16 %v108
    %v124 = vunpack.c.l.b16 %v109
    %v125 = vpack.c.b16 %v122, %v121
    %v126 = vpack.c.b16 %v124, %v123
    %vm129 = vcmask 261120
    %v131 = vsel %vm129, %v98, 0
    %v134 = vsel %vm129, %v99, 0
    %136 = vmatprep.subr.bf16.mxu0 0
    %137 = vmatpush1.bf16.msra.mxu0 %v125
    %138 = vmatprep.subr.bf16.mxu0 0
    %139 = vmatpush1.bf16.msra.mxu0 %v126
    %140 = vmatprep.subr.bf16.mxu0 0
    %141 = vmatpush1.bf16.msra.mxu0 0
    %142 = vmatprep.subr.bf16.mxu0 0
    %143 = vmatpush1.bf16.msra.mxu0 0
    %144 = vmatprep.subr.bf16.mxu0 0
    %145 = vmatpush1.bf16.msra.mxu0 0
    %146 = vmatprep.subr.bf16.mxu0 0
    %147 = vmatpush1.bf16.msra.mxu0 0
    %148 = vmatprep.subr.bf16.mxu0 0
    %149 = vmatpush1.bf16.msra.mxu0 0
    %150 = vmatprep.subr.bf16.mxu0 0
    %151 = vmatpush1.bf16.msra.mxu0 0
    %152 = vmatprep.subr.bf16.mxu0 0
    %153 = vmatpush1.bf16.msra.mxu0 0
    %154 = vmatprep.subr.bf16.mxu0 0
    %155 = vmatpush1.bf16.msra.mxu0 0
    %156 = vmatprep.subr.bf16.mxu0 0
    %157 = vmatpush1.bf16.msra.mxu0 0
    %158 = vmatprep.subr.bf16.mxu0 0
    %159 = vmatpush1.bf16.msra.mxu0 0
    %160 = vmatprep.subr.bf16.mxu0 0
    %161 = vmatpush1.bf16.msra.mxu0 0
    %162 = vmatprep.subr.bf16.mxu0 0
    %163 = vmatpush1.bf16.msra.mxu0 0
    %164 = vmatprep.subr.bf16.mxu0 0
    %165 = vmatpush1.bf16.msra.mxu0 0
    %166 = vmatprep.subr.bf16.mxu0 0
    %167 = vmatpush1.bf16.msra.mxu0 0
    %168 = vmatprep.mubr.bf16.mxu0 0
    %169 = vmatmul.mubr.bf16.gmra.mrb[0].mxu0 %v131
    %v170 = vpop.f32.mrb[0].mxu0
    %v171 = vadd.f32 %v115, %v170
    %v172 = vpop.f32.mrb[0].mxu0
    %v173 = vpop.f32.mrb[0].mxu0
    %v174 = vadd.f32 %v115, %v173
    %v175 = vpop.f32.mrb[0].mxu0
    %176 = vmatprep.mubr.bf16.mxu0 0
    %177 = vmatmul.mubr.bf16.gmra.mrb[0].mxu0 %v134
    %v178 = vpop.f32.mrb[0].mxu0
    %v179 = vadd.f32 %v115, %v178
    %v180 = vpop.f32.mrb[0].mxu0
    %v181 = vpop.f32.mrb[0].mxu0
    %v182 = vadd.f32 %v115, %v181
    %v183 = vpop.f32.mrb[0].mxu0
    %184 = vdwg.mxu0
    %v186 = vsel %vm129, %v104, 0
    %v189 = vsel %vm129, %v105, 0
    %191 = vmatprep.subr.bf16.mxu0 0
    %192 = vmatpush1.bf16.msra.mxu0 %v125
    %193 = vmatprep.subr.bf16.mxu0 0
    %194 = vmatpush1.bf16.msra.mxu0 %v126
    %195 = vmatprep.subr.bf16.mxu0 0
    %196 = vmatpush1.bf16.msra.mxu0 0
    %197 = vmatprep.subr.bf16.mxu0 0
    %198 = vmatpush1.bf16.msra.mxu0 0
    %199 = vmatprep.subr.bf16.mxu0 0
    %200 = vmatpush1.bf16.msra.mxu0 0
    %201 = vmatprep.subr.bf16.mxu0 0
    %202 = vmatpush1.bf16.msra.mxu0 0
    %203 = vmatprep.subr.bf16.mxu0 0
    %204 = vmatpush1.bf16.msra.mxu0 0
    %205 = vmatprep.subr.bf16.mxu0 0
    %206 = vmatpush1.bf16.msra.mxu0 0
    %207 = vmatprep.subr.bf16.mxu0 0
    %208 = vmatpush1.bf16.msra.mxu0 0
    %209 = vmatprep.subr.bf16.mxu0 0
    %210 = vmatpush1.bf16.msra.mxu0 0
    %211 = vmatprep.subr.bf16.mxu0 0
    %212 = vmatpush1.bf16.msra.mxu0 0
    %213 = vmatprep.subr.bf16.mxu0 0
    %214 = vmatpush1.bf16.msra.mxu0 0
    %215 = vmatprep.subr.bf16.mxu0 0
    %216 = vmatpush1.bf16.msra.mxu0 0
    %217 = vmatprep.subr.bf16.mxu0 0
    %218 = vmatpush1.bf16.msra.mxu0 0
    %219 = vmatprep.subr.bf16.mxu0 0
    %220 = vmatpush1.bf16.msra.mxu0 0
    %221 = vmatprep.subr.bf16.mxu0 0
    %222 = vmatpush1.bf16.msra.mxu0 0
    %223 = vmatprep.mubr.bf16.mxu0 0
    %224 = vmatmul.mubr.bf16.gmra.mrb[0].mxu0 %v186
    %v225 = vpop.f32.mrb[0].mxu0
    %v226 = vadd.f32 %v115, %v225
    %v227 = vpop.f32.mrb[0].mxu0
    %v228 = vpop.f32.mrb[0].mxu0
    %v229 = vadd.f32 %v115, %v228
    %v230 = vpop.f32.mrb[0].mxu0
    %231 = vmatprep.mubr.bf16.mxu0 0
    %232 = vmatmul.mubr.bf16.gmra.mrb[0].mxu0 %v189
    %v233 = vpop.f32.mrb[0].mxu0
    %v234 = vadd.f32 %v115, %v233
    %v235 = vpop.f32.mrb[0].mxu0
    %v236 = vpop.f32.mrb[0].mxu0
    %v237 = vadd.f32 %v115, %v236
    %v238 = vpop.f32.mrb[0].mxu0
    %239 = vdwg.mxu0
    %v240 = vmax.f32 %v171, 0.0
    %v241 = vmax.f32 %v174, 0.0
    %v242 = vmax.f32 %v179, 0.0
    %v243 = vmax.f32 %v182, 0.0
    %v244 = vpack.c.bf16 %v241, %v240
    %v245 = vpack.c.bf16 %v243, %v242
    %v246 = vmax.f32 %v226, 0.0
    %v247 = vmax.f32 %v229, 0.0
    %v248 = vmax.f32 %v234, 0.0
    %v249 = vmax.f32 %v237, 0.0
    %v250 = vpack.c.bf16 %v247, %v246
    %v251 = vpack.c.bf16 %v249, %v248
    %v252 = vld [vmem:[#allocation2] sm:$0xff]
    %v253 = vld [vmem:[#allocation2 + $0x8] sm:$0xff]
    %v254 = vld [vmem:[#allocation2 + $0x10] sm:$0xff]
    %v255 = vld [vmem:[#allocation2 + $0x18] sm:$0xff]
    %v256 = vld [vmem:[#allocation2 + $0x20] sm:$0xff]
    %v257 = vld [vmem:[#allocation2 + $0x28] sm:$0xff]
    %v258 = vld [vmem:[#allocation2 + $0x30] sm:$0xff]
    %v259 = vld [vmem:[#allocation2 + $0x38] sm:$0xff]
    %v260 = vld [vmem:[#allocation2 + $0x40] sm:$0xff]
    %v261 = vld [vmem:[#allocation2 + $0x48] sm:$0xff]
    %v262 = vld [vmem:[#allocation2 + $0x50] sm:$0xff]
    %v263 = vld [vmem:[#allocation2 + $0x58] sm:$0xff]
    %v264 = vld [vmem:[#allocation2 + $0x60] sm:$0xff]
    %v265 = vld [vmem:[#allocation2 + $0x68] sm:$0xff]
    %v266 = vld [vmem:[#allocation2 + $0x70] sm:$0xff]
    %v267 = vld [vmem:[#allocation2 + $0x78] sm:$0xff]
    %v268 = vld [vmem:[%s4] sm:$0x3]
    %v270 = vlaneseq
    %v271 = vshrl.u32 %v270, 7
    %v272 = vsub.s32 0, %v271
    %v273 = vrot.slane %v268, %v272
    %v274 = vlaneseq
    %v275 = vshrl.u32 %v274, 7
    %v276 = vsub.s32 1, %v275
    %v277 = vrot.slane %v268, %v276
    %v296 = vunpack.c.l.b16 %v252
    %v297 = vunpack.c.h.b16 %v252
    %v298 = vunpack.c.l.b16 %v253
    %v299 = vunpack.c.h.b16 %v253
    %v300 = vunpack.c.l.b16 %v254
    %v301 = vunpack.c.h.b16 %v254
    %v302 = vunpack.c.l.b16 %v255
    %v303 = vunpack.c.h.b16 %v255
    %v304 = vunpack.c.l.b16 %v256
    %v305 = vunpack.c.h.b16 %v256
    %v306 = vunpack.c.l.b16 %v257
    %v307 = vunpack.c.h.b16 %v257
    %v308 = vunpack.c.l.b16 %v258
    %v309 = vunpack.c.h.b16 %v258
    %v310 = vunpack.c.l.b16 %v259
    %v311 = vunpack.c.h.b16 %v259
    %v312 = vunpack.c.l.b16 %v260
    %v313 = vunpack.c.h.b16 %v260
    %v314 = vunpack.c.l.b16 %v261
    %v315 = vunpack.c.h.b16 %v261
    %v316 = vunpack.c.l.b16 %v262
    %v317 = vunpack.c.h.b16 %v262
    %v318 = vunpack.c.l.b16 %v263
    %v319 = vunpack.c.h.b16 %v263
    %v320 = vunpack.c.l.b16 %v264
    %v321 = vunpack.c.h.b16 %v264
    %v322 = vunpack.c.l.b16 %v265
    %v323 = vunpack.c.h.b16 %v265
    %v324 = vunpack.c.l.b16 %v266
    %v325 = vunpack.c.h.b16 %v266
    %v326 = vunpack.c.l.b16 %v267
    %v327 = vunpack.c.h.b16 %v267
    %v328 = vpack.c.b16 %v298, %v296
    %v329 = vpack.c.b16 %v299, %v297
    %v330 = vpack.c.b16 %v302, %v300
    %v331 = vpack.c.b16 %v303, %v301
    %v332 = vpack.c.b16 %v306, %v304
    %v333 = vpack.c.b16 %v307, %v305
    %v334 = vpack.c.b16 %v310, %v308
    %v335 = vpack.c.b16 %v311, %v309
    %v336 = vpack.c.b16 %v314, %v312
    %v337 = vpack.c.b16 %v315, %v313
    %v338 = vpack.c.b16 %v318, %v316
    %v339 = vpack.c.b16 %v319, %v317
    %v340 = vpack.c.b16 %v322, %v320
    %v341 = vpack.c.b16 %v323, %v321
    %v342 = vpack.c.b16 %v326, %v324
    %v343 = vpack.c.b16 %v327, %v325
    %360 = vmatprep.subr.bf16.mxu0 %v329
    %361 = vmatpush1.bf16.msra.mxu0 %v328
    %362 = vmatprep.subr.bf16.mxu0 %v331
    %363 = vmatpush1.bf16.msra.mxu0 %v330
    %364 = vmatprep.subr.bf16.mxu0 %v333
    %365 = vmatpush1.bf16.msra.mxu0 %v332
    %366 = vmatprep.subr.bf16.mxu0 %v335
    %367 = vmatpush1.bf16.msra.mxu0 %v334
    %368 = vmatprep.subr.bf16.mxu0 %v337
    %369 = vmatpush1.bf16.msra.mxu0 %v336
    %370 = vmatprep.subr.bf16.mxu0 %v339
    %371 = vmatpush1.bf16.msra.mxu0 %v338
    %372 = vmatprep.subr.bf16.mxu0 %v341
    %373 = vmatpush1.bf16.msra.mxu0 %v340
    %374 = vmatprep.subr.bf16.mxu0 %v343
    %375 = vmatpush1.bf16.msra.mxu0 %v342
    %376 = vmatprep.subr.bf16.mxu0 0
    %377 = vmatpush1.bf16.msra.mxu0 0
    %378 = vmatprep.subr.bf16.mxu0 0
    %379 = vmatpush1.bf16.msra.mxu0 0
    %380 = vmatprep.subr.bf16.mxu0 0
    %381 = vmatpush1.bf16.msra.mxu0 0
    %382 = vmatprep.subr.bf16.mxu0 0
    %383 = vmatpush1.bf16.msra.mxu0 0
    %384 = vmatprep.subr.bf16.mxu0 0
    %385 = vmatpush1.bf16.msra.mxu0 0
    %386 = vmatprep.subr.bf16.mxu0 0
    %387 = vmatpush1.bf16.msra.mxu0 0
    %388 = vmatprep.subr.bf16.mxu0 0
    %389 = vmatpush1.bf16.msra.mxu0 0
    %390 = vmatprep.subr.bf16.mxu0 0
    %391 = vmatpush1.bf16.msra.mxu0 0
    %392 = vmatprep.mubr.bf16.mxu0 0
    %393 = vmatmul.mubr.bf16.gmra.mrb[0].mxu0 %v244
    %v394 = vpop.f32.mrb[0].mxu0
    %v395 = vadd.f32 %v273, %v394
    %v396 = vpop.f32.mrb[0].mxu0
    %v397 = vadd.f32 %v277, %v396
    %v398 = vpop.f32.mrb[0].mxu0
    %v399 = vadd.f32 %v273, %v398
    %v400 = vpop.f32.mrb[0].mxu0
    %v401 = vadd.f32 %v277, %v400
    %402 = vmatprep.mubr.bf16.mxu0 0
    %403 = vmatmul.mubr.bf16.gmra.mrb[0].mxu0 %v245
    %v404 = vpop.f32.mrb[0].mxu0
    %v405 = vadd.f32 %v273, %v404
    %v406 = vpop.f32.mrb[0].mxu0
    %v407 = vadd.f32 %v277, %v406
    %v408 = vpop.f32.mrb[0].mxu0
    %v409 = vadd.f32 %v273, %v408
    %v410 = vpop.f32.mrb[0].mxu0
    %v411 = vadd.f32 %v277, %v410
    %412 = vdwg.mxu0
    %413 = vmatprep.subr.bf16.mxu0 %v329
    %414 = vmatpush1.bf16.msra.mxu0 %v328
    %415 = vmatprep.subr.bf16.mxu0 %v331
    %416 = vmatpush1.bf16.msra.mxu0 %v330
    %417 = vmatprep.subr.bf16.mxu0 %v333
    %418 = vmatpush1.bf16.msra.mxu0 %v332
    %419 = vmatprep.subr.bf16.mxu0 %v335
    %420 = vmatpush1.bf16.msra.mxu0 %v334
    %421 = vmatprep.subr.bf16.mxu0 %v337
    %422 = vmatpush1.bf16.msra.mxu0 %v336
    %423 = vmatprep.subr.bf16.mxu0 %v339
    %424 = vmatpush1.bf16.msra.mxu0 %v338
    %425 = vmatprep.subr.bf16.mxu0 %v341
    %426 = vmatpush1.bf16.msra.mxu0 %v340
    %427 = vmatprep.subr.bf16.mxu0 %v343
    %428 = vmatpush1.bf16.msra.mxu0 %v342
    %429 = vmatprep.subr.bf16.mxu0 0
    %430 = vmatpush1.bf16.msra.mxu0 0
    %431 = vmatprep.subr.bf16.mxu0 0
    %432 = vmatpush1.bf16.msra.mxu0 0
    %433 = vmatprep.subr.bf16.mxu0 0
    %434 = vmatpush1.bf16.msra.mxu0 0
    %435 = vmatprep.subr.bf16.mxu0 0
    %436 = vmatpush1.bf16.msra.mxu0 0
    %437 = vmatprep.subr.bf16.mxu0 0
    %438 = vmatpush1.bf16.msra.mxu0 0
    %439 = vmatprep.subr.bf16.mxu0 0
    %440 = vmatpush1.bf16.msra.mxu0 0
    %441 = vmatprep.subr.bf16.mxu0 0
    %442 = vmatpush1.bf16.msra.mxu0 0
    %443 = vmatprep.subr.bf16.mxu0 0
    %444 = vmatpush1.bf16.msra.mxu0 0
    %445 = vmatprep.mubr.bf16.mxu0 0
    %446 = vmatmul.mubr.bf16.gmra.mrb[0].mxu0 %v250
    %v447 = vpop.f32.mrb[0].mxu0
    %v448 = vadd.f32 %v273, %v447
    %v449 = vpop.f32.mrb[0].mxu0
    %v450 = vadd.f32 %v277, %v449
    %v451 = vpop.f32.mrb[0].mxu0
    %v452 = vadd.f32 %v273, %v451
    %v453 = vpop.f32.mrb[0].mxu0
    %v454 = vadd.f32 %v277, %v453
    %455 = vmatprep.mubr.bf16.mxu0 0
    %456 = vmatmul.mubr.bf16.gmra.mrb[0].mxu0 %v251
    %v457 = vpop.f32.mrb[0].mxu0
    %v458 = vadd.f32 %v273, %v457
    %v459 = vpop.f32.mrb[0].mxu0
    %v460 = vadd.f32 %v277, %v459
    %v461 = vpop.f32.mrb[0].mxu0
    %v462 = vadd.f32 %v273, %v461
    %v463 = vpop.f32.mrb[0].mxu0
    %v464 = vadd.f32 %v277, %v463
    %465 = vdwg.mxu0
    %v466 = vmax.f32 %v395, 0.0
    %v467 = vmax.f32 %v397, 0.0
    %v468 = vmax.f32 %v399, 0.0
    %v469 = vmax.f32 %v401, 0.0
    %v470 = vmax.f32 %v405, 0.0
    %v471 = vmax.f32 %v407, 0.0
    %v472 = vmax.f32 %v409, 0.0
    %v473 = vmax.f32 %v411, 0.0
    %v474 = vpack.c.bf16 %v468, %v466
    %v475 = vpack.c.bf16 %v469, %v467
    %v476 = vpack.c.bf16 %v472, %v470
    %v477 = vpack.c.bf16 %v473, %v471
    %v478 = vmax.f32 %v448, 0.0
    %v479 = vmax.f32 %v450, 0.0
    %v480 = vmax.f32 %v452, 0.0
    %v481 = vmax.f32 %v454, 0.0
    %v482 = vmax.f32 %v458, 0.0
    %v483 = vmax.f32 %v460, 0.0
    %v484 = vmax.f32 %v462, 0.0
    %v485 = vmax.f32 %v464, 0.0
    %v486 = vpack.c.bf16 %v480, %v478
    %v487 = vpack.c.bf16 %v481, %v479
    %v488 = vpack.c.bf16 %v484, %v482
    %v489 = vpack.c.bf16 %v485, %v483
    %v490 = vld [vmem:[#allocation4] sm:$0xff]
    %v491 = vld [vmem:[#allocation4 + $0x8] sm:$0xff]
    %v492 = vld [vmem:[#allocation4 + $0x10] sm:$0xff]
    %v493 = vld [vmem:[#allocation4 + $0x18] sm:$0xff]
    %v494 = vld [vmem:[#allocation4 + $0x20] sm:$0xff]
    %v495 = vld [vmem:[#allocation4 + $0x28] sm:$0xff]
    %v496 = vld [vmem:[#allocation4 + $0x30] sm:$0xff]
    %v497 = vld [vmem:[#allocation4 + $0x38] sm:$0xff]
    %v498 = vld [vmem:[#allocation4 + $0x40] sm:$0xff]
    %v499 = vld [vmem:[#allocation4 + $0x48] sm:$0xff]
    %v500 = vld [vmem:[#allocation4 + $0x50] sm:$0xff]
    %v501 = vld [vmem:[#allocation4 + $0x58] sm:$0xff]
    %v502 = vld [vmem:[#allocation4 + $0x60] sm:$0xff]
    %v503 = vld [vmem:[#allocation4 + $0x68] sm:$0xff]
    %v504 = vld [vmem:[#allocation4 + $0x70] sm:$0xff]
    %v505 = vld [vmem:[#allocation4 + $0x78] sm:$0xff]
    %v506 = vld [vmem:[#allocation4 + $0x80] sm:$0xff]
    %v507 = vld [vmem:[#allocation4 + $0x88] sm:$0xff]
    %v508 = vld [vmem:[#allocation4 + $0x90] sm:$0xff]
    %v509 = vld [vmem:[#allocation4 + $0x98] sm:$0xff]
    %v510 = vld [vmem:[#allocation4 + $0xa0] sm:$0xff]
    %v511 = vld [vmem:[#allocation4 + $0xa8] sm:$0xff]
    %v512 = vld [vmem:[#allocation4 + $0xb0] sm:$0xff]
    %v513 = vld [vmem:[#allocation4 + $0xb8] sm:$0xff]
    %v514 = vld [vmem:[#allocation4 + $0xc0] sm:$0xff]
    %v515 = vld [vmem:[#allocation4 + $0xc8] sm:$0xff]
    %v516 = vld [vmem:[#allocation4 + $0xd0] sm:$0xff]
    %v517 = vld [vmem:[#allocation4 + $0xd8] sm:$0xff]
    %v518 = vld [vmem:[#allocation4 + $0xe0] sm:$0xff]
    %v519 = vld [vmem:[#allocation4 + $0xe8] sm:$0xff]
    %v520 = vld [vmem:[#allocation4 + $0xf0] sm:$0xff]
    %v521 = vld [vmem:[#allocation4 + $0xf8] sm:$0xff]
    %v522 = vld [vmem:[#allocation4 + $0x100] sm:$0xff]
    %v523 = vld [vmem:[#allocation4 + $0x108] sm:$0xff]
    %v524 = vld [vmem:[#allocation4 + $0x110] sm:$0xff]
    %v525 = vld [vmem:[#allocation4 + $0x118] sm:$0xff]
    %v526 = vld [vmem:[#allocation4 + $0x120] sm:$0xff]
    %v527 = vld [vmem:[#allocation4 + $0x128] sm:$0xff]
    %v528 = vld [vmem:[#allocation4 + $0x130] sm:$0xff]
    %v529 = vld [vmem:[#allocation4 + $0x138] sm:$0xff]
    %v530 = vld [vmem:[#allocation4 + $0x140] sm:$0xff]
    %v531 = vld [vmem:[#allocation4 + $0x148] sm:$0xff]
    %v532 = vld [vmem:[#allocation4 + $0x150] sm:$0xff]
    %v533 = vld [vmem:[#allocation4 + $0x158] sm:$0xff]
    %v534 = vld [vmem:[#allocation4 + $0x160] sm:$0xff]
    %v535 = vld [vmem:[#allocation4 + $0x168] sm:$0xff]
    %v536 = vld [vmem:[#allocation4 + $0x170] sm:$0xff]
    %v537 = vld [vmem:[#allocation4 + $0x178] sm:$0xff]
    %v538 = vld [vmem:[#allocation4 + $0x180] sm:$0xff]
    %v539 = vld [vmem:[#allocation4 + $0x188] sm:$0xff]
    %v540 = vld [vmem:[#allocation4 + $0x190] sm:$0xff]
    %v541 = vld [vmem:[#allocation4 + $0x198] sm:$0xff]
    %v542 = vld [vmem:[#allocation4 + $0x1a0] sm:$0xff]
    %v543 = vld [vmem:[#allocation4 + $0x1a8] sm:$0xff]
    %v544 = vld [vmem:[#allocation4 + $0x1b0] sm:$0xff]
    %v545 = vld [vmem:[#allocation4 + $0x1b8] sm:$0xff]
    %v546 = vld [vmem:[#allocation4 + $0x1c0] sm:$0xff]
    %v547 = vld [vmem:[#allocation4 + $0x1c8] sm:$0xff]
    %v548 = vld [vmem:[#allocation4 + $0x1d0] sm:$0xff]
    %v549 = vld [vmem:[#allocation4 + $0x1d8] sm:$0xff]
    %v550 = vld [vmem:[#allocation4 + $0x1e0] sm:$0xff]
    %v551 = vld [vmem:[#allocation4 + $0x1e8] sm:$0xff]
    %v552 = vld [vmem:[#allocation4 + $0x1f0] sm:$0xff]
    %v553 = vld [vmem:[#allocation4 + $0x1f8] sm:$0xff]
    %v554 = vld [vmem:[%s6] sm:$0xf]
    %v556 = vlaneseq
    %v557 = vshrl.u32 %v556, 7
    %v558 = vsub.s32 0, %v557
    %v559 = vrot.slane %v554, %v558
    %v560 = vlaneseq
    %v561 = vshrl.u32 %v560, 7
    %v562 = vsub.s32 1, %v561
    %v563 = vrot.slane %v554, %v562
    %v564 = vlaneseq
    %v565 = vshrl.u32 %v564, 7
    %v566 = vsub.s32 2, %v565
    %v567 = vrot.slane %v554, %v566
    %v568 = vlaneseq
    %v569 = vshrl.u32 %v568, 7
    %v570 = vsub.s32 3, %v569
    %v571 = vrot.slane %v554, %v570
    %v640 = vunpack.c.l.b16 %v490
    %v641 = vunpack.c.h.b16 %v490
    %v642 = vunpack.c.l.b16 %v491
    %v643 = vunpack.c.h.b16 %v491
    %v644 = vunpack.c.l.b16 %v492
    %v645 = vunpack.c.h.b16 %v492
    %v646 = vunpack.c.l.b16 %v493
    %v647 = vunpack.c.h.b16 %v493
    %v648 = vunpack.c.l.b16 %v494
    %v649 = vunpack.c.h.b16 %v494
    %v650 = vunpack.c.l.b16 %v495
    %v651 = vunpack.c.h.b16 %v495
    %v652 = vunpack.c.l.b16 %v496
    %v653 = vunpack.c.h.b16 %v496
    %v654 = vunpack.c.l.b16 %v497
    %v655 = vunpack.c.h.b16 %v497
    %v656 = vunpack.c.l.b16 %v498
    %v657 = vunpack.c.h.b16 %v498
    %v658 = vunpack.c.l.b16 %v499
    %v659 = vunpack.c.h.b16 %v499
    %v660 = vunpack.c.l.b16 %v500
    %v661 = vunpack.c.h.b16 %v500
    %v662 = vunpack.c.l.b16 %v501
    %v663 = vunpack.c.h.b16 %v501
    %v664 = vunpack.c.l.b16 %v502
    %v665 = vunpack.c.h.b16 %v502
    %v666 = vunpack.c.l.b16 %v503
    %v667 = vunpack.c.h.b16 %v503
    %v668 = vunpack.c.l.b16 %v504
    %v669 = vunpack.c.h.b16 %v504
    %v670 = vunpack.c.l.b16 %v505
    %v671 = vunpack.c.h.b16 %v505
    %v672 = vunpack.c.l.b16 %v506
    %v673 = vunpack.c.h.b16 %v506
    %v674 = vunpack.c.l.b16 %v507
    %v675 = vunpack.c.h.b16 %v507
    %v676 = vunpack.c.l.b16 %v508
    %v677 = vunpack.c.h.b16 %v508
    %v678 = vunpack.c.l.b16 %v509
    %v679 = vunpack.c.h.b16 %v509
    %v680 = vunpack.c.l.b16 %v510
    %v681 = vunpack.c.h.b16 %v510
    %v682 = vunpack.c.l.b16 %v511
    %v683 = vunpack.c.h.b16 %v511
    %v684 = vunpack.c.l.b16 %v512
    %v685 = vunpack.c.h.b16 %v512
    %v686 = vunpack.c.l.b16 %v513
    %v687 = vunpack.c.h.b16 %v513
    %v688 = vunpack.c.l.b16 %v514
    %v689 = vunpack.c.h.b16 %v514
    %v690 = vunpack.c.l.b16 %v515
    %v691 = vunpack.c.h.b16 %v515
    %v692 = vunpack.c.l.b16 %v516
    %v693 = vunpack.c.h.b16 %v516
    %v694 = vunpack.c.l.b16 %v517
    %v695 = vunpack.c.h.b16 %v517
    %v696 = vunpack.c.l.b16 %v518
    %v697 = vunpack.c.h.b16 %v518
    %v698 = vunpack.c.l.b16 %v519
    %v699 = vunpack.c.h.b16 %v519
    %v700 = vunpack.c.l.b16 %v520
    %v701 = vunpack.c.h.b16 %v520
    %v702 = vunpack.c.l.b16 %v521
    %v703 = vunpack.c.h.b16 %v521
    %v704 = vunpack.c.l.b16 %v522
    %v705 = vunpack.c.h.b16 %v522
    %v706 = vunpack.c.l.b16 %v523
    %v707 = vunpack.c.h.b16 %v523
    %v708 = vunpack.c.l.b16 %v524
    %v709 = vunpack.c.h.b16 %v524
    %v710 = vunpack.c.l.b16 %v525
    %v711 = vunpack.c.h.b16 %v525
    %v712 = vunpack.c.l.b16 %v526
    %v713 = vunpack.c.h.b16 %v526
    %v714 = vunpack.c.l.b16 %v527
    %v715 = vunpack.c.h.b16 %v527
    %v716 = vunpack.c.l.b16 %v528
    %v717 = vunpack.c.h.b16 %v528
    %v718 = vunpack.c.l.b16 %v529
    %v719 = vunpack.c.h.b16 %v529
    %v720 = vunpack.c.l.b16 %v530
    %v721 = vunpack.c.h.b16 %v530
    %v722 = vunpack.c.l.b16 %v531
    %v723 = vunpack.c.h.b16 %v531
    %v724 = vunpack.c.l.b16 %v532
    %v725 = vunpack.c.h.b16 %v532
    %v726 = vunpack.c.l.b16 %v533
    %v727 = vunpack.c.h.b16 %v533
    %v728 = vunpack.c.l.b16 %v534
    %v729 = vunpack.c.h.b16 %v534
    %v730 = vunpack.c.l.b16 %v535
    %v731 = vunpack.c.h.b16 %v535
    %v732 = vunpack.c.l.b16 %v536
    %v733 = vunpack.c.h.b16 %v536
    %v734 = vunpack.c.l.b16 %v537
    %v735 = vunpack.c.h.b16 %v537
    %v736 = vunpack.c.l.b16 %v538
    %v737 = vunpack.c.h.b16 %v538
    %v738 = vunpack.c.l.b16 %v539
    %v739 = vunpack.c.h.b16 %v539
    %v740 = vunpack.c.l.b16 %v540
    %v741 = vunpack.c.h.b16 %v540
    %v742 = vunpack.c.l.b16 %v541
    %v743 = vunpack.c.h.b16 %v541
    %v744 = vunpack.c.l.b16 %v542
    %v745 = vunpack.c.h.b16 %v542
    %v746 = vunpack.c.l.b16 %v543
    %v747 = vunpack.c.h.b16 %v543
    %v748 = vunpack.c.l.b16 %v544
    %v749 = vunpack.c.h.b16 %v544
    %v750 = vunpack.c.l.b16 %v545
    %v751 = vunpack.c.h.b16 %v545
    %v752 = vunpack.c.l.b16 %v546
    %v753 = vunpack.c.h.b16 %v546
    %v754 = vunpack.c.l.b16 %v547
    %v755 = vunpack.c.h.b16 %v547
    %v756 = vunpack.c.l.b16 %v548
    %v757 = vunpack.c.h.b16 %v548
    %v758 = vunpack.c.l.b16 %v549
    %v759 = vunpack.c.h.b16 %v549
    %v760 = vunpack.c.l.b16 %v550
    %v761 = vunpack.c.h.b16 %v550
    %v762 = vunpack.c.l.b16 %v551
    %v763 = vunpack.c.h.b16 %v551
    %v764 = vunpack.c.l.b16 %v552
    %v765 = vunpack.c.h.b16 %v552
    %v766 = vunpack.c.l.b16 %v553
    %v767 = vunpack.c.h.b16 %v553
    %v768 = vpack.c.b16 %v644, %v640
    %v769 = vpack.c.b16 %v645, %v641
    %v770 = vpack.c.b16 %v646, %v642
    %v771 = vpack.c.b16 %v647, %v643
    %v772 = vpack.c.b16 %v652, %v648
    %v773 = vpack.c.b16 %v653, %v649
    %v774 = vpack.c.b16 %v654, %v650
    %v775 = vpack.c.b16 %v655, %v651
    %v776 = vpack.c.b16 %v660, %v656
    %v777 = vpack.c.b16 %v661, %v657
    %v778 = vpack.c.b16 %v662, %v658
    %v779 = vpack.c.b16 %v663, %v659
    %v780 = vpack.c.b16 %v668, %v664
    %v781 = vpack.c.b16 %v669, %v665
    %v782 = vpack.c.b16 %v670, %v666
    %v783 = vpack.c.b16 %v671, %v667
    %v784 = vpack.c.b16 %v676, %v672
    %v785 = vpack.c.b16 %v677, %v673
    %v786 = vpack.c.b16 %v678, %v674
    %v787 = vpack.c.b16 %v679, %v675
    %v788 = vpack.c.b16 %v684, %v680
    %v789 = vpack.c.b16 %v685, %v681
    %v790 = vpack.c.b16 %v686, %v682
    %v791 = vpack.c.b16 %v687, %v683
    %v792 = vpack.c.b16 %v692, %v688
    %v793 = vpack.c.b16 %v693, %v689
    %v794 = vpack.c.b16 %v694, %v690
    %v795 = vpack.c.b16 %v695, %v691
    %v796 = vpack.c.b16 %v700, %v696
    %v797 = vpack.c.b16 %v701, %v697
    %v798 = vpack.c.b16 %v702, %v698
    %v799 = vpack.c.b16 %v703, %v699
    %v800 = vpack.c.b16 %v708, %v704
    %v801 = vpack.c.b16 %v709, %v705
    %v802 = vpack.c.b16 %v710, %v706
    %v803 = vpack.c.b16 %v711, %v707
    %v804 = vpack.c.b16 %v716, %v712
    %v805 = vpack.c.b16 %v717, %v713
    %v806 = vpack.c.b16 %v718, %v714
    %v807 = vpack.c.b16 %v719, %v715
    %v808 = vpack.c.b16 %v724, %v720
    %v809 = vpack.c.b16 %v725, %v721
    %v810 = vpack.c.b16 %v726, %v722
    %v811 = vpack.c.b16 %v727, %v723
    %v812 = vpack.c.b16 %v732, %v728
    %v813 = vpack.c.b16 %v733, %v729
    %v814 = vpack.c.b16 %v734, %v730
    %v815 = vpack.c.b16 %v735, %v731
    %v816 = vpack.c.b16 %v740, %v736
    %v817 = vpack.c.b16 %v741, %v737
    %v818 = vpack.c.b16 %v742, %v738
    %v819 = vpack.c.b16 %v743, %v739
    %v820 = vpack.c.b16 %v748, %v744
    %v821 = vpack.c.b16 %v749, %v745
    %v822 = vpack.c.b16 %v750, %v746
    %v823 = vpack.c.b16 %v751, %v747
    %v824 = vpack.c.b16 %v756, %v752
    %v825 = vpack.c.b16 %v757, %v753
    %v826 = vpack.c.b16 %v758, %v754
    %v827 = vpack.c.b16 %v759, %v755
    %v828 = vpack.c.b16 %v764, %v760
    %v829 = vpack.c.b16 %v765, %v761
    %v830 = vpack.c.b16 %v766, %v762
    %v831 = vpack.c.b16 %v767, %v763
    %896 = vmatprep.subr.bf16.mxu0 %v769
    %897 = vmatpush1.bf16.msra.mxu0 %v768
    %898 = vmatprep.subr.bf16.mxu0 %v773
    %899 = vmatpush1.bf16.msra.mxu0 %v772
    %900 = vmatprep.subr.bf16.mxu0 %v777
    %901 = vmatpush1.bf16.msra.mxu0 %v776
    %902 = vmatprep.subr.bf16.mxu0 %v781
    %903 = vmatpush1.bf16.msra.mxu0 %v780
    %904 = vmatprep.subr.bf16.mxu0 %v785
    %905 = vmatpush1.bf16.msra.mxu0 %v784
    %906 = vmatprep.subr.bf16.mxu0 %v789
    %907 = vmatpush1.bf16.msra.mxu0 %v788
    %908 = vmatprep.subr.bf16.mxu0 %v793
    %909 = vmatpush1.bf16.msra.mxu0 %v792
    %910 = vmatprep.subr.bf16.mxu0 %v797
    %911 = vmatpush1.bf16.msra.mxu0 %v796
    %912 = vmatprep.subr.bf16.mxu0 %v801
    %913 = vmatpush1.bf16.msra.mxu0 %v800
    %914 = vmatprep.subr.bf16.mxu0 %v805
    %915 = vmatpush1.bf16.msra.mxu0 %v804
    %916 = vmatprep.subr.bf16.mxu0 %v809
    %917 = vmatpush1.bf16.msra.mxu0 %v808
    %918 = vmatprep.subr.bf16.mxu0 %v813
    %919 = vmatpush1.bf16.msra.mxu0 %v812
    %920 = vmatprep.subr.bf16.mxu0 %v817
    %921 = vmatpush1.bf16.msra.mxu0 %v816
    %922 = vmatprep.subr.bf16.mxu0 %v821
    %923 = vmatpush1.bf16.msra.mxu0 %v820
    %924 = vmatprep.subr.bf16.mxu0 %v825
    %925 = vmatpush1.bf16.msra.mxu0 %v824
    %926 = vmatprep.subr.bf16.mxu0 %v829
    %927 = vmatpush1.bf16.msra.mxu0 %v828
    %928 = vmatprep.mubr.bf16.mxu0 %v475
    %929 = vmatmul.mubr.bf16.gmra.mrb[0].mxu0 %v474
    %v930 = vpop.f32.mrb[0].mxu0
    %v931 = vadd.f32 %v559, %v930
    %v932 = vpop.f32.mrb[0].mxu0
    %v933 = vadd.f32 %v563, %v932
    %v934 = vpop.f32.mrb[0].mxu0
    %v935 = vadd.f32 %v559, %v934
    %v936 = vpop.f32.mrb[0].mxu0
    %v937 = vadd.f32 %v563, %v936
    %938 = vmatprep.mubr.bf16.mxu0 %v477
    %939 = vmatmul.mubr.bf16.gmra.mrb[0].mxu0 %v476
    %v940 = vpop.f32.mrb[0].mxu0
    %v941 = vadd.f32 %v559, %v940
    %v942 = vpop.f32.mrb[0].mxu0
    %v943 = vadd.f32 %v563, %v942
    %v944 = vpop.f32.mrb[0].mxu0
    %v945 = vadd.f32 %v559, %v944
    %v946 = vpop.f32.mrb[0].mxu0
    %v947 = vadd.f32 %v563, %v946
    %948 = vdwg.mxu0
    %949 = vmatprep.subr.bf16.mxu0 %v771
    %950 = vmatpush1.bf16.msra.mxu0 %v770
    %951 = vmatprep.subr.bf16.mxu0 %v775
    %952 = vmatpush1.bf16.msra.mxu0 %v774
    %953 = vmatprep.subr.bf16.mxu0 %v779
    %954 = vmatpush1.bf16.msra.mxu0 %v778
    %955 = vmatprep.subr.bf16.mxu0 %v783
    %956 = vmatpush1.bf16.msra.mxu0 %v782
    %957 = vmatprep.subr.bf16.mxu0 %v787
    %958 = vmatpush1.bf16.msra.mxu0 %v786
    %959 = vmatprep.subr.bf16.mxu0 %v791
    %960 = vmatpush1.bf16.msra.mxu0 %v790
    %961 = vmatprep.subr.bf16.mxu0 %v795
    %962 = vmatpush1.bf16.msra.mxu0 %v794
    %963 = vmatprep.subr.bf16.mxu0 %v799
    %964 = vmatpush1.bf16.msra.mxu0 %v798
    %965 = vmatprep.subr.bf16.mxu0 %v803
    %966 = vmatpush1.bf16.msra.mxu0 %v802
    %967 = vmatprep.subr.bf16.mxu0 %v807
    %968 = vmatpush1.bf16.msra.mxu0 %v806
    %969 = vmatprep.subr.bf16.mxu0 %v811
    %970 = vmatpush1.bf16.msra.mxu0 %v810
    %971 = vmatprep.subr.bf16.mxu0 %v815
    %972 = vmatpush1.bf16.msra.mxu0 %v814
    %973 = vmatprep.subr.bf16.mxu0 %v819
    %974 = vmatpush1.bf16.msra.mxu0 %v818
    %975 = vmatprep.subr.bf16.mxu0 %v823
    %976 = vmatpush1.bf16.msra.mxu0 %v822
    %977 = vmatprep.subr.bf16.mxu0 %v827
    %978 = vmatpush1.bf16.msra.mxu0 %v826
    %979 = vmatprep.subr.bf16.mxu0 %v831
    %980 = vmatpush1.bf16.msra.mxu0 %v830
    %981 = vmatprep.mubr.bf16.mxu0 %v475
    %982 = vmatmul.mubr.bf16.gmra.mrb[0].mxu0 %v474
    %v983 = vpop.f32.mrb[0].mxu0
    %v984 = vadd.f32 %v567, %v983
    %v985 = vpop.f32.mrb[0].mxu0
    %v986 = vadd.f32 %v571, %v985
    %v987 = vpop.f32.mrb[0].mxu0
    %v988 = vadd.f32 %v567, %v987
    %v989 = vpop.f32.mrb[0].mxu0
    %v990 = vadd.f32 %v571, %v989
    %991 = vmatprep.mubr.bf16.mxu0 %v477
    %992 = vmatmul.mubr.bf16.gmra.mrb[0].mxu0 %v476
    %v993 = vpop.f32.mrb[0].mxu0
    %v994 = vadd.f32 %v567, %v993
    %v995 = vpop.f32.mrb[0].mxu0
    %v996 = vadd.f32 %v571, %v995
    %v997 = vpop.f32.mrb[0].mxu0
    %v998 = vadd.f32 %v567, %v997
    %v999 = vpop.f32.mrb[0].mxu0
    %v1000 = vadd.f32 %v571, %v999
    %1001 = vdwg.mxu0
    %1002 = vmatprep.subr.bf16.mxu0 %v769
    %1003 = vmatpush1.bf16.msra.mxu0 %v768
    %1004 = vmatprep.subr.bf16.mxu0 %v773
    %1005 = vmatpush1.bf16.msra.mxu0 %v772
    %1006 = vmatprep.subr.bf16.mxu0 %v777
    %1007 = vmatpush1.bf16.msra.mxu0 %v776
    %1008 = vmatprep.subr.bf16.mxu0 %v781
    %1009 = vmatpush1.bf16.msra.mxu0 %v780
    %1010 = vmatprep.subr.bf16.mxu0 %v785
    %1011 = vmatpush1.bf16.msra.mxu0 %v784
    %1012 = vmatprep.subr.bf16.mxu0 %v789
    %1013 = vmatpush1.bf16.msra.mxu0 %v788
    %1014 = vmatprep.subr.bf16.mxu0 %v793
    %1015 = vmatpush1.bf16.msra.mxu0 %v792
    %1016 = vmatprep.subr.bf16.mxu0 %v797
    %1017 = vmatpush1.bf16.msra.mxu0 %v796
    %1018 = vmatprep.subr.bf16.mxu0 %v801
    %1019 = vmatpush1.bf16.msra.mxu0 %v800
    %1020 = vmatprep.subr.bf16.mxu0 %v805
    %1021 = vmatpush1.bf16.msra.mxu0 %v804
    %1022 = vmatprep.subr.bf16.mxu0 %v809
    %1023 = vmatpush1.bf16.msra.mxu0 %v808
    %1024 = vmatprep.subr.bf16.mxu0 %v813
    %1025 = vmatpush1.bf16.msra.mxu0 %v812
    %1026 = vmatprep.subr.bf16.mxu0 %v817
    %1027 = vmatpush1.bf16.msra.mxu0 %v816
    %1028 = vmatprep.subr.bf16.mxu0 %v821
    %1029 = vmatpush1.bf16.msra.mxu0 %v820
    %1030 = vmatprep.subr.bf16.mxu0 %v825
    %1031 = vmatpush1.bf16.msra.mxu0 %v824
    %1032 = vmatprep.subr.bf16.mxu0 %v829
    %1033 = vmatpush1.bf16.msra.mxu0 %v828
    %1034 = vmatprep.mubr.bf16.mxu0 %v487
    %1035 = vmatmul.mubr.bf16.gmra.mrb[0].mxu0 %v486
    %v1036 = vpop.f32.mrb[0].mxu0
    %v1037 = vadd.f32 %v559, %v1036
    %v1038 = vpop.f32.mrb[0].mxu0
    %v1039 = vadd.f32 %v563, %v1038
    %v1040 = vpop.f32.mrb[0].mxu0
    %v1041 = vadd.f32 %v559, %v1040
    %v1042 = vpop.f32.mrb[0].mxu0
    %v1043 = vadd.f32 %v563, %v1042
    %1044 = vmatprep.mubr.bf16.mxu0 %v489
    %1045 = vmatmul.mubr.bf16.gmra.mrb[0].mxu0 %v488
    %v1046 = vpop.f32.mrb[0].mxu0
    %v1047 = vadd.f32 %v559, %v1046
    %v1048 = vpop.f32.mrb[0].mxu0
    %v1049 = vadd.f32 %v563, %v1048
    %v1050 = vpop.f32.mrb[0].mxu0
    %v1051 = vadd.f32 %v559, %v1050
    %v1052 = vpop.f32.mrb[0].mxu0
    %v1053 = vadd.f32 %v563, %v1052
    %1054 = vdwg.mxu0
    %1055 = vmatprep.subr.bf16.mxu0 %v771
    %1056 = vmatpush1.bf16.msra.mxu0 %v770
    %1057 = vmatprep.subr.bf16.mxu0 %v775
    %1058 = vmatpush1.bf16.msra.mxu0 %v774
    %1059 = vmatprep.subr.bf16.mxu0 %v779
    %1060 = vmatpush1.bf16.msra.mxu0 %v778
    %1061 = vmatprep.subr.bf16.mxu0 %v783
    %1062 = vmatpush1.bf16.msra.mxu0 %v782
    %1063 = vmatprep.subr.bf16.mxu0 %v787
    %1064 = vmatpush1.bf16.msra.mxu0 %v786
    %1065 = vmatprep.subr.bf16.mxu0 %v791
    %1066 = vmatpush1.bf16.msra.mxu0 %v790
    %1067 = vmatprep.subr.bf16.mxu0 %v795
    %1068 = vmatpush1.bf16.msra.mxu0 %v794
    %1069 = vmatprep.subr.bf16.mxu0 %v799
    %1070 = vmatpush1.bf16.msra.mxu0 %v798
    %1071 = vmatprep.subr.bf16.mxu0 %v803
    %1072 = vmatpush1.bf16.msra.mxu0 %v802
    %1073 = vmatprep.subr.bf16.mxu0 %v807
    %1074 = vmatpush1.bf16.msra.mxu0 %v806
    %1075 = vmatprep.subr.bf16.mxu0 %v811
    %1076 = vmatpush1.bf16.msra.mxu0 %v810
    %1077 = vmatprep.subr.bf16.mxu0 %v815
    %1078 = vmatpush1.bf16.msra.mxu0 %v814
    %1079 = vmatprep.subr.bf16.mxu0 %v819
    %1080 = vmatpush1.bf16.msra.mxu0 %v818
    %1081 = vmatprep.subr.bf16.mxu0 %v823
    %1082 = vmatpush1.bf16.msra.mxu0 %v822
    %1083 = vmatprep.subr.bf16.mxu0 %v827
    %1084 = vmatpush1.bf16.msra.mxu0 %v826
    %1085 = vmatprep.subr.bf16.mxu0 %v831
    %1086 = vmatpush1.bf16.msra.mxu0 %v830
    %1087 = vmatprep.mubr.bf16.mxu0 %v487
    %1088 = vmatmul.mubr.bf16.gmra.mrb[0].mxu0 %v486
    %v1089 = vpop.f32.mrb[0].mxu0
    %v1090 = vadd.f32 %v567, %v1089
    %v1091 = vpop.f32.mrb[0].mxu0
    %v1092 = vadd.f32 %v571, %v1091
    %v1093 = vpop.f32.mrb[0].mxu0
    %v1094 = vadd.f32 %v567, %v1093
    %v1095 = vpop.f32.mrb[0].mxu0
    %v1096 = vadd.f32 %v571, %v1095
    %1097 = vmatprep.mubr.bf16.mxu0 %v489
    %1098 = vmatmul.mubr.bf16.gmra.mrb[0].mxu0 %v488
    %v1099 = vpop.f32.mrb[0].mxu0
    %v1100 = vadd.f32 %v567, %v1099
    %v1101 = vpop.f32.mrb[0].mxu0
    %v1102 = vadd.f32 %v571, %v1101
    %v1103 = vpop.f32.mrb[0].mxu0
    %v1104 = vadd.f32 %v567, %v1103
    %v1105 = vpop.f32.mrb[0].mxu0
    %v1106 = vadd.f32 %v571, %v1105
    %1107 = vdwg.mxu0
    %v1108 = vmax.f32 %v931, 0.0
    %v1109 = vmax.f32 %v933, 0.0
    %v1110 = vmax.f32 %v984, 0.0
    %v1111 = vmax.f32 %v986, 0.0
    %v1112 = vmax.f32 %v935, 0.0
    %v1113 = vmax.f32 %v937, 0.0
    %v1114 = vmax.f32 %v988, 0.0
    %v1115 = vmax.f32 %v990, 0.0
    %v1116 = vmax.f32 %v941, 0.0
    %v1117 = vmax.f32 %v943, 0.0
    %v1118 = vmax.f32 %v994, 0.0
    %v1119 = vmax.f32 %v996, 0.0
    %v1120 = vmax.f32 %v945, 0.0
    %v1121 = vmax.f32 %v947, 0.0
    %v1122 = vmax.f32 %v998, 0.0
    %v1123 = vmax.f32 %v1000, 0.0
    %v1124 = vpack.c.bf16 %v1112, %v1108
    %v1125 = vpack.c.bf16 %v1113, %v1109
    %v1126 = vpack.c.bf16 %v1114, %v1110
    %v1127 = vpack.c.bf16 %v1115, %v1111
    %v1128 = vpack.c.bf16 %v1120, %v1116
    %v1129 = vpack.c.bf16 %v1121, %v1117
    %v1130 = vpack.c.bf16 %v1122, %v1118
    %v1131 = vpack.c.bf16 %v1123, %v1119
    %v1132 = vmax.f32 %v1037, 0.0
    %v1133 = vmax.f32 %v1039, 0.0
    %v1134 = vmax.f32 %v1090, 0.0
    %v1135 = vmax.f32 %v1092, 0.0
    %v1136 = vmax.f32 %v1041, 0.0
    %v1137 = vmax.f32 %v1043, 0.0
    %v1138 = vmax.f32 %v1094, 0.0
    %v1139 = vmax.f32 %v1096, 0.0
    %v1140 = vmax.f32 %v1047, 0.0
    %v1141 = vmax.f32 %v1049, 0.0
    %v1142 = vmax.f32 %v1100, 0.0
    %v1143 = vmax.f32 %v1102, 0.0
    %v1144 = vmax.f32 %v1051, 0.0
    %v1145 = vmax.f32 %v1053, 0.0
    %v1146 = vmax.f32 %v1104, 0.0
    %v1147 = vmax.f32 %v1106, 0.0
    %v1148 = vpack.c.bf16 %v1136, %v1132
    %v1149 = vpack.c.bf16 %v1137, %v1133
    %v1150 = vpack.c.bf16 %v1138, %v1134
    %v1151 = vpack.c.bf16 %v1139, %v1135
    %v1152 = vpack.c.bf16 %v1144, %v1140
    %v1153 = vpack.c.bf16 %v1145, %v1141
    %v1154 = vpack.c.bf16 %v1146, %v1142
    %v1155 = vpack.c.bf16 %v1147, %v1143
    %v1156 = vld [vmem:[#allocation6] sm:$0xff]
    %v1157 = vld [vmem:[#allocation6 + $0x8] sm:$0xff]
    %v1158 = vld [vmem:[#allocation6 + $0x10] sm:$0xff]
    %v1159 = vld [vmem:[#allocation6 + $0x18] sm:$0xff]
    %v1160 = vld [vmem:[#allocation6 + $0x20] sm:$0xff]
    %v1161 = vld [vmem:[#allocation6 + $0x28] sm:$0xff]
    %v1162 = vld [vmem:[#allocation6 + $0x30] sm:$0xff]
    %v1163 = vld [vmem:[#allocation6 + $0x38] sm:$0xff]
    %v1164 = vld [vmem:[#allocation6 + $0x40] sm:$0xff]
    %v1165 = vld [vmem:[#allocation6 + $0x48] sm:$0xff]
    %v1166 = vld [vmem:[#allocation6 + $0x50] sm:$0xff]
    %v1167 = vld [vmem:[#allocation6 + $0x58] sm:$0xff]
    %v1168 = vld [vmem:[#allocation6 + $0x60] sm:$0xff]
    %v1169 = vld [vmem:[#allocation6 + $0x68] sm:$0xff]
    %v1170 = vld [vmem:[#allocation6 + $0x70] sm:$0xff]
    %v1171 = vld [vmem:[#allocation6 + $0x78] sm:$0xff]
    %v1172 = vld [vmem:[#allocation6 + $0x80] sm:$0xff]
    %v1173 = vld [vmem:[#allocation6 + $0x88] sm:$0xff]
    %v1174 = vld [vmem:[#allocation6 + $0x90] sm:$0xff]
    %v1175 = vld [vmem:[#allocation6 + $0x98] sm:$0xff]
    %v1176 = vld [vmem:[#allocation6 + $0xa0] sm:$0xff]
    %v1177 = vld [vmem:[#allocation6 + $0xa8] sm:$0xff]
    %v1178 = vld [vmem:[#allocation6 + $0xb0] sm:$0xff]
    %v1179 = vld [vmem:[#allocation6 + $0xb8] sm:$0xff]
    %v1180 = vld [vmem:[#allocation6 + $0xc0] sm:$0xff]
    %v1181 = vld [vmem:[#allocation6 + $0xc8] sm:$0xff]
    %v1182 = vld [vmem:[#allocation6 + $0xd0] sm:$0xff]
    %v1183 = vld [vmem:[#allocation6 + $0xd8] sm:$0xff]
    %v1184 = vld [vmem:[#allocation6 + $0xe0] sm:$0xff]
    %v1185 = vld [vmem:[#allocation6 + $0xe8] sm:$0xff]
    %v1186 = vld [vmem:[#allocation6 + $0xf0] sm:$0xff]
    %v1187 = vld [vmem:[#allocation6 + $0xf8] sm:$0xff]
    %v1188 = vld [vmem:[#allocation6 + $0x100] sm:$0xff]
    %v1189 = vld [vmem:[#allocation6 + $0x108] sm:$0xff]
    %v1190 = vld [vmem:[#allocation6 + $0x110] sm:$0xff]
    %v1191 = vld [vmem:[#allocation6 + $0x118] sm:$0xff]
    %v1192 = vld [vmem:[#allocation6 + $0x120] sm:$0xff]
    %v1193 = vld [vmem:[#allocation6 + $0x128] sm:$0xff]
    %v1194 = vld [vmem:[#allocation6 + $0x130] sm:$0xff]
    %v1195 = vld [vmem:[#allocation6 + $0x138] sm:$0xff]
    %v1196 = vld [vmem:[#allocation6 + $0x140] sm:$0xff]
    %v1197 = vld [vmem:[#allocation6 + $0x148] sm:$0xff]
    %v1198 = vld [vmem:[#allocation6 + $0x150] sm:$0xff]
    %v1199 = vld [vmem:[#allocation6 + $0x158] sm:$0xff]
    %v1200 = vld [vmem:[#allocation6 + $0x160] sm:$0xff]
    %v1201 = vld [vmem:[#allocation6 + $0x168] sm:$0xff]
    %v1202 = vld [vmem:[#allocation6 + $0x170] sm:$0xff]
    %v1203 = vld [vmem:[#allocation6 + $0x178] sm:$0xff]
    %v1204 = vld [vmem:[#allocation6 + $0x180] sm:$0xff]
    %v1205 = vld [vmem:[#allocation6 + $0x188] sm:$0xff]
    %v1206 = vld [vmem:[#allocation6 + $0x190] sm:$0xff]
    %v1207 = vld [vmem:[#allocation6 + $0x198] sm:$0xff]
    %v1208 = vld [vmem:[#allocation6 + $0x1a0] sm:$0xff]
    %v1209 = vld [vmem:[#allocation6 + $0x1a8] sm:$0xff]
    %v1210 = vld [vmem:[#allocation6 + $0x1b0] sm:$0xff]
    %v1211 = vld [vmem:[#allocation6 + $0x1b8] sm:$0xff]
    %v1212 = vld [vmem:[#allocation6 + $0x1c0] sm:$0xff]
    %v1213 = vld [vmem:[#allocation6 + $0x1c8] sm:$0xff]
    %v1214 = vld [vmem:[#allocation6 + $0x1d0] sm:$0xff]
    %v1215 = vld [vmem:[#allocation6 + $0x1d8] sm:$0xff]
    %v1216 = vld [vmem:[#allocation6 + $0x1e0] sm:$0xff]
    %v1217 = vld [vmem:[#allocation6 + $0x1e8] sm:$0xff]
    %v1218 = vld [vmem:[#allocation6 + $0x1f0] sm:$0xff]
    %v1219 = vld [vmem:[#allocation6 + $0x1f8] sm:$0xff]
    %v1220 = vld [vmem:[#allocation6 + $0x200] sm:$0xff]
    %v1221 = vld [vmem:[#allocation6 + $0x208] sm:$0xff]
    %v1222 = vld [vmem:[#allocation6 + $0x210] sm:$0xff]
    %v1223 = vld [vmem:[#allocation6 + $0x218] sm:$0xff]
    %v1224 = vld [vmem:[#allocation6 + $0x220] sm:$0xff]
    %v1225 = vld [vmem:[#allocation6 + $0x228] sm:$0xff]
    %v1226 = vld [vmem:[#allocation6 + $0x230] sm:$0xff]
    %v1227 = vld [vmem:[#allocation6 + $0x238] sm:$0xff]
    %v1228 = vld [vmem:[#allocation6 + $0x240] sm:$0xff]
    %v1229 = vld [vmem:[#allocation6 + $0x248] sm:$0xff]
    %v1230 = vld [vmem:[#allocation6 + $0x250] sm:$0xff]
    %v1231 = vld [vmem:[#allocation6 + $0x258] sm:$0xff]
    %v1232 = vld [vmem:[#allocation6 + $0x260] sm:$0xff]
    %v1233 = vld [vmem:[#allocation6 + $0x268] sm:$0xff]
    %v1234 = vld [vmem:[#allocation6 + $0x270] sm:$0xff]
    %v1235 = vld [vmem:[#allocation6 + $0x278] sm:$0xff]
    %v1236 = vld [vmem:[#allocation6 + $0x280] sm:$0xff]
    %v1237 = vld [vmem:[#allocation6 + $0x288] sm:$0xff]
    %v1238 = vld [vmem:[#allocation6 + $0x290] sm:$0xff]
    %v1239 = vld [vmem:[#allocation6 + $0x298] sm:$0xff]
    %v1240 = vld [vmem:[#allocation6 + $0x2a0] sm:$0xff]
    %v1241 = vld [vmem:[#allocation6 + $0x2a8] sm:$0xff]
    %v1242 = vld [vmem:[#allocation6 + $0x2b0] sm:$0xff]
    %v1243 = vld [vmem:[#allocation6 + $0x2b8] sm:$0xff]
    %v1244 = vld [vmem:[#allocation6 + $0x2c0] sm:$0xff]
    %v1245 = vld [vmem:[#allocation6 + $0x2c8] sm:$0xff]
    %v1246 = vld [vmem:[#allocation6 + $0x2d0] sm:$0xff]
    %v1247 = vld [vmem:[#allocation6 + $0x2d8] sm:$0xff]
    %v1248 = vld [vmem:[#allocation6 + $0x2e0] sm:$0xff]
    %v1249 = vld [vmem:[#allocation6 + $0x2e8] sm:$0xff]
    %v1250 = vld [vmem:[#allocation6 + $0x2f0] sm:$0xff]
    %v1251 = vld [vmem:[#allocation6 + $0x2f8] sm:$0xff]
    %v1252 = vld [vmem:[#allocation6 + $0x300] sm:$0xff]
    %v1253 = vld [vmem:[#allocation6 + $0x308] sm:$0xff]
    %v1254 = vld [vmem:[#allocation6 + $0x310] sm:$0xff]
    %v1255 = vld [vmem:[#allocation6 + $0x318] sm:$0xff]
    %v1256 = vld [vmem:[#allocation6 + $0x320] sm:$0xff]
    %v1257 = vld [vmem:[#allocation6 + $0x328] sm:$0xff]
    %v1258 = vld [vmem:[#allocation6 + $0x330] sm:$0xff]
    %v1259 = vld [vmem:[#allocation6 + $0x338] sm:$0xff]
    %v1260 = vld [vmem:[#allocation6 + $0x340] sm:$0xff]
    %v1261 = vld [vmem:[#allocation6 + $0x348] sm:$0xff]
    %v1262 = vld [vmem:[#allocation6 + $0x350] sm:$0xff]
    %v1263 = vld [vmem:[#allocation6 + $0x358] sm:$0xff]
    %v1264 = vld [vmem:[#allocation6 + $0x360] sm:$0xff]
    %v1265 = vld [vmem:[#allocation6 + $0x368] sm:$0xff]
    %v1266 = vld [vmem:[#allocation6 + $0x370] sm:$0xff]
    %v1267 = vld [vmem:[#allocation6 + $0x378] sm:$0xff]
    %v1268 = vld [vmem:[#allocation6 + $0x380] sm:$0xff]
    %v1269 = vld [vmem:[#allocation6 + $0x388] sm:$0xff]
    %v1270 = vld [vmem:[#allocation6 + $0x390] sm:$0xff]
    %v1271 = vld [vmem:[#allocation6 + $0x398] sm:$0xff]
    %v1272 = vld [vmem:[#allocation6 + $0x3a0] sm:$0xff]
    %v1273 = vld [vmem:[#allocation6 + $0x3a8] sm:$0xff]
    %v1274 = vld [vmem:[#allocation6 + $0x3b0] sm:$0xff]
    %v1275 = vld [vmem:[#allocation6 + $0x3b8] sm:$0xff]
    %v1276 = vld [vmem:[#allocation6 + $0x3c0] sm:$0xff]
    %v1277 = vld [vmem:[#allocation6 + $0x3c8] sm:$0xff]
    %v1278 = vld [vmem:[#allocation6 + $0x3d0] sm:$0xff]
    %v1279 = vld [vmem:[#allocation6 + $0x3d8] sm:$0xff]
    %v1280 = vld [vmem:[#allocation6 + $0x3e0] sm:$0xff]
    %v1281 = vld [vmem:[#allocation6 + $0x3e8] sm:$0xff]
    %v1282 = vld [vmem:[#allocation6 + $0x3f0] sm:$0xff]
    %v1283 = vld [vmem:[#allocation6 + $0x3f8] sm:$0xff]
    %v1284 = vld [vmem:[#allocation6 + $0x400] sm:$0xff]
    %v1285 = vld [vmem:[#allocation6 + $0x408] sm:$0xff]
    %v1286 = vld [vmem:[#allocation6 + $0x410] sm:$0xff]
    %v1287 = vld [vmem:[#allocation6 + $0x418] sm:$0xff]
    %v1288 = vld [vmem:[#allocation6 + $0x420] sm:$0xff]
    %v1289 = vld [vmem:[#allocation6 + $0x428] sm:$0xff]
    %v1290 = vld [vmem:[#allocation6 + $0x430] sm:$0xff]
    %v1291 = vld [vmem:[#allocation6 + $0x438] sm:$0xff]
    %v1292 = vld [vmem:[#allocation6 + $0x440] sm:$0xff]
    %v1293 = vld [vmem:[#allocation6 + $0x448] sm:$0xff]
    %v1294 = vld [vmem:[#allocation6 + $0x450] sm:$0xff]
    %v1295 = vld [vmem:[#allocation6 + $0x458] sm:$0xff]
    %v1296 = vld [vmem:[#allocation6 + $0x460] sm:$0xff]
    %v1297 = vld [vmem:[#allocation6 + $0x468] sm:$0xff]
    %v1298 = vld [vmem:[#allocation6 + $0x470] sm:$0xff]
    %v1299 = vld [vmem:[#allocation6 + $0x478] sm:$0xff]
    %v1300 = vld [vmem:[#allocation6 + $0x480] sm:$0xff]
    %v1301 = vld [vmem:[#allocation6 + $0x488] sm:$0xff]
    %v1302 = vld [vmem:[#allocation6 + $0x490] sm:$0xff]
    %v1303 = vld [vmem:[#allocation6 + $0x498] sm:$0xff]
    %v1304 = vld [vmem:[#allocation6 + $0x4a0] sm:$0xff]
    %v1305 = vld [vmem:[#allocation6 + $0x4a8] sm:$0xff]
    %v1306 = vld [vmem:[#allocation6 + $0x4b0] sm:$0xff]
    %v1307 = vld [vmem:[#allocation6 + $0x4b8] sm:$0xff]
    %v1308 = vld [vmem:[#allocation6 + $0x4c0] sm:$0xff]
    %v1309 = vld [vmem:[#allocation6 + $0x4c8] sm:$0xff]
    %v1310 = vld [vmem:[#allocation6 + $0x4d0] sm:$0xff]
    %v1311 = vld [vmem:[#allocation6 + $0x4d8] sm:$0xff]
    %v1312 = vld [vmem:[#allocation6 + $0x4e0] sm:$0xff]
    %v1313 = vld [vmem:[#allocation6 + $0x4e8] sm:$0xff]
    %v1314 = vld [vmem:[#allocation6 + $0x4f0] sm:$0xff]
    %v1315 = vld [vmem:[#allocation6 + $0x4f8] sm:$0xff]
    %v1316 = vld [vmem:[#allocation6 + $0x500] sm:$0xff]
    %v1317 = vld [vmem:[#allocation6 + $0x508] sm:$0xff]
    %v1318 = vld [vmem:[#allocation6 + $0x510] sm:$0xff]
    %v1319 = vld [vmem:[#allocation6 + $0x518] sm:$0xff]
    %v1320 = vld [vmem:[#allocation6 + $0x520] sm:$0xff]
    %v1321 = vld [vmem:[#allocation6 + $0x528] sm:$0xff]
    %v1322 = vld [vmem:[#allocation6 + $0x530] sm:$0xff]
    %v1323 = vld [vmem:[#allocation6 + $0x538] sm:$0xff]
    %v1324 = vld [vmem:[#allocation6 + $0x540] sm:$0xff]
    %v1325 = vld [vmem:[#allocation6 + $0x548] sm:$0xff]
    %v1326 = vld [vmem:[#allocation6 + $0x550] sm:$0xff]
    %v1327 = vld [vmem:[#allocation6 + $0x558] sm:$0xff]
    %v1328 = vld [vmem:[#allocation6 + $0x560] sm:$0xff]
    %v1329 = vld [vmem:[#allocation6 + $0x568] sm:$0xff]
    %v1330 = vld [vmem:[#allocation6 + $0x570] sm:$0xff]
    %v1331 = vld [vmem:[#allocation6 + $0x578] sm:$0xff]
    %v1332 = vld [vmem:[#allocation6 + $0x580] sm:$0xff]
    %v1333 = vld [vmem:[#allocation6 + $0x588] sm:$0xff]
    %v1334 = vld [vmem:[#allocation6 + $0x590] sm:$0xff]
    %v1335 = vld [vmem:[#allocation6 + $0x598] sm:$0xff]
    %v1336 = vld [vmem:[#allocation6 + $0x5a0] sm:$0xff]
    %v1337 = vld [vmem:[#allocation6 + $0x5a8] sm:$0xff]
    %v1338 = vld [vmem:[#allocation6 + $0x5b0] sm:$0xff]
    %v1339 = vld [vmem:[#allocation6 + $0x5b8] sm:$0xff]
    %v1340 = vld [vmem:[#allocation6 + $0x5c0] sm:$0xff]
    %v1341 = vld [vmem:[#allocation6 + $0x5c8] sm:$0xff]
    %v1342 = vld [vmem:[#allocation6 + $0x5d0] sm:$0xff]
    %v1343 = vld [vmem:[#allocation6 + $0x5d8] sm:$0xff]
    %v1344 = vld [vmem:[#allocation6 + $0x5e0] sm:$0xff]
    %v1345 = vld [vmem:[#allocation6 + $0x5e8] sm:$0xff]
    %v1346 = vld [vmem:[#allocation6 + $0x5f0] sm:$0xff]
    %v1347 = vld [vmem:[#allocation6 + $0x5f8] sm:$0xff]
    %v1348 = vld [vmem:[#allocation6 + $0x600] sm:$0xff]
    %v1349 = vld [vmem:[#allocation6 + $0x608] sm:$0xff]
    %v1350 = vld [vmem:[#allocation6 + $0x610] sm:$0xff]
    %v1351 = vld [vmem:[#allocation6 + $0x618] sm:$0xff]
    %v1352 = vld [vmem:[#allocation6 + $0x620] sm:$0xff]
    %v1353 = vld [vmem:[#allocation6 + $0x628] sm:$0xff]
    %v1354 = vld [vmem:[#allocation6 + $0x630] sm:$0xff]
    %v1355 = vld [vmem:[#allocation6 + $0x638] sm:$0xff]
    %v1356 = vld [vmem:[#allocation6 + $0x640] sm:$0xff]
    %v1357 = vld [vmem:[#allocation6 + $0x648] sm:$0xff]
    %v1358 = vld [vmem:[#allocation6 + $0x650] sm:$0xff]
    %v1359 = vld [vmem:[#allocation6 + $0x658] sm:$0xff]
    %v1360 = vld [vmem:[#allocation6 + $0x660] sm:$0xff]
    %v1361 = vld [vmem:[#allocation6 + $0x668] sm:$0xff]
    %v1362 = vld [vmem:[#allocation6 + $0x670] sm:$0xff]
    %v1363 = vld [vmem:[#allocation6 + $0x678] sm:$0xff]
    %v1364 = vld [vmem:[#allocation6 + $0x680] sm:$0xff]
    %v1365 = vld [vmem:[#allocation6 + $0x688] sm:$0xff]
    %v1366 = vld [vmem:[#allocation6 + $0x690] sm:$0xff]
    %v1367 = vld [vmem:[#allocation6 + $0x698] sm:$0xff]
    %v1368 = vld [vmem:[#allocation6 + $0x6a0] sm:$0xff]
    %v1369 = vld [vmem:[#allocation6 + $0x6a8] sm:$0xff]
    %v1370 = vld [vmem:[#allocation6 + $0x6b0] sm:$0xff]
    %v1371 = vld [vmem:[#allocation6 + $0x6b8] sm:$0xff]
    %v1372 = vld [vmem:[#allocation6 + $0x6c0] sm:$0xff]
    %v1373 = vld [vmem:[#allocation6 + $0x6c8] sm:$0xff]
    %v1374 = vld [vmem:[#allocation6 + $0x6d0] sm:$0xff]
    %v1375 = vld [vmem:[#allocation6 + $0x6d8] sm:$0xff]
    %v1376 = vld [vmem:[#allocation6 + $0x6e0] sm:$0xff]
    %v1377 = vld [vmem:[#allocation6 + $0x6e8] sm:$0xff]
    %v1378 = vld [vmem:[#allocation6 + $0x6f0] sm:$0xff]
    %v1379 = vld [vmem:[#allocation6 + $0x6f8] sm:$0xff]
    %v1380 = vld [vmem:[#allocation6 + $0x700] sm:$0xff]
    %v1381 = vld [vmem:[#allocation6 + $0x708] sm:$0xff]
    %v1382 = vld [vmem:[#allocation6 + $0x710] sm:$0xff]
    %v1383 = vld [vmem:[#allocation6 + $0x718] sm:$0xff]
    %v1384 = vld [vmem:[#allocation6 + $0x720] sm:$0xff]
    %v1385 = vld [vmem:[#allocation6 + $0x728] sm:$0xff]
    %v1386 = vld [vmem:[#allocation6 + $0x730] sm:$0xff]
    %v1387 = vld [vmem:[#allocation6 + $0x738] sm:$0xff]
    %v1388 = vld [vmem:[#allocation6 + $0x740] sm:$0xff]
    %v1389 = vld [vmem:[#allocation6 + $0x748] sm:$0xff]
    %v1390 = vld [vmem:[#allocation6 + $0x750] sm:$0xff]
    %v1391 = vld [vmem:[#allocation6 + $0x758] sm:$0xff]
    %v1392 = vld [vmem:[#allocation6 + $0x760] sm:$0xff]
    %v1393 = vld [vmem:[#allocation6 + $0x768] sm:$0xff]
    %v1394 = vld [vmem:[#allocation6 + $0x770] sm:$0xff]
    %v1395 = vld [vmem:[#allocation6 + $0x778] sm:$0xff]
    %v1396 = vld [vmem:[#allocation6 + $0x780] sm:$0xff]
    %v1397 = vld [vmem:[#allocation6 + $0x788] sm:$0xff]
    %v1398 = vld [vmem:[#allocation6 + $0x790] sm:$0xff]
    %v1399 = vld [vmem:[#allocation6 + $0x798] sm:$0xff]
    %v1400 = vld [vmem:[#allocation6 + $0x7a0] sm:$0xff]
    %v1401 = vld [vmem:[#allocation6 + $0x7a8] sm:$0xff]
    %v1402 = vld [vmem:[#allocation6 + $0x7b0] sm:$0xff]
    %v1403 = vld [vmem:[#allocation6 + $0x7b8] sm:$0xff]
    %v1404 = vld [vmem:[#allocation6 + $0x7c0] sm:$0xff]
    %v1405 = vld [vmem:[#allocation6 + $0x7c8] sm:$0xff]
    %v1406 = vld [vmem:[#allocation6 + $0x7d0] sm:$0xff]
    %v1407 = vld [vmem:[#allocation6 + $0x7d8] sm:$0xff]
    %v1408 = vld [vmem:[#allocation6 + $0x7e0] sm:$0xff]
    %v1409 = vld [vmem:[#allocation6 + $0x7e8] sm:$0xff]
    %v1410 = vld [vmem:[#allocation6 + $0x7f0] sm:$0xff]
    %v1411 = vld [vmem:[#allocation6 + $0x7f8] sm:$0xff]
    %v1412 = vld [vmem:[%s8] sm:$0xff]
    %v1414 = vlaneseq
    %v1415 = vshrl.u32 %v1414, 7
    %v1416 = vsub.s32 0, %v1415
    %v1417 = vrot.slane %v1412, %v1416
    %v1418 = vlaneseq
    %v1419 = vshrl.u32 %v1418, 7
    %v1420 = vsub.s32 1, %v1419
    %v1421 = vrot.slane %v1412, %v1420
    %v1422 = vlaneseq
    %v1423 = vshrl.u32 %v1422, 7
    %v1424 = vsub.s32 2, %v1423
    %v1425 = vrot.slane %v1412, %v1424
    %v1426 = vlaneseq
    %v1427 = vshrl.u32 %v1426, 7
    %v1428 = vsub.s32 3, %v1427
    %v1429 = vrot.slane %v1412, %v1428
    %v1430 = vlaneseq
    %v1431 = vshrl.u32 %v1430, 7
    %v1432 = vsub.s32 4, %v1431
    %v1433 = vrot.slane %v1412, %v1432
    %v1434 = vlaneseq
    %v1435 = vshrl.u32 %v1434, 7
    %v1436 = vsub.s32 5, %v1435
    %v1437 = vrot.slane %v1412, %v1436
    %v1438 = vlaneseq
    %v1439 = vshrl.u32 %v1438, 7
    %v1440 = vsub.s32 6, %v1439
    %v1441 = vrot.slane %v1412, %v1440
    %v1442 = vlaneseq
    %v1443 = vshrl.u32 %v1442, 7
    %v1444 = vsub.s32 7, %v1443
    %v1445 = vrot.slane %v1412, %v1444
    %v1710 = vunpack.c.l.b16 %v1156
    %v1711 = vunpack.c.h.b16 %v1156
    %v1712 = vunpack.c.l.b16 %v1157
    %v1713 = vunpack.c.h.b16 %v1157
    %v1714 = vunpack.c.l.b16 %v1158
    %v1715 = vunpack.c.h.b16 %v1158
    %v1716 = vunpack.c.l.b16 %v1159
    %v1717 = vunpack.c.h.b16 %v1159
    %v1718 = vunpack.c.l.b16 %v1160
    %v1719 = vunpack.c.h.b16 %v1160
    %v1720 = vunpack.c.l.b16 %v1161
    %v1721 = vunpack.c.h.b16 %v1161
    %v1722 = vunpack.c.l.b16 %v1162
    %v1723 = vunpack.c.h.b16 %v1162
    %v1724 = vunpack.c.l.b16 %v1163
    %v1725 = vunpack.c.h.b16 %v1163
    %v1726 = vunpack.c.l.b16 %v1164
    %v1727 = vunpack.c.h.b16 %v1164
    %v1728 = vunpack.c.l.b16 %v1165
    %v1729 = vunpack.c.h.b16 %v1165
    %v1730 = vunpack.c.l.b16 %v1166
    %v1731 = vunpack.c.h.b16 %v1166
    %v1732 = vunpack.c.l.b16 %v1167
    %v1733 = vunpack.c.h.b16 %v1167
    %v1734 = vunpack.c.l.b16 %v1168
    %v1735 = vunpack.c.h.b16 %v1168
    %v1736 = vunpack.c.l.b16 %v1169
    %v1737 = vunpack.c.h.b16 %v1169
    %v1738 = vunpack.c.l.b16 %v1170
    %v1739 = vunpack.c.h.b16 %v1170
    %v1740 = vunpack.c.l.b16 %v1171
    %v1741 = vunpack.c.h.b16 %v1171
    %v1742 = vunpack.c.l.b16 %v1172
    %v1743 = vunpack.c.h.b16 %v1172
    %v1744 = vunpack.c.l.b16 %v1173
    %v1745 = vunpack.c.h.b16 %v1173
    %v1746 = vunpack.c.l.b16 %v1174
    %v1747 = vunpack.c.h.b16 %v1174
    %v1748 = vunpack.c.l.b16 %v1175
    %v1749 = vunpack.c.h.b16 %v1175
    %v1750 = vunpack.c.l.b16 %v1176
    %v1751 = vunpack.c.h.b16 %v1176
    %v1752 = vunpack.c.l.b16 %v1177
    %v1753 = vunpack.c.h.b16 %v1177
    %v1754 = vunpack.c.l.b16 %v1178
    %v1755 = vunpack.c.h.b16 %v1178
    %v1756 = vunpack.c.l.b16 %v1179
    %v1757 = vunpack.c.h.b16 %v1179
    %v1758 = vunpack.c.l.b16 %v1180
    %v1759 = vunpack.c.h.b16 %v1180
    %v1760 = vunpack.c.l.b16 %v1181
    %v1761 = vunpack.c.h.b16 %v1181
    %v1762 = vunpack.c.l.b16 %v1182
    %v1763 = vunpack.c.h.b16 %v1182
    %v1764 = vunpack.c.l.b16 %v1183
    %v1765 = vunpack.c.h.b16 %v1183
    %v1766 = vunpack.c.l.b16 %v1184
    %v1767 = vunpack.c.h.b16 %v1184
    %v1768 = vunpack.c.l.b16 %v1185
    %v1769 = vunpack.c.h.b16 %v1185
    %v1770 = vunpack.c.l.b16 %v1186
    %v1771 = vunpack.c.h.b16 %v1186
    %v1772 = vunpack.c.l.b16 %v1187
    %v1773 = vunpack.c.h.b16 %v1187
    %v1774 = vunpack.c.l.b16 %v1188
    %v1775 = vunpack.c.h.b16 %v1188
    %v1776 = vunpack.c.l.b16 %v1189
    %v1777 = vunpack.c.h.b16 %v1189
    %v1778 = vunpack.c.l.b16 %v1190
    %v1779 = vunpack.c.h.b16 %v1190
    %v1780 = vunpack.c.l.b16 %v1191
    %v1781 = vunpack.c.h.b16 %v1191
    %v1782 = vunpack.c.l.b16 %v1192
    %v1783 = vunpack.c.h.b16 %v1192
    %v1784 = vunpack.c.l.b16 %v1193
    %v1785 = vunpack.c.h.b16 %v1193
    %v1786 = vunpack.c.l.b16 %v1194
    %v1787 = vunpack.c.h.b16 %v1194
    %v1788 = vunpack.c.l.b16 %v1195
    %v1789 = vunpack.c.h.b16 %v1195
    %v1790 = vunpack.c.l.b16 %v1196
    %v1791 = vunpack.c.h.b16 %v1196
    %v1792 = vunpack.c.l.b16 %v1197
    %v1793 = vunpack.c.h.b16 %v1197
    %v1794 = vunpack.c.l.b16 %v1198
    %v1795 = vunpack.c.h.b16 %v1198
    %v1796 = vunpack.c.l.b16 %v1199
    %v1797 = vunpack.c.h.b16 %v1199
    %v1798 = vunpack.c.l.b16 %v1200
    %v1799 = vunpack.c.h.b16 %v1200
    %v1800 = vunpack.c.l.b16 %v1201
    %v1801 = vunpack.c.h.b16 %v1201
    %v1802 = vunpack.c.l.b16 %v1202
    %v1803 = vunpack.c.h.b16 %v1202
    %v1804 = vunpack.c.l.b16 %v1203
    %v1805 = vunpack.c.h.b16 %v1203
    %v1806 = vunpack.c.l.b16 %v1204
    %v1807 = vunpack.c.h.b16 %v1204
    %v1808 = vunpack.c.l.b16 %v1205
    %v1809 = vunpack.c.h.b16 %v1205
    %v1810 = vunpack.c.l.b16 %v1206
    %v1811 = vunpack.c.h.b16 %v1206
    %v1812 = vunpack.c.l.b16 %v1207
    %v1813 = vunpack.c.h.b16 %v1207
    %v1814 = vunpack.c.l.b16 %v1208
    %v1815 = vunpack.c.h.b16 %v1208
    %v1816 = vunpack.c.l.b16 %v1209
    %v1817 = vunpack.c.h.b16 %v1209
    %v1818 = vunpack.c.l.b16 %v1210
    %v1819 = vunpack.c.h.b16 %v1210
    %v1820 = vunpack.c.l.b16 %v1211
    %v1821 = vunpack.c.h.b16 %v1211
    %v1822 = vunpack.c.l.b16 %v1212
    %v1823 = vunpack.c.h.b16 %v1212
    %v1824 = vunpack.c.l.b16 %v1213
    %v1825 = vunpack.c.h.b16 %v1213
    %v1826 = vunpack.c.l.b16 %v1214
    %v1827 = vunpack.c.h.b16 %v1214
    %v1828 = vunpack.c.l.b16 %v1215
    %v1829 = vunpack.c.h.b16 %v1215
    %v1830 = vunpack.c.l.b16 %v1216
    %v1831 = vunpack.c.h.b16 %v1216
    %v1832 = vunpack.c.l.b16 %v1217
    %v1833 = vunpack.c.h.b16 %v1217
    %v1834 = vunpack.c.l.b16 %v1218
    %v1835 = vunpack.c.h.b16 %v1218
    %v1836 = vunpack.c.l.b16 %v1219
    %v1837 = vunpack.c.h.b16 %v1219
    %v1838 = vunpack.c.l.b16 %v1220
    %v1839 = vunpack.c.h.b16 %v1220
    %v1840 = vunpack.c.l.b16 %v1221
    %v1841 = vunpack.c.h.b16 %v1221
    %v1842 = vunpack.c.l.b16 %v1222
    %v1843 = vunpack.c.h.b16 %v1222
    %v1844 = vunpack.c.l.b16 %v1223
    %v1845 = vunpack.c.h.b16 %v1223
    %v1846 = vunpack.c.l.b16 %v1224
    %v1847 = vunpack.c.h.b16 %v1224
    %v1848 = vunpack.c.l.b16 %v1225
    %v1849 = vunpack.c.h.b16 %v1225
    %v1850 = vunpack.c.l.b16 %v1226
    %v1851 = vunpack.c.h.b16 %v1226
    %v1852 = vunpack.c.l.b16 %v1227
    %v1853 = vunpack.c.h.b16 %v1227
    %v1854 = vunpack.c.l.b16 %v1228
    %v1855 = vunpack.c.h.b16 %v1228
    %v1856 = vunpack.c.l.b16 %v1229
    %v1857 = vunpack.c.h.b16 %v1229
    %v1858 = vunpack.c.l.b16 %v1230
    %v1859 = vunpack.c.h.b16 %v1230
    %v1860 = vunpack.c.l.b16 %v1231
    %v1861 = vunpack.c.h.b16 %v1231
    %v1862 = vunpack.c.l.b16 %v1232
    %v1863 = vunpack.c.h.b16 %v1232
    %v1864 = vunpack.c.l.b16 %v1233
    %v1865 = vunpack.c.h.b16 %v1233
    %v1866 = vunpack.c.l.b16 %v1234
    %v1867 = vunpack.c.h.b16 %v1234
    %v1868 = vunpack.c.l.b16 %v1235
    %v1869 = vunpack.c.h.b16 %v1235
    %v1870 = vunpack.c.l.b16 %v1236
    %v1871 = vunpack.c.h.b16 %v1236
    %v1872 = vunpack.c.l.b16 %v1237
    %v1873 = vunpack.c.h.b16 %v1237
    %v1874 = vunpack.c.l.b16 %v1238
    %v1875 = vunpack.c.h.b16 %v1238
    %v1876 = vunpack.c.l.b16 %v1239
    %v1877 = vunpack.c.h.b16 %v1239
    %v1878 = vunpack.c.l.b16 %v1240
    %v1879 = vunpack.c.h.b16 %v1240
    %v1880 = vunpack.c.l.b16 %v1241
    %v1881 = vunpack.c.h.b16 %v1241
    %v1882 = vunpack.c.l.b16 %v1242
    %v1883 = vunpack.c.h.b16 %v1242
    %v1884 = vunpack.c.l.b16 %v1243
    %v1885 = vunpack.c.h.b16 %v1243
    %v1886 = vunpack.c.l.b16 %v1244
    %v1887 = vunpack.c.h.b16 %v1244
    %v1888 = vunpack.c.l.b16 %v1245
    %v1889 = vunpack.c.h.b16 %v1245
    %v1890 = vunpack.c.l.b16 %v1246
    %v1891 = vunpack.c.h.b16 %v1246
    %v1892 = vunpack.c.l.b16 %v1247
    %v1893 = vunpack.c.h.b16 %v1247
    %v1894 = vunpack.c.l.b16 %v1248
    %v1895 = vunpack.c.h.b16 %v1248
    %v1896 = vunpack.c.l.b16 %v1249
    %v1897 = vunpack.c.h.b16 %v1249
    %v1898 = vunpack.c.l.b16 %v1250
    %v1899 = vunpack.c.h.b16 %v1250
    %v1900 = vunpack.c.l.b16 %v1251
    %v1901 = vunpack.c.h.b16 %v1251
    %v1902 = vunpack.c.l.b16 %v1252
    %v1903 = vunpack.c.h.b16 %v1252
    %v1904 = vunpack.c.l.b16 %v1253
    %v1905 = vunpack.c.h.b16 %v1253
    %v1906 = vunpack.c.l.b16 %v1254
    %v1907 = vunpack.c.h.b16 %v1254
    %v1908 = vunpack.c.l.b16 %v1255
    %v1909 = vunpack.c.h.b16 %v1255
    %v1910 = vunpack.c.l.b16 %v1256
    %v1911 = vunpack.c.h.b16 %v1256
    %v1912 = vunpack.c.l.b16 %v1257
    %v1913 = vunpack.c.h.b16 %v1257
    %v1914 = vunpack.c.l.b16 %v1258
    %v1915 = vunpack.c.h.b16 %v1258
    %v1916 = vunpack.c.l.b16 %v1259
    %v1917 = vunpack.c.h.b16 %v1259
    %v1918 = vunpack.c.l.b16 %v1260
    %v1919 = vunpack.c.h.b16 %v1260
    %v1920 = vunpack.c.l.b16 %v1261
    %v1921 = vunpack.c.h.b16 %v1261
    %v1922 = vunpack.c.l.b16 %v1262
    %v1923 = vunpack.c.h.b16 %v1262
    %v1924 = vunpack.c.l.b16 %v1263
    %v1925 = vunpack.c.h.b16 %v1263
    %v1926 = vunpack.c.l.b16 %v1264
    %v1927 = vunpack.c.h.b16 %v1264
    %v1928 = vunpack.c.l.b16 %v1265
    %v1929 = vunpack.c.h.b16 %v1265
    %v1930 = vunpack.c.l.b16 %v1266
    %v1931 = vunpack.c.h.b16 %v1266
    %v1932 = vunpack.c.l.b16 %v1267
    %v1933 = vunpack.c.h.b16 %v1267
    %v1934 = vunpack.c.l.b16 %v1268
    %v1935 = vunpack.c.h.b16 %v1268
    %v1936 = vunpack.c.l.b16 %v1269
    %v1937 = vunpack.c.h.b16 %v1269
    %v1938 = vunpack.c.l.b16 %v1270
    %v1939 = vunpack.c.h.b16 %v1270
    %v1940 = vunpack.c.l.b16 %v1271
    %v1941 = vunpack.c.h.b16 %v1271
    %v1942 = vunpack.c.l.b16 %v1272
    %v1943 = vunpack.c.h.b16 %v1272
    %v1944 = vunpack.c.l.b16 %v1273
    %v1945 = vunpack.c.h.b16 %v1273
    %v1946 = vunpack.c.l.b16 %v1274
    %v1947 = vunpack.c.h.b16 %v1274
    %v1948 = vunpack.c.l.b16 %v1275
    %v1949 = vunpack.c.h.b16 %v1275
    %v1950 = vunpack.c.l.b16 %v1276
    %v1951 = vunpack.c.h.b16 %v1276
    %v1952 = vunpack.c.l.b16 %v1277
    %v1953 = vunpack.c.h.b16 %v1277
    %v1954 = vunpack.c.l.b16 %v1278
    %v1955 = vunpack.c.h.b16 %v1278
    %v1956 = vunpack.c.l.b16 %v1279
    %v1957 = vunpack.c.h.b16 %v1279
    %v1958 = vunpack.c.l.b16 %v1280
    %v1959 = vunpack.c.h.b16 %v1280
    %v1960 = vunpack.c.l.b16 %v1281
    %v1961 = vunpack.c.h.b16 %v1281
    %v1962 = vunpack.c.l.b16 %v1282
    %v1963 = vunpack.c.h.b16 %v1282
    %v1964 = vunpack.c.l.b16 %v1283
    %v1965 = vunpack.c.h.b16 %v1283
    %v1966 = vunpack.c.l.b16 %v1284
    %v1967 = vunpack.c.h.b16 %v1284
    %v1968 = vunpack.c.l.b16 %v1285
    %v1969 = vunpack.c.h.b16 %v1285
    %v1970 = vunpack.c.l.b16 %v1286
    %v1971 = vunpack.c.h.b16 %v1286
    %v1972 = vunpack.c.l.b16 %v1287
    %v1973 = vunpack.c.h.b16 %v1287
    %v1974 = vunpack.c.l.b16 %v1288
    %v1975 = vunpack.c.h.b16 %v1288
    %v1976 = vunpack.c.l.b16 %v1289
    %v1977 = vunpack.c.h.b16 %v1289
    %v1978 = vunpack.c.l.b16 %v1290
    %v1979 = vunpack.c.h.b16 %v1290
    %v1980 = vunpack.c.l.b16 %v1291
    %v1981 = vunpack.c.h.b16 %v1291
    %v1982 = vunpack.c.l.b16 %v1292
    %v1983 = vunpack.c.h.b16 %v1292
    %v1984 = vunpack.c.l.b16 %v1293
    %v1985 = vunpack.c.h.b16 %v1293
    %v1986 = vunpack.c.l.b16 %v1294
    %v1987 = vunpack.c.h.b16 %v1294
    %v1988 = vunpack.c.l.b16 %v1295
    %v1989 = vunpack.c.h.b16 %v1295
    %v1990 = vunpack.c.l.b16 %v1296
    %v1991 = vunpack.c.h.b16 %v1296
    %v1992 = vunpack.c.l.b16 %v1297
    %v1993 = vunpack.c.h.b16 %v1297
    %v1994 = vunpack.c.l.b16 %v1298
    %v1995 = vunpack.c.h.b16 %v1298
    %v1996 = vunpack.c.l.b16 %v1299
    %v1997 = vunpack.c.h.b16 %v1299
    %v1998 = vunpack.c.l.b16 %v1300
    %v1999 = vunpack.c.h.b16 %v1300
    %v2000 = vunpack.c.l.b16 %v1301
    %v2001 = vunpack.c.h.b16 %v1301
    %v2002 = vunpack.c.l.b16 %v1302
    %v2003 = vunpack.c.h.b16 %v1302
    %v2004 = vunpack.c.l.b16 %v1303
    %v2005 = vunpack.c.h.b16 %v1303
    %v2006 = vunpack.c.l.b16 %v1304
    %v2007 = vunpack.c.h.b16 %v1304
    %v2008 = vunpack.c.l.b16 %v1305
    %v2009 = vunpack.c.h.b16 %v1305
    %v2010 = vunpack.c.l.b16 %v1306
    %v2011 = vunpack.c.h.b16 %v1306
    %v2012 = vunpack.c.l.b16 %v1307
    %v2013 = vunpack.c.h.b16 %v1307
    %v2014 = vunpack.c.l.b16 %v1308
    %v2015 = vunpack.c.h.b16 %v1308
    %v2016 = vunpack.c.l.b16 %v1309
    %v2017 = vunpack.c.h.b16 %v1309
    %v2018 = vunpack.c.l.b16 %v1310
    %v2019 = vunpack.c.h.b16 %v1310
    %v2020 = vunpack.c.l.b16 %v1311
    %v2021 = vunpack.c.h.b16 %v1311
    %v2022 = vunpack.c.l.b16 %v1312
    %v2023 = vunpack.c.h.b16 %v1312
    %v2024 = vunpack.c.l.b16 %v1313
    %v2025 = vunpack.c.h.b16 %v1313
    %v2026 = vunpack.c.l.b16 %v1314
    %v2027 = vunpack.c.h.b16 %v1314
    %v2028 = vunpack.c.l.b16 %v1315
    %v2029 = vunpack.c.h.b16 %v1315
    %v2030 = vunpack.c.l.b16 %v1316
    %v2031 = vunpack.c.h.b16 %v1316
    %v2032 = vunpack.c.l.b16 %v1317
    %v2033 = vunpack.c.h.b16 %v1317
    %v2034 = vunpack.c.l.b16 %v1318
    %v2035 = vunpack.c.h.b16 %v1318
    %v2036 = vunpack.c.l.b16 %v1319
    %v2037 = vunpack.c.h.b16 %v1319
    %v2038 = vunpack.c.l.b16 %v1320
    %v2039 = vunpack.c.h.b16 %v1320
    %v2040 = vunpack.c.l.b16 %v1321
    %v2041 = vunpack.c.h.b16 %v1321
    %v2042 = vunpack.c.l.b16 %v1322
    %v2043 = vunpack.c.h.b16 %v1322
    %v2044 = vunpack.c.l.b16 %v1323
    %v2045 = vunpack.c.h.b16 %v1323
    %v2046 = vunpack.c.l.b16 %v1324
    %v2047 = vunpack.c.h.b16 %v1324
    %v2048 = vunpack.c.l.b16 %v1325
    %v2049 = vunpack.c.h.b16 %v1325
    %v2050 = vunpack.c.l.b16 %v1326
    %v2051 = vunpack.c.h.b16 %v1326
    %v2052 = vunpack.c.l.b16 %v1327
    %v2053 = vunpack.c.h.b16 %v1327
    %v2054 = vunpack.c.l.b16 %v1328
    %v2055 = vunpack.c.h.b16 %v1328
    %v2056 = vunpack.c.l.b16 %v1329
    %v2057 = vunpack.c.h.b16 %v1329
    %v2058 = vunpack.c.l.b16 %v1330
    %v2059 = vunpack.c.h.b16 %v1330
    %v2060 = vunpack.c.l.b16 %v1331
    %v2061 = vunpack.c.h.b16 %v1331
    %v2062 = vunpack.c.l.b16 %v1332
    %v2063 = vunpack.c.h.b16 %v1332
    %v2064 = vunpack.c.l.b16 %v1333
    %v2065 = vunpack.c.h.b16 %v1333
    %v2066 = vunpack.c.l.b16 %v1334
    %v2067 = vunpack.c.h.b16 %v1334
    %v2068 = vunpack.c.l.b16 %v1335
    %v2069 = vunpack.c.h.b16 %v1335
    %v2070 = vunpack.c.l.b16 %v1336
    %v2071 = vunpack.c.h.b16 %v1336
    %v2072 = vunpack.c.l.b16 %v1337
    %v2073 = vunpack.c.h.b16 %v1337
    %v2074 = vunpack.c.l.b16 %v1338
    %v2075 = vunpack.c.h.b16 %v1338
    %v2076 = vunpack.c.l.b16 %v1339
    %v2077 = vunpack.c.h.b16 %v1339
    %v2078 = vunpack.c.l.b16 %v1340
    %v2079 = vunpack.c.h.b16 %v1340
    %v2080 = vunpack.c.l.b16 %v1341
    %v2081 = vunpack.c.h.b16 %v1341
    %v2082 = vunpack.c.l.b16 %v1342
    %v2083 = vunpack.c.h.b16 %v1342
    %v2084 = vunpack.c.l.b16 %v1343
    %v2085 = vunpack.c.h.b16 %v1343
    %v2086 = vunpack.c.l.b16 %v1344
    %v2087 = vunpack.c.h.b16 %v1344
    %v2088 = vunpack.c.l.b16 %v1345
    %v2089 = vunpack.c.h.b16 %v1345
    %v2090 = vunpack.c.l.b16 %v1346
    %v2091 = vunpack.c.h.b16 %v1346
    %v2092 = vunpack.c.l.b16 %v1347
    %v2093 = vunpack.c.h.b16 %v1347
    %v2094 = vunpack.c.l.b16 %v1348
    %v2095 = vunpack.c.h.b16 %v1348
    %v2096 = vunpack.c.l.b16 %v1349
    %v2097 = vunpack.c.h.b16 %v1349
    %v2098 = vunpack.c.l.b16 %v1350
    %v2099 = vunpack.c.h.b16 %v1350
    %v2100 = vunpack.c.l.b16 %v1351
    %v2101 = vunpack.c.h.b16 %v1351
    %v2102 = vunpack.c.l.b16 %v1352
    %v2103 = vunpack.c.h.b16 %v1352
    %v2104 = vunpack.c.l.b16 %v1353
    %v2105 = vunpack.c.h.b16 %v1353
    %v2106 = vunpack.c.l.b16 %v1354
    %v2107 = vunpack.c.h.b16 %v1354
    %v2108 = vunpack.c.l.b16 %v1355
    %v2109 = vunpack.c.h.b16 %v1355
    %v2110 = vunpack.c.l.b16 %v1356
    %v2111 = vunpack.c.h.b16 %v1356
    %v2112 = vunpack.c.l.b16 %v1357
    %v2113 = vunpack.c.h.b16 %v1357
    %v2114 = vunpack.c.l.b16 %v1358
    %v2115 = vunpack.c.h.b16 %v1358
    %v2116 = vunpack.c.l.b16 %v1359
    %v2117 = vunpack.c.h.b16 %v1359
    %v2118 = vunpack.c.l.b16 %v1360
    %v2119 = vunpack.c.h.b16 %v1360
    %v2120 = vunpack.c.l.b16 %v1361
    %v2121 = vunpack.c.h.b16 %v1361
    %v2122 = vunpack.c.l.b16 %v1362
    %v2123 = vunpack.c.h.b16 %v1362
    %v2124 = vunpack.c.l.b16 %v1363
    %v2125 = vunpack.c.h.b16 %v1363
    %v2126 = vunpack.c.l.b16 %v1364
    %v2127 = vunpack.c.h.b16 %v1364
    %v2128 = vunpack.c.l.b16 %v1365
    %v2129 = vunpack.c.h.b16 %v1365
    %v2130 = vunpack.c.l.b16 %v1366
    %v2131 = vunpack.c.h.b16 %v1366
    %v2132 = vunpack.c.l.b16 %v1367
    %v2133 = vunpack.c.h.b16 %v1367
    %v2134 = vunpack.c.l.b16 %v1368
    %v2135 = vunpack.c.h.b16 %v1368
    %v2136 = vunpack.c.l.b16 %v1369
    %v2137 = vunpack.c.h.b16 %v1369
    %v2138 = vunpack.c.l.b16 %v1370
    %v2139 = vunpack.c.h.b16 %v1370
    %v2140 = vunpack.c.l.b16 %v1371
    %v2141 = vunpack.c.h.b16 %v1371
    %v2142 = vunpack.c.l.b16 %v1372
    %v2143 = vunpack.c.h.b16 %v1372
    %v2144 = vunpack.c.l.b16 %v1373
    %v2145 = vunpack.c.h.b16 %v1373
    %v2146 = vunpack.c.l.b16 %v1374
    %v2147 = vunpack.c.h.b16 %v1374
    %v2148 = vunpack.c.l.b16 %v1375
    %v2149 = vunpack.c.h.b16 %v1375
    %v2150 = vunpack.c.l.b16 %v1376
    %v2151 = vunpack.c.h.b16 %v1376
    %v2152 = vunpack.c.l.b16 %v1377
    %v2153 = vunpack.c.h.b16 %v1377
    %v2154 = vunpack.c.l.b16 %v1378
    %v2155 = vunpack.c.h.b16 %v1378
    %v2156 = vunpack.c.l.b16 %v1379
    %v2157 = vunpack.c.h.b16 %v1379
    %v2158 = vunpack.c.l.b16 %v1380
    %v2159 = vunpack.c.h.b16 %v1380
    %v2160 = vunpack.c.l.b16 %v1381
    %v2161 = vunpack.c.h.b16 %v1381
    %v2162 = vunpack.c.l.b16 %v1382
    %v2163 = vunpack.c.h.b16 %v1382
    %v2164 = vunpack.c.l.b16 %v1383
    %v2165 = vunpack.c.h.b16 %v1383
    %v2166 = vunpack.c.l.b16 %v1384
    %v2167 = vunpack.c.h.b16 %v1384
    %v2168 = vunpack.c.l.b16 %v1385
    %v2169 = vunpack.c.h.b16 %v1385
    %v2170 = vunpack.c.l.b16 %v1386
    %v2171 = vunpack.c.h.b16 %v1386
    %v2172 = vunpack.c.l.b16 %v1387
    %v2173 = vunpack.c.h.b16 %v1387
    %v2174 = vunpack.c.l.b16 %v1388
    %v2175 = vunpack.c.h.b16 %v1388
    %v2176 = vunpack.c.l.b16 %v1389
    %v2177 = vunpack.c.h.b16 %v1389
    %v2178 = vunpack.c.l.b16 %v1390
    %v2179 = vunpack.c.h.b16 %v1390
    %v2180 = vunpack.c.l.b16 %v1391
    %v2181 = vunpack.c.h.b16 %v1391
    %v2182 = vunpack.c.l.b16 %v1392
    %v2183 = vunpack.c.h.b16 %v1392
    %v2184 = vunpack.c.l.b16 %v1393
    %v2185 = vunpack.c.h.b16 %v1393
    %v2186 = vunpack.c.l.b16 %v1394
    %v2187 = vunpack.c.h.b16 %v1394
    %v2188 = vunpack.c.l.b16 %v1395
    %v2189 = vunpack.c.h.b16 %v1395
    %v2190 = vunpack.c.l.b16 %v1396
    %v2191 = vunpack.c.h.b16 %v1396
    %v2192 = vunpack.c.l.b16 %v1397
    %v2193 = vunpack.c.h.b16 %v1397
    %v2194 = vunpack.c.l.b16 %v1398
    %v2195 = vunpack.c.h.b16 %v1398
    %v2196 = vunpack.c.l.b16 %v1399
    %v2197 = vunpack.c.h.b16 %v1399
    %v2198 = vunpack.c.l.b16 %v1400
    %v2199 = vunpack.c.h.b16 %v1400
    %v2200 = vunpack.c.l.b16 %v1401
    %v2201 = vunpack.c.h.b16 %v1401
    %v2202 = vunpack.c.l.b16 %v1402
    %v2203 = vunpack.c.h.b16 %v1402
    %v2204 = vunpack.c.l.b16 %v1403
    %v2205 = vunpack.c.h.b16 %v1403
    %v2206 = vunpack.c.l.b16 %v1404
    %v2207 = vunpack.c.h.b16 %v1404
    %v2208 = vunpack.c.l.b16 %v1405
    %v2209 = vunpack.c.h.b16 %v1405
    %v2210 = vunpack.c.l.b16 %v1406
    %v2211 = vunpack.c.h.b16 %v1406
    %v2212 = vunpack.c.l.b16 %v1407
    %v2213 = vunpack.c.h.b16 %v1407
    %v2214 = vunpack.c.l.b16 %v1408
    %v2215 = vunpack.c.h.b16 %v1408
    %v2216 = vunpack.c.l.b16 %v1409
    %v2217 = vunpack.c.h.b16 %v1409
    %v2218 = vunpack.c.l.b16 %v1410
    %v2219 = vunpack.c.h.b16 %v1410
    %v2220 = vunpack.c.l.b16 %v1411
    %v2221 = vunpack.c.h.b16 %v1411
    %v2222 = vpack.c.b16 %v1718, %v1710
    %v2223 = vpack.c.b16 %v1719, %v1711
    %v2224 = vpack.c.b16 %v1720, %v1712
    %v2225 = vpack.c.b16 %v1721, %v1713
    %v2226 = vpack.c.b16 %v1722, %v1714
    %v2227 = vpack.c.b16 %v1723, %v1715
    %v2228 = vpack.c.b16 %v1724, %v1716
    %v2229 = vpack.c.b16 %v1725, %v1717
    %v2230 = vpack.c.b16 %v1734, %v1726
    %v2231 = vpack.c.b16 %v1735, %v1727
    %v2232 = vpack.c.b16 %v1736, %v1728
    %v2233 = vpack.c.b16 %v1737, %v1729
    %v2234 = vpack.c.b16 %v1738, %v1730
    %v2235 = vpack.c.b16 %v1739, %v1731
    %v2236 = vpack.c.b16 %v1740, %v1732
    %v2237 = vpack.c.b16 %v1741, %v1733
    %v2238 = vpack.c.b16 %v1750, %v1742
    %v2239 = vpack.c.b16 %v1751, %v1743
    %v2240 = vpack.c.b16 %v1752, %v1744
    %v2241 = vpack.c.b16 %v1753, %v1745
    %v2242 = vpack.c.b16 %v1754, %v1746
    %v2243 = vpack.c.b16 %v1755, %v1747
    %v2244 = vpack.c.b16 %v1756, %v1748
    %v2245 = vpack.c.b16 %v1757, %v1749
    %v2246 = vpack.c.b16 %v1766, %v1758
    %v2247 = vpack.c.b16 %v1767, %v1759
    %v2248 = vpack.c.b16 %v1768, %v1760
    %v2249 = vpack.c.b16 %v1769, %v1761
    %v2250 = vpack.c.b16 %v1770, %v1762
    %v2251 = vpack.c.b16 %v1771, %v1763
    %v2252 = vpack.c.b16 %v1772, %v1764
    %v2253 = vpack.c.b16 %v1773, %v1765
    %v2254 = vpack.c.b16 %v1782, %v1774
    %v2255 = vpack.c.b16 %v1783, %v1775
    %v2256 = vpack.c.b16 %v1784, %v1776
    %v2257 = vpack.c.b16 %v1785, %v1777
    %v2258 = vpack.c.b16 %v1786, %v1778
    %v2259 = vpack.c.b16 %v1787, %v1779
    %v2260 = vpack.c.b16 %v1788, %v1780
    %v2261 = vpack.c.b16 %v1789, %v1781
    %v2262 = vpack.c.b16 %v1798, %v1790
    %v2263 = vpack.c.b16 %v1799, %v1791
    %v2264 = vpack.c.b16 %v1800, %v1792
    %v2265 = vpack.c.b16 %v1801, %v1793
    %v2266 = vpack.c.b16 %v1802, %v1794
    %v2267 = vpack.c.b16 %v1803, %v1795
    %v2268 = vpack.c.b16 %v1804, %v1796
    %v2269 = vpack.c.b16 %v1805, %v1797
    %v2270 = vpack.c.b16 %v1814, %v1806
    %v2271 = vpack.c.b16 %v1815, %v1807
    %v2272 = vpack.c.b16 %v1816, %v1808
    %v2273 = vpack.c.b16 %v1817, %v1809
    %v2274 = vpack.c.b16 %v1818, %v1810
    %v2275 = vpack.c.b16 %v1819, %v1811
    %v2276 = vpack.c.b16 %v1820, %v1812
    %v2277 = vpack.c.b16 %v1821, %v1813
    %v2278 = vpack.c.b16 %v1830, %v1822
    %v2279 = vpack.c.b16 %v1831, %v1823
    %v2280 = vpack.c.b16 %v1832, %v1824
    %v2281 = vpack.c.b16 %v1833, %v1825
    %v2282 = vpack.c.b16 %v1834, %v1826
    %v2283 = vpack.c.b16 %v1835, %v1827
    %v2284 = vpack.c.b16 %v1836, %v1828
    %v2285 = vpack.c.b16 %v1837, %v1829
    %v2286 = vpack.c.b16 %v1846, %v1838
    %v2287 = vpack.c.b16 %v1847, %v1839
    %v2288 = vpack.c.b16 %v1848, %v1840
    %v2289 = vpack.c.b16 %v1849, %v1841
    %v2290 = vpack.c.b16 %v1850, %v1842
    %v2291 = vpack.c.b16 %v1851, %v1843
    %v2292 = vpack.c.b16 %v1852, %v1844
    %v2293 = vpack.c.b16 %v1853, %v1845
    %v2294 = vpack.c.b16 %v1862, %v1854
    %v2295 = vpack.c.b16 %v1863, %v1855
    %v2296 = vpack.c.b16 %v1864, %v1856
    %v2297 = vpack.c.b16 %v1865, %v1857
    %v2298 = vpack.c.b16 %v1866, %v1858
    %v2299 = vpack.c.b16 %v1867, %v1859
    %v2300 = vpack.c.b16 %v1868, %v1860
    %v2301 = vpack.c.b16 %v1869, %v1861
    %v2302 = vpack.c.b16 %v1878, %v1870
    %v2303 = vpack.c.b16 %v1879, %v1871
    %v2304 = vpack.c.b16 %v1880, %v1872
    %v2305 = vpack.c.b16 %v1881, %v1873
    %v2306 = vpack.c.b16 %v1882, %v1874
    %v2307 = vpack.c.b16 %v1883, %v1875
    %v2308 = vpack.c.b16 %v1884, %v1876
    %v2309 = vpack.c.b16 %v1885, %v1877
    %v2310 = vpack.c.b16 %v1894, %v1886
    %v2311 = vpack.c.b16 %v1895, %v1887
    %v2312 = vpack.c.b16 %v1896, %v1888
    %v2313 = vpack.c.b16 %v1897, %v1889
    %v2314 = vpack.c.b16 %v1898, %v1890
    %v2315 = vpack.c.b16 %v1899, %v1891
    %v2316 = vpack.c.b16 %v1900, %v1892
    %v2317 = vpack.c.b16 %v1901, %v1893
    %v2318 = vpack.c.b16 %v1910, %v1902
    %v2319 = vpack.c.b16 %v1911, %v1903
    %v2320 = vpack.c.b16 %v1912, %v1904
    %v2321 = vpack.c.b16 %v1913, %v1905
    %v2322 = vpack.c.b16 %v1914, %v1906
    %v2323 = vpack.c.b16 %v1915, %v1907
    %v2324 = vpack.c.b16 %v1916, %v1908
    %v2325 = vpack.c.b16 %v1917, %v1909
    %v2326 = vpack.c.b16 %v1926, %v1918
    %v2327 = vpack.c.b16 %v1927, %v1919
    %v2328 = vpack.c.b16 %v1928, %v1920
    %v2329 = vpack.c.b16 %v1929, %v1921
    %v2330 = vpack.c.b16 %v1930, %v1922
    %v2331 = vpack.c.b16 %v1931, %v1923
    %v2332 = vpack.c.b16 %v1932, %v1924
    %v2333 = vpack.c.b16 %v1933, %v1925
    %v2334 = vpack.c.b16 %v1942, %v1934
    %v2335 = vpack.c.b16 %v1943, %v1935
    %v2336 = vpack.c.b16 %v1944, %v1936
    %v2337 = vpack.c.b16 %v1945, %v1937
    %v2338 = vpack.c.b16 %v1946, %v1938
    %v2339 = vpack.c.b16 %v1947, %v1939
    %v2340 = vpack.c.b16 %v1948, %v1940
    %v2341 = vpack.c.b16 %v1949, %v1941
    %v2342 = vpack.c.b16 %v1958, %v1950
    %v2343 = vpack.c.b16 %v1959, %v1951
    %v2344 = vpack.c.b16 %v1960, %v1952
    %v2345 = vpack.c.b16 %v1961, %v1953
    %v2346 = vpack.c.b16 %v1962, %v1954
    %v2347 = vpack.c.b16 %v1963, %v1955
    %v2348 = vpack.c.b16 %v1964, %v1956
    %v2349 = vpack.c.b16 %v1965, %v1957
    %v2350 = vpack.c.b16 %v1974, %v1966
    %v2351 = vpack.c.b16 %v1975, %v1967
    %v2352 = vpack.c.b16 %v1976, %v1968
    %v2353 = vpack.c.b16 %v1977, %v1969
    %v2354 = vpack.c.b16 %v1978, %v1970
    %v2355 = vpack.c.b16 %v1979, %v1971
    %v2356 = vpack.c.b16 %v1980, %v1972
    %v2357 = vpack.c.b16 %v1981, %v1973
    %v2358 = vpack.c.b16 %v1990, %v1982
    %v2359 = vpack.c.b16 %v1991, %v1983
    %v2360 = vpack.c.b16 %v1992, %v1984
    %v2361 = vpack.c.b16 %v1993, %v1985
    %v2362 = vpack.c.b16 %v1994, %v1986
    %v2363 = vpack.c.b16 %v1995, %v1987
    %v2364 = vpack.c.b16 %v1996, %v1988
    %v2365 = vpack.c.b16 %v1997, %v1989
    %v2366 = vpack.c.b16 %v2006, %v1998
    %v2367 = vpack.c.b16 %v2007, %v1999
    %v2368 = vpack.c.b16 %v2008, %v2000
    %v2369 = vpack.c.b16 %v2009, %v2001
    %v2370 = vpack.c.b16 %v2010, %v2002
    %v2371 = vpack.c.b16 %v2011, %v2003
    %v2372 = vpack.c.b16 %v2012, %v2004
    %v2373 = vpack.c.b16 %v2013, %v2005
    %v2374 = vpack.c.b16 %v2022, %v2014
    %v2375 = vpack.c.b16 %v2023, %v2015
    %v2376 = vpack.c.b16 %v2024, %v2016
    %v2377 = vpack.c.b16 %v2025, %v2017
    %v2378 = vpack.c.b16 %v2026, %v2018
    %v2379 = vpack.c.b16 %v2027, %v2019
    %v2380 = vpack.c.b16 %v2028, %v2020
    %v2381 = vpack.c.b16 %v2029, %v2021
    %v2382 = vpack.c.b16 %v2038, %v2030
    %v2383 = vpack.c.b16 %v2039, %v2031
    %v2384 = vpack.c.b16 %v2040, %v2032
    %v2385 = vpack.c.b16 %v2041, %v2033
    %v2386 = vpack.c.b16 %v2042, %v2034
    %v2387 = vpack.c.b16 %v2043, %v2035
    %v2388 = vpack.c.b16 %v2044, %v2036
    %v2389 = vpack.c.b16 %v2045, %v2037
    %v2390 = vpack.c.b16 %v2054, %v2046
    %v2391 = vpack.c.b16 %v2055, %v2047
    %v2392 = vpack.c.b16 %v2056, %v2048
    %v2393 = vpack.c.b16 %v2057, %v2049
    %v2394 = vpack.c.b16 %v2058, %v2050
    %v2395 = vpack.c.b16 %v2059, %v2051
    %v2396 = vpack.c.b16 %v2060, %v2052
    %v2397 = vpack.c.b16 %v2061, %v2053
    %v2398 = vpack.c.b16 %v2070, %v2062
    %v2399 = vpack.c.b16 %v2071, %v2063
    %v2400 = vpack.c.b16 %v2072, %v2064
    %v2401 = vpack.c.b16 %v2073, %v2065
    %v2402 = vpack.c.b16 %v2074, %v2066
    %v2403 = vpack.c.b16 %v2075, %v2067
    %v2404 = vpack.c.b16 %v2076, %v2068
    %v2405 = vpack.c.b16 %v2077, %v2069
    %v2406 = vpack.c.b16 %v2086, %v2078
    %v2407 = vpack.c.b16 %v2087, %v2079
    %v2408 = vpack.c.b16 %v2088, %v2080
    %v2409 = vpack.c.b16 %v2089, %v2081
    %v2410 = vpack.c.b16 %v2090, %v2082
    %v2411 = vpack.c.b16 %v2091, %v2083
    %v2412 = vpack.c.b16 %v2092, %v2084
    %v2413 = vpack.c.b16 %v2093, %v2085
    %v2414 = vpack.c.b16 %v2102, %v2094
    %v2415 = vpack.c.b16 %v2103, %v2095
    %v2416 = vpack.c.b16 %v2104, %v2096
    %v2417 = vpack.c.b16 %v2105, %v2097
    %v2418 = vpack.c.b16 %v2106, %v2098
    %v2419 = vpack.c.b16 %v2107, %v2099
    %v2420 = vpack.c.b16 %v2108, %v2100
    %v2421 = vpack.c.b16 %v2109, %v2101
    %v2422 = vpack.c.b16 %v2118, %v2110
    %v2423 = vpack.c.b16 %v2119, %v2111
    %v2424 = vpack.c.b16 %v2120, %v2112
    %v2425 = vpack.c.b16 %v2121, %v2113
    %v2426 = vpack.c.b16 %v2122, %v2114
    %v2427 = vpack.c.b16 %v2123, %v2115
    %v2428 = vpack.c.b16 %v2124, %v2116
    %v2429 = vpack.c.b16 %v2125, %v2117
    %v2430 = vpack.c.b16 %v2134, %v2126
    %v2431 = vpack.c.b16 %v2135, %v2127
    %v2432 = vpack.c.b16 %v2136, %v2128
    %v2433 = vpack.c.b16 %v2137, %v2129
    %v2434 = vpack.c.b16 %v2138, %v2130
    %v2435 = vpack.c.b16 %v2139, %v2131
    %v2436 = vpack.c.b16 %v2140, %v2132
    %v2437 = vpack.c.b16 %v2141, %v2133
    %v2438 = vpack.c.b16 %v2150, %v2142
    %v2439 = vpack.c.b16 %v2151, %v2143
    %v2440 = vpack.c.b16 %v2152, %v2144
    %v2441 = vpack.c.b16 %v2153, %v2145
    %v2442 = vpack.c.b16 %v2154, %v2146
    %v2443 = vpack.c.b16 %v2155, %v2147
    %v2444 = vpack.c.b16 %v2156, %v2148
    %v2445 = vpack.c.b16 %v2157, %v2149
    %v2446 = vpack.c.b16 %v2166, %v2158
    %v2447 = vpack.c.b16 %v2167, %v2159
    %v2448 = vpack.c.b16 %v2168, %v2160
    %v2449 = vpack.c.b16 %v2169, %v2161
    %v2450 = vpack.c.b16 %v2170, %v2162
    %v2451 = vpack.c.b16 %v2171, %v2163
    %v2452 = vpack.c.b16 %v2172, %v2164
    %v2453 = vpack.c.b16 %v2173, %v2165
    %v2454 = vpack.c.b16 %v2182, %v2174
    %v2455 = vpack.c.b16 %v2183, %v2175
    %v2456 = vpack.c.b16 %v2184, %v2176
    %v2457 = vpack.c.b16 %v2185, %v2177
    %v2458 = vpack.c.b16 %v2186, %v2178
    %v2459 = vpack.c.b16 %v2187, %v2179
    %v2460 = vpack.c.b16 %v2188, %v2180
    %v2461 = vpack.c.b16 %v2189, %v2181
    %v2462 = vpack.c.b16 %v2198, %v2190
    %v2463 = vpack.c.b16 %v2199, %v2191
    %v2464 = vpack.c.b16 %v2200, %v2192
    %v2465 = vpack.c.b16 %v2201, %v2193
    %v2466 = vpack.c.b16 %v2202, %v2194
    %v2467 = vpack.c.b16 %v2203, %v2195
    %v2468 = vpack.c.b16 %v2204, %v2196
    %v2469 = vpack.c.b16 %v2205, %v2197
    %v2470 = vpack.c.b16 %v2214, %v2206
    %v2471 = vpack.c.b16 %v2215, %v2207
    %v2472 = vpack.c.b16 %v2216, %v2208
    %v2473 = vpack.c.b16 %v2217, %v2209
    %v2474 = vpack.c.b16 %v2218, %v2210
    %v2475 = vpack.c.b16 %v2219, %v2211
    %v2476 = vpack.c.b16 %v2220, %v2212
    %v2477 = vpack.c.b16 %v2221, %v2213
    %2734 = vmatprep.subr.bf16.mxu0 %v2223
    %2735 = vmatpush1.bf16.msra.mxu0 %v2222
    %2736 = vmatprep.subr.bf16.mxu0 %v2231
    %2737 = vmatpush1.bf16.msra.mxu0 %v2230
    %2738 = vmatprep.subr.bf16.mxu0 %v2239
    %2739 = vmatpush1.bf16.msra.mxu0 %v2238
    %2740 = vmatprep.subr.bf16.mxu0 %v2247
    %2741 = vmatpush1.bf16.msra.mxu0 %v2246
    %2742 = vmatprep.subr.bf16.mxu0 %v2255
    %2743 = vmatpush1.bf16.msra.mxu0 %v2254
    %2744 = vmatprep.subr.bf16.mxu0 %v2263
    %2745 = vmatpush1.bf16.msra.mxu0 %v2262
    %2746 = vmatprep.subr.bf16.mxu0 %v2271
    %2747 = vmatpush1.bf16.msra.mxu0 %v2270
    %2748 = vmatprep.subr.bf16.mxu0 %v2279
    %2749 = vmatpush1.bf16.msra.mxu0 %v2278
    %2750 = vmatprep.subr.bf16.mxu0 %v2287
    %2751 = vmatpush1.bf16.msra.mxu0 %v2286
    %2752 = vmatprep.subr.bf16.mxu0 %v2295
    %2753 = vmatpush1.bf16.msra.mxu0 %v2294
    %2754 = vmatprep.subr.bf16.mxu0 %v2303
    %2755 = vmatpush1.bf16.msra.mxu0 %v2302
    %2756 = vmatprep.subr.bf16.mxu0 %v2311
    %2757 = vmatpush1.bf16.msra.mxu0 %v2310
    %2758 = vmatprep.subr.bf16.mxu0 %v2319
    %2759 = vmatpush1.bf16.msra.mxu0 %v2318
    %2760 = vmatprep.subr.bf16.mxu0 %v2327
    %2761 = vmatpush1.bf16.msra.mxu0 %v2326
    %2762 = vmatprep.subr.bf16.mxu0 %v2335
    %2763 = vmatpush1.bf16.msra.mxu0 %v2334
    %2764 = vmatprep.subr.bf16.mxu0 %v2343
    %2765 = vmatpush1.bf16.msra.mxu0 %v2342
    %2766 = vmatprep.mubr.bf16.mxu0 %v1125
    %2767 = vmatmul.mubr.bf16.gmra.mrb[0].mxu0 %v1124
    %v2768 = vpop.f32.mrb[0].mxu0
    %v2769 = vadd.f32 %v1417, %v2768
    %v2770 = vpop.f32.mrb[0].mxu0
    %v2771 = vadd.f32 %v1421, %v2770
    %v2772 = vpop.f32.mrb[0].mxu0
    %v2773 = vadd.f32 %v1417, %v2772
    %v2774 = vpop.f32.mrb[0].mxu0
    %v2775 = vadd.f32 %v1421, %v2774
    %2776 = vmatprep.mubr.bf16.mxu0 %v1129
    %2777 = vmatmul.mubr.bf16.gmra.mrb[0].mxu0 %v1128
    %v2778 = vpop.f32.mrb[0].mxu0
    %v2779 = vadd.f32 %v1417, %v2778
    %v2780 = vpop.f32.mrb[0].mxu0
    %v2781 = vadd.f32 %v1421, %v2780
    %v2782 = vpop.f32.mrb[0].mxu0
    %v2783 = vadd.f32 %v1417, %v2782
    %v2784 = vpop.f32.mrb[0].mxu0
    %v2785 = vadd.f32 %v1421, %v2784
    %2786 = vdwg.mxu0
    %2787 = vmatprep.subr.bf16.mxu0 %v2351
    %2788 = vmatpush1.bf16.msra.mxu0 %v2350
    %2789 = vmatprep.subr.bf16.mxu0 %v2359
    %2790 = vmatpush1.bf16.msra.mxu0 %v2358
    %2791 = vmatprep.subr.bf16.mxu0 %v2367
    %2792 = vmatpush1.bf16.msra.mxu0 %v2366
    %2793 = vmatprep.subr.bf16.mxu0 %v2375
    %2794 = vmatpush1.bf16.msra.mxu0 %v2374
    %2795 = vmatprep.subr.bf16.mxu0 %v2383
    %2796 = vmatpush1.bf16.msra.mxu0 %v2382
    %2797 = vmatprep.subr.bf16.mxu0 %v2391
    %2798 = vmatpush1.bf16.msra.mxu0 %v2390
    %2799 = vmatprep.subr.bf16.mxu0 %v2399
    %2800 = vmatpush1.bf16.msra.mxu0 %v2398
    %2801 = vmatprep.subr.bf16.mxu0 %v2407
    %2802 = vmatpush1.bf16.msra.mxu0 %v2406
    %2803 = vmatprep.subr.bf16.mxu0 %v2415
    %2804 = vmatpush1.bf16.msra.mxu0 %v2414
    %2805 = vmatprep.subr.bf16.mxu0 %v2423
    %2806 = vmatpush1.bf16.msra.mxu0 %v2422
    %2807 = vmatprep.subr.bf16.mxu0 %v2431
    %2808 = vmatpush1.bf16.msra.mxu0 %v2430
    %2809 = vmatprep.subr.bf16.mxu0 %v2439
    %2810 = vmatpush1.bf16.msra.mxu0 %v2438
    %2811 = vmatprep.subr.bf16.mxu0 %v2447
    %2812 = vmatpush1.bf16.msra.mxu0 %v2446
    %2813 = vmatprep.subr.bf16.mxu0 %v2455
    %2814 = vmatpush1.bf16.msra.mxu0 %v2454
    %2815 = vmatprep.subr.bf16.mxu0 %v2463
    %2816 = vmatpush1.bf16.msra.mxu0 %v2462
    %2817 = vmatprep.subr.bf16.mxu0 %v2471
    %2818 = vmatpush1.bf16.msra.mxu0 %v2470
    %2819 = vmatprep.mubr.bf16.mxu0 %v1127
    %2820 = vmatmul.mubr.bf16.gmra.mrb[0].mxu0 %v1126
    %v2821 = vpop.f32.mrb[0].mxu0
    %v2822 = vadd.f32 %v2769, %v2821
    %v2823 = vpop.f32.mrb[0].mxu0
    %v2824 = vadd.f32 %v2771, %v2823
    %v2825 = vpop.f32.mrb[0].mxu0
    %v2826 = vadd.f32 %v2773, %v2825
    %v2827 = vpop.f32.mrb[0].mxu0
    %v2828 = vadd.f32 %v2775, %v2827
    %2829 = vmatprep.mubr.bf16.mxu0 %v1131
    %2830 = vmatmul.mubr.bf16.gmra.mrb[0].mxu0 %v1130
    %v2831 = vpop.f32.mrb[0].mxu0
    %v2832 = vadd.f32 %v2779, %v2831
    %v2833 = vpop.f32.mrb[0].mxu0
    %v2834 = vadd.f32 %v2781, %v2833
    %v2835 = vpop.f32.mrb[0].mxu0
    %v2836 = vadd.f32 %v2783, %v2835
    %v2837 = vpop.f32.mrb[0].mxu0
    %v2838 = vadd.f32 %v2785, %v2837
    %2839 = vdwg.mxu0
    %2840 = vmatprep.subr.bf16.mxu0 %v2225
    %2841 = vmatpush1.bf16.msra.mxu0 %v2224
    %2842 = vmatprep.subr.bf16.mxu0 %v2233
    %2843 = vmatpush1.bf16.msra.mxu0 %v2232
    %2844 = vmatprep.subr.bf16.mxu0 %v2241
    %2845 = vmatpush1.bf16.msra.mxu0 %v2240
    %2846 = vmatprep.subr.bf16.mxu0 %v2249
    %2847 = vmatpush1.bf16.msra.mxu0 %v2248
    %2848 = vmatprep.subr.bf16.mxu0 %v2257
    %2849 = vmatpush1.bf16.msra.mxu0 %v2256
    %2850 = vmatprep.subr.bf16.mxu0 %v2265
    %2851 = vmatpush1.bf16.msra.mxu0 %v2264
    %2852 = vmatprep.subr.bf16.mxu0 %v2273
    %2853 = vmatpush1.bf16.msra.mxu0 %v2272
    %2854 = vmatprep.subr.bf16.mxu0 %v2281
    %2855 = vmatpush1.bf16.msra.mxu0 %v2280
    %2856 = vmatprep.subr.bf16.mxu0 %v2289
    %2857 = vmatpush1.bf16.msra.mxu0 %v2288
    %2858 = vmatprep.subr.bf16.mxu0 %v2297
    %2859 = vmatpush1.bf16.msra.mxu0 %v2296
    %2860 = vmatprep.subr.bf16.mxu0 %v2305
    %2861 = vmatpush1.bf16.msra.mxu0 %v2304
    %2862 = vmatprep.subr.bf16.mxu0 %v2313
    %2863 = vmatpush1.bf16.msra.mxu0 %v2312
    %2864 = vmatprep.subr.bf16.mxu0 %v2321
    %2865 = vmatpush1.bf16.msra.mxu0 %v2320
    %2866 = vmatprep.subr.bf16.mxu0 %v2329
    %2867 = vmatpush1.bf16.msra.mxu0 %v2328
    %2868 = vmatprep.subr.bf16.mxu0 %v2337
    %2869 = vmatpush1.bf16.msra.mxu0 %v2336
    %2870 = vmatprep.subr.bf16.mxu0 %v2345
    %2871 = vmatpush1.bf16.msra.mxu0 %v2344
    %2872 = vmatprep.mubr.bf16.mxu0 %v1125
    %2873 = vmatmul.mubr.bf16.gmra.mrb[0].mxu0 %v1124
    %v2874 = vpop.f32.mrb[0].mxu0
    %v2875 = vadd.f32 %v1425, %v2874
    %v2876 = vpop.f32.mrb[0].mxu0
    %v2877 = vadd.f32 %v1429, %v2876
    %v2878 = vpop.f32.mrb[0].mxu0
    %v2879 = vadd.f32 %v1425, %v2878
    %v2880 = vpop.f32.mrb[0].mxu0
    %v2881 = vadd.f32 %v1429, %v2880
    %2882 = vmatprep.mubr.bf16.mxu0 %v1129
    %2883 = vmatmul.mubr.bf16.gmra.mrb[0].mxu0 %v1128
    %v2884 = vpop.f32.mrb[0].mxu0
    %v2885 = vadd.f32 %v1425, %v2884
    %v2886 = vpop.f32.mrb[0].mxu0
    %v2887 = vadd.f32 %v1429, %v2886
    %v2888 = vpop.f32.mrb[0].mxu0
    %v2889 = vadd.f32 %v1425, %v2888
    %v2890 = vpop.f32.mrb[0].mxu0
    %v2891 = vadd.f32 %v1429, %v2890
    %2892 = vdwg.mxu0
    %2893 = vmatprep.subr.bf16.mxu0 %v2353
    %2894 = vmatpush1.bf16.msra.mxu0 %v2352
    %2895 = vmatprep.subr.bf16.mxu0 %v2361
    %2896 = vmatpush1.bf16.msra.mxu0 %v2360
    %2897 = vmatprep.subr.bf16.mxu0 %v2369
    %2898 = vmatpush1.bf16.msra.mxu0 %v2368
    %2899 = vmatprep.subr.bf16.mxu0 %v2377
    %2900 = vmatpush1.bf16.msra.mxu0 %v2376
    %2901 = vmatprep.subr.bf16.mxu0 %v2385
    %2902 = vmatpush1.bf16.msra.mxu0 %v2384
    %2903 = vmatprep.subr.bf16.mxu0 %v2393
    %2904 = vmatpush1.bf16.msra.mxu0 %v2392
    %2905 = vmatprep.subr.bf16.mxu0 %v2401
    %2906 = vmatpush1.bf16.msra.mxu0 %v2400
    %2907 = vmatprep.subr.bf16.mxu0 %v2409
    %2908 = vmatpush1.bf16.msra.mxu0 %v2408
    %2909 = vmatprep.subr.bf16.mxu0 %v2417
    %2910 = vmatpush1.bf16.msra.mxu0 %v2416
    %2911 = vmatprep.subr.bf16.mxu0 %v2425
    %2912 = vmatpush1.bf16.msra.mxu0 %v2424
    %2913 = vmatprep.subr.bf16.mxu0 %v2433
    %2914 = vmatpush1.bf16.msra.mxu0 %v2432
    %2915 = vmatprep.subr.bf16.mxu0 %v2441
    %2916 = vmatpush1.bf16.msra.mxu0 %v2440
    %2917 = vmatprep.subr.bf16.mxu0 %v2449
    %2918 = vmatpush1.bf16.msra.mxu0 %v2448
    %2919 = vmatprep.subr.bf16.mxu0 %v2457
    %2920 = vmatpush1.bf16.msra.mxu0 %v2456
    %2921 = vmatprep.subr.bf16.mxu0 %v2465
    %2922 = vmatpush1.bf16.msra.mxu0 %v2464
    %2923 = vmatprep.subr.bf16.mxu0 %v2473
    %2924 = vmatpush1.bf16.msra.mxu0 %v2472
    %2925 = vmatprep.mubr.bf16.mxu0 %v1127
    %2926 = vmatmul.mubr.bf16.gmra.mrb[0].mxu0 %v1126
    %v2927 = vpop.f32.mrb[0].mxu0
    %v2928 = vadd.f32 %v2875, %v2927
    %v2929 = vpop.f32.mrb[0].mxu0
    %v2930 = vadd.f32 %v2877, %v2929
    %v2931 = vpop.f32.mrb[0].mxu0
    %v2932 = vadd.f32 %v2879, %v2931
    %v2933 = vpop.f32.mrb[0].mxu0
    %v2934 = vadd.f32 %v2881, %v2933
    %2935 = vmatprep.mubr.bf16.mxu0 %v1131
    %2936 = vmatmul.mubr.bf16.gmra.mrb[0].mxu0 %v1130
    %v2937 = vpop.f32.mrb[0].mxu0
    %v2938 = vadd.f32 %v2885, %v2937
    %v2939 = vpop.f32.mrb[0].mxu0
    %v2940 = vadd.f32 %v2887, %v2939
    %v2941 = vpop.f32.mrb[0].mxu0
    %v2942 = vadd.f32 %v2889, %v2941
    %v2943 = vpop.f32.mrb[0].mxu0
    %v2944 = vadd.f32 %v2891, %v2943
    %2945 = vdwg.mxu0
    %2946 = vmatprep.subr.bf16.mxu0 %v2227
    %2947 = vmatpush1.bf16.msra.mxu0 %v2226
    %2948 = vmatprep.subr.bf16.mxu0 %v2235
    %2949 = vmatpush1.bf16.msra.mxu0 %v2234
    %2950 = vmatprep.subr.bf16.mxu0 %v2243
    %2951 = vmatpush1.bf16.msra.mxu0 %v2242
    %2952 = vmatprep.subr.bf16.mxu0 %v2251
    %2953 = vmatpush1.bf16.msra.mxu0 %v2250
    %2954 = vmatprep.subr.bf16.mxu0 %v2259
    %2955 = vmatpush1.bf16.msra.mxu0 %v2258
    %2956 = vmatprep.subr.bf16.mxu0 %v2267
    %2957 = vmatpush1.bf16.msra.mxu0 %v2266
    %2958 = vmatprep.subr.bf16.mxu0 %v2275
    %2959 = vmatpush1.bf16.msra.mxu0 %v2274
    %2960 = vmatprep.subr.bf16.mxu0 %v2283
    %2961 = vmatpush1.bf16.msra.mxu0 %v2282
    %2962 = vmatprep.subr.bf16.mxu0 %v2291
    %2963 = vmatpush1.bf16.msra.mxu0 %v2290
    %2964 = vmatprep.subr.bf16.mxu0 %v2299
    %2965 = vmatpush1.bf16.msra.mxu0 %v2298
    %2966 = vmatprep.subr.bf16.mxu0 %v2307
    %2967 = vmatpush1.bf16.msra.mxu0 %v2306
    %2968 = vmatprep.subr.bf16.mxu0 %v2315
    %2969 = vmatpush1.bf16.msra.mxu0 %v2314
    %2970 = vmatprep.subr.bf16.mxu0 %v2323
    %2971 = vmatpush1.bf16.msra.mxu0 %v2322
    %2972 = vmatprep.subr.bf16.mxu0 %v2331
    %2973 = vmatpush1.bf16.msra.mxu0 %v2330
    %2974 = vmatprep.subr.bf16.mxu0 %v2339
    %2975 = vmatpush1.bf16.msra.mxu0 %v2338
    %2976 = vmatprep.subr.bf16.mxu0 %v2347
    %2977 = vmatpush1.bf16.msra.mxu0 %v2346
    %2978 = vmatprep.mubr.bf16.mxu0 %v1125
    %2979 = vmatmul.mubr.bf16.gmra.mrb[0].mxu0 %v1124
    %v2980 = vpop.f32.mrb[0].mxu0
    %v2981 = vadd.f32 %v1433, %v2980
    %v2982 = vpop.f32.mrb[0].mxu0
    %v2983 = vadd.f32 %v1437, %v2982
    %v2984 = vpop.f32.mrb[0].mxu0
    %v2985 = vadd.f32 %v1433, %v2984
    %v2986 = vpop.f32.mrb[0].mxu0
    %v2987 = vadd.f32 %v1437, %v2986
    %2988 = vmatprep.mubr.bf16.mxu0 %v1129
    %2989 = vmatmul.mubr.bf16.gmra.mrb[0].mxu0 %v1128
    %v2990 = vpop.f32.mrb[0].mxu0
    %v2991 = vadd.f32 %v1433, %v2990
    %v2992 = vpop.f32.mrb[0].mxu0
    %v2993 = vadd.f32 %v1437, %v2992
    %v2994 = vpop.f32.mrb[0].mxu0
    %v2995 = vadd.f32 %v1433, %v2994
    %v2996 = vpop.f32.mrb[0].mxu0
    %v2997 = vadd.f32 %v1437, %v2996
    %2998 = vdwg.mxu0
    %2999 = vmatprep.subr.bf16.mxu0 %v2355
    %3000 = vmatpush1.bf16.msra.mxu0 %v2354
    %3001 = vmatprep.subr.bf16.mxu0 %v2363
    %3002 = vmatpush1.bf16.msra.mxu0 %v2362
    %3003 = vmatprep.subr.bf16.mxu0 %v2371
    %3004 = vmatpush1.bf16.msra.mxu0 %v2370
    %3005 = vmatprep.subr.bf16.mxu0 %v2379
    %3006 = vmatpush1.bf16.msra.mxu0 %v2378
    %3007 = vmatprep.subr.bf16.mxu0 %v2387
    %3008 = vmatpush1.bf16.msra.mxu0 %v2386
    %3009 = vmatprep.subr.bf16.mxu0 %v2395
    %3010 = vmatpush1.bf16.msra.mxu0 %v2394
    %3011 = vmatprep.subr.bf16.mxu0 %v2403
    %3012 = vmatpush1.bf16.msra.mxu0 %v2402
    %3013 = vmatprep.subr.bf16.mxu0 %v2411
    %3014 = vmatpush1.bf16.msra.mxu0 %v2410
    %3015 = vmatprep.subr.bf16.mxu0 %v2419
    %3016 = vmatpush1.bf16.msra.mxu0 %v2418
    %3017 = vmatprep.subr.bf16.mxu0 %v2427
    %3018 = vmatpush1.bf16.msra.mxu0 %v2426
    %3019 = vmatprep.subr.bf16.mxu0 %v2435
    %3020 = vmatpush1.bf16.msra.mxu0 %v2434
    %3021 = vmatprep.subr.bf16.mxu0 %v2443
    %3022 = vmatpush1.bf16.msra.mxu0 %v2442
    %3023 = vmatprep.subr.bf16.mxu0 %v2451
    %3024 = vmatpush1.bf16.msra.mxu0 %v2450
    %3025 = vmatprep.subr.bf16.mxu0 %v2459
    %3026 = vmatpush1.bf16.msra.mxu0 %v2458
    %3027 = vmatprep.subr.bf16.mxu0 %v2467
    %3028 = vmatpush1.bf16.msra.mxu0 %v2466
    %3029 = vmatprep.subr.bf16.mxu0 %v2475
    %3030 = vmatpush1.bf16.msra.mxu0 %v2474
    %3031 = vmatprep.mubr.bf16.mxu0 %v1127
    %3032 = vmatmul.mubr.bf16.gmra.mrb[0].mxu0 %v1126
    %v3033 = vpop.f32.mrb[0].mxu0
    %v3034 = vadd.f32 %v2981, %v3033
    %v3035 = vpop.f32.mrb[0].mxu0
    %v3036 = vadd.f32 %v2983, %v3035
    %v3037 = vpop.f32.mrb[0].mxu0
    %v3038 = vadd.f32 %v2985, %v3037
    %v3039 = vpop.f32.mrb[0].mxu0
    %v3040 = vadd.f32 %v2987, %v3039
    %3041 = vmatprep.mubr.bf16.mxu0 %v1131
    %3042 = vmatmul.mubr.bf16.gmra.mrb[0].mxu0 %v1130
    %v3043 = vpop.f32.mrb[0].mxu0
    %v3044 = vadd.f32 %v2991, %v3043
    %v3045 = vpop.f32.mrb[0].mxu0
    %v3046 = vadd.f32 %v2993, %v3045
    %v3047 = vpop.f32.mrb[0].mxu0
    %v3048 = vadd.f32 %v2995, %v3047
    %v3049 = vpop.f32.mrb[0].mxu0
    %v3050 = vadd.f32 %v2997, %v3049
    %3051 = vdwg.mxu0
    %3052 = vmatprep.subr.bf16.mxu0 %v2229
    %3053 = vmatpush1.bf16.msra.mxu0 %v2228
    %3054 = vmatprep.subr.bf16.mxu0 %v2237
    %3055 = vmatpush1.bf16.msra.mxu0 %v2236
    %3056 = vmatprep.subr.bf16.mxu0 %v2245
    %3057 = vmatpush1.bf16.msra.mxu0 %v2244
    %3058 = vmatprep.subr.bf16.mxu0 %v2253
    %3059 = vmatpush1.bf16.msra.mxu0 %v2252
    %3060 = vmatprep.subr.bf16.mxu0 %v2261
    %3061 = vmatpush1.bf16.msra.mxu0 %v2260
    %3062 = vmatprep.subr.bf16.mxu0 %v2269
    %3063 = vmatpush1.bf16.msra.mxu0 %v2268
    %3064 = vmatprep.subr.bf16.mxu0 %v2277
    %3065 = vmatpush1.bf16.msra.mxu0 %v2276
    %3066 = vmatprep.subr.bf16.mxu0 %v2285
    %3067 = vmatpush1.bf16.msra.mxu0 %v2284
    %3068 = vmatprep.subr.bf16.mxu0 %v2293
    %3069 = vmatpush1.bf16.msra.mxu0 %v2292
    %3070 = vmatprep.subr.bf16.mxu0 %v2301
    %3071 = vmatpush1.bf16.msra.mxu0 %v2300
    %3072 = vmatprep.subr.bf16.mxu0 %v2309
    %3073 = vmatpush1.bf16.msra.mxu0 %v2308
    %3074 = vmatprep.subr.bf16.mxu0 %v2317
    %3075 = vmatpush1.bf16.msra.mxu0 %v2316
    %3076 = vmatprep.subr.bf16.mxu0 %v2325
    %3077 = vmatpush1.bf16.msra.mxu0 %v2324
    %3078 = vmatprep.subr.bf16.mxu0 %v2333
    %3079 = vmatpush1.bf16.msra.mxu0 %v2332
    %3080 = vmatprep.subr.bf16.mxu0 %v2341
    %3081 = vmatpush1.bf16.msra.mxu0 %v2340
    %3082 = vmatprep.subr.bf16.mxu0 %v2349
    %3083 = vmatpush1.bf16.msra.mxu0 %v2348
    %3084 = vmatprep.mubr.bf16.mxu0 %v1125
    %3085 = vmatmul.mubr.bf16.gmra.mrb[0].mxu0 %v1124
    %v3086 = vpop.f32.mrb[0].mxu0
    %v3087 = vadd.f32 %v1441, %v3086
    %v3088 = vpop.f32.mrb[0].mxu0
    %v3089 = vadd.f32 %v1445, %v3088
    %v3090 = vpop.f32.mrb[0].mxu0
    %v3091 = vadd.f32 %v1441, %v3090
    %v3092 = vpop.f32.mrb[0].mxu0
    %v3093 = vadd.f32 %v1445, %v3092
    %3094 = vmatprep.mubr.bf16.mxu0 %v1129
    %3095 = vmatmul.mubr.bf16.gmra.mrb[0].mxu0 %v1128
    %v3096 = vpop.f32.mrb[0].mxu0
    %v3097 = vadd.f32 %v1441, %v3096
    %v3098 = vpop.f32.mrb[0].mxu0
    %v3099 = vadd.f32 %v1445, %v3098
    %v3100 = vpop.f32.mrb[0].mxu0
    %v3101 = vadd.f32 %v1441, %v3100
    %v3102 = vpop.f32.mrb[0].mxu0
    %v3103 = vadd.f32 %v1445, %v3102
    %3104 = vdwg.mxu0
    %3105 = vmatprep.subr.bf16.mxu0 %v2357
    %3106 = vmatpush1.bf16.msra.mxu0 %v2356
    %3107 = vmatprep.subr.bf16.mxu0 %v2365
    %3108 = vmatpush1.bf16.msra.mxu0 %v2364
    %3109 = vmatprep.subr.bf16.mxu0 %v2373
    %3110 = vmatpush1.bf16.msra.mxu0 %v2372
    %3111 = vmatprep.subr.bf16.mxu0 %v2381
    %3112 = vmatpush1.bf16.msra.mxu0 %v2380
    %3113 = vmatprep.subr.bf16.mxu0 %v2389
    %3114 = vmatpush1.bf16.msra.mxu0 %v2388
    %3115 = vmatprep.subr.bf16.mxu0 %v2397
    %3116 = vmatpush1.bf16.msra.mxu0 %v2396
    %3117 = vmatprep.subr.bf16.mxu0 %v2405
    %3118 = vmatpush1.bf16.msra.mxu0 %v2404
    %3119 = vmatprep.subr.bf16.mxu0 %v2413
    %3120 = vmatpush1.bf16.msra.mxu0 %v2412
    %3121 = vmatprep.subr.bf16.mxu0 %v2421
    %3122 = vmatpush1.bf16.msra.mxu0 %v2420
    %3123 = vmatprep.subr.bf16.mxu0 %v2429
    %3124 = vmatpush1.bf16.msra.mxu0 %v2428
    %3125 = vmatprep.subr.bf16.mxu0 %v2437
    %3126 = vmatpush1.bf16.msra.mxu0 %v2436
    %3127 = vmatprep.subr.bf16.mxu0 %v2445
    %3128 = vmatpush1.bf16.msra.mxu0 %v2444
    %3129 = vmatprep.subr.bf16.mxu0 %v2453
    %3130 = vmatpush1.bf16.msra.mxu0 %v2452
    %3131 = vmatprep.subr.bf16.mxu0 %v2461
    %3132 = vmatpush1.bf16.msra.mxu0 %v2460
    %3133 = vmatprep.subr.bf16.mxu0 %v2469
    %3134 = vmatpush1.bf16.msra.mxu0 %v2468
    %3135 = vmatprep.subr.bf16.mxu0 %v2477
    %3136 = vmatpush1.bf16.msra.mxu0 %v2476
    %3137 = vmatprep.mubr.bf16.mxu0 %v1127
    %3138 = vmatmul.mubr.bf16.gmra.mrb[0].mxu0 %v1126
    %v3139 = vpop.f32.mrb[0].mxu0
    %v3140 = vadd.f32 %v3087, %v3139
    %v3141 = vpop.f32.mrb[0].mxu0
    %v3142 = vadd.f32 %v3089, %v3141
    %v3143 = vpop.f32.mrb[0].mxu0
    %v3144 = vadd.f32 %v3091, %v3143
    %v3145 = vpop.f32.mrb[0].mxu0
    %v3146 = vadd.f32 %v3093, %v3145
    %3147 = vmatprep.mubr.bf16.mxu0 %v1131
    %3148 = vmatmul.mubr.bf16.gmra.mrb[0].mxu0 %v1130
    %v3149 = vpop.f32.mrb[0].mxu0
    %v3150 = vadd.f32 %v3097, %v3149
    %v3151 = vpop.f32.mrb[0].mxu0
    %v3152 = vadd.f32 %v3099, %v3151
    %v3153 = vpop.f32.mrb[0].mxu0
    %v3154 = vadd.f32 %v3101, %v3153
    %v3155 = vpop.f32.mrb[0].mxu0
    %v3156 = vadd.f32 %v3103, %v3155
    %3157 = vdwg.mxu0
    %3158 = vmatprep.subr.bf16.mxu0 %v2223
    %3159 = vmatpush1.bf16.msra.mxu0 %v2222
    %3160 = vmatprep.subr.bf16.mxu0 %v2231
    %3161 = vmatpush1.bf16.msra.mxu0 %v2230
    %3162 = vmatprep.subr.bf16.mxu0 %v2239
    %3163 = vmatpush1.bf16.msra.mxu0 %v2238
    %3164 = vmatprep.subr.bf16.mxu0 %v2247
    %3165 = vmatpush1.bf16.msra.mxu0 %v2246
    %3166 = vmatprep.subr.bf16.mxu0 %v2255
    %3167 = vmatpush1.bf16.msra.mxu0 %v2254
    %3168 = vmatprep.subr.bf16.mxu0 %v2263
    %3169 = vmatpush1.bf16.msra.mxu0 %v2262
    %3170 = vmatprep.subr.bf16.mxu0 %v2271
    %3171 = vmatpush1.bf16.msra.mxu0 %v2270
    %3172 = vmatprep.subr.bf16.mxu0 %v2279
    %3173 = vmatpush1.bf16.msra.mxu0 %v2278
    %3174 = vmatprep.subr.bf16.mxu0 %v2287
    %3175 = vmatpush1.bf16.msra.mxu0 %v2286
    %3176 = vmatprep.subr.bf16.mxu0 %v2295
    %3177 = vmatpush1.bf16.msra.mxu0 %v2294
    %3178 = vmatprep.subr.bf16.mxu0 %v2303
    %3179 = vmatpush1.bf16.msra.mxu0 %v2302
    %3180 = vmatprep.subr.bf16.mxu0 %v2311
    %3181 = vmatpush1.bf16.msra.mxu0 %v2310
    %3182 = vmatprep.subr.bf16.mxu0 %v2319
    %3183 = vmatpush1.bf16.msra.mxu0 %v2318
    %3184 = vmatprep.subr.bf16.mxu0 %v2327
    %3185 = vmatpush1.bf16.msra.mxu0 %v2326
    %3186 = vmatprep.subr.bf16.mxu0 %v2335
    %3187 = vmatpush1.bf16.msra.mxu0 %v2334
    %3188 = vmatprep.subr.bf16.mxu0 %v2343
    %3189 = vmatpush1.bf16.msra.mxu0 %v2342
    %3190 = vmatprep.mubr.bf16.mxu0 %v1149
    %3191 = vmatmul.mubr.bf16.gmra.mrb[0].mxu0 %v1148
    %v3192 = vpop.f32.mrb[0].mxu0
    %v3193 = vadd.f32 %v1417, %v3192
    %v3194 = vpop.f32.mrb[0].mxu0
    %v3195 = vadd.f32 %v1421, %v3194
    %v3196 = vpop.f32.mrb[0].mxu0
    %v3197 = vadd.f32 %v1417, %v3196
    %v3198 = vpop.f32.mrb[0].mxu0
    %v3199 = vadd.f32 %v1421, %v3198
    %3200 = vmatprep.mubr.bf16.mxu0 %v1153
    %3201 = vmatmul.mubr.bf16.gmra.mrb[0].mxu0 %v1152
    %v3202 = vpop.f32.mrb[0].mxu0
    %v3203 = vadd.f32 %v1417, %v3202
    %v3204 = vpop.f32.mrb[0].mxu0
    %v3205 = vadd.f32 %v1421, %v3204
    %v3206 = vpop.f32.mrb[0].mxu0
    %v3207 = vadd.f32 %v1417, %v3206
    %v3208 = vpop.f32.mrb[0].mxu0
    %v3209 = vadd.f32 %v1421, %v3208
    %3210 = vdwg.mxu0
    %3211 = vmatprep.subr.bf16.mxu0 %v2351
    %3212 = vmatpush1.bf16.msra.mxu0 %v2350
    %3213 = vmatprep.subr.bf16.mxu0 %v2359
    %3214 = vmatpush1.bf16.msra.mxu0 %v2358
    %3215 = vmatprep.subr.bf16.mxu0 %v2367
    %3216 = vmatpush1.bf16.msra.mxu0 %v2366
    %3217 = vmatprep.subr.bf16.mxu0 %v2375
    %3218 = vmatpush1.bf16.msra.mxu0 %v2374
    %3219 = vmatprep.subr.bf16.mxu0 %v2383
    %3220 = vmatpush1.bf16.msra.mxu0 %v2382
    %3221 = vmatprep.subr.bf16.mxu0 %v2391
    %3222 = vmatpush1.bf16.msra.mxu0 %v2390
    %3223 = vmatprep.subr.bf16.mxu0 %v2399
    %3224 = vmatpush1.bf16.msra.mxu0 %v2398
    %3225 = vmatprep.subr.bf16.mxu0 %v2407
    %3226 = vmatpush1.bf16.msra.mxu0 %v2406
    %3227 = vmatprep.subr.bf16.mxu0 %v2415
    %3228 = vmatpush1.bf16.msra.mxu0 %v2414
    %3229 = vmatprep.subr.bf16.mxu0 %v2423
    %3230 = vmatpush1.bf16.msra.mxu0 %v2422
    %3231 = vmatprep.subr.bf16.mxu0 %v2431
    %3232 = vmatpush1.bf16.msra.mxu0 %v2430
    %3233 = vmatprep.subr.bf16.mxu0 %v2439
    %3234 = vmatpush1.bf16.msra.mxu0 %v2438
    %3235 = vmatprep.subr.bf16.mxu0 %v2447
    %3236 = vmatpush1.bf16.msra.mxu0 %v2446
    %3237 = vmatprep.subr.bf16.mxu0 %v2455
    %3238 = vmatpush1.bf16.msra.mxu0 %v2454
    %3239 = vmatprep.subr.bf16.mxu0 %v2463
    %3240 = vmatpush1.bf16.msra.mxu0 %v2462
    %3241 = vmatprep.subr.bf16.mxu0 %v2471
    %3242 = vmatpush1.bf16.msra.mxu0 %v2470
    %3243 = vmatprep.mubr.bf16.mxu0 %v1151
    %3244 = vmatmul.mubr.bf16.gmra.mrb[0].mxu0 %v1150
    %v3245 = vpop.f32.mrb[0].mxu0
    %v3246 = vadd.f32 %v3193, %v3245
    %v3247 = vpop.f32.mrb[0].mxu0
    %v3248 = vadd.f32 %v3195, %v3247
    %v3249 = vpop.f32.mrb[0].mxu0
    %v3250 = vadd.f32 %v3197, %v3249
    %v3251 = vpop.f32.mrb[0].mxu0
    %v3252 = vadd.f32 %v3199, %v3251
    %3253 = vmatprep.mubr.bf16.mxu0 %v1155
    %3254 = vmatmul.mubr.bf16.gmra.mrb[0].mxu0 %v1154
    %v3255 = vpop.f32.mrb[0].mxu0
    %v3256 = vadd.f32 %v3203, %v3255
    %v3257 = vpop.f32.mrb[0].mxu0
    %v3258 = vadd.f32 %v3205, %v3257
    %v3259 = vpop.f32.mrb[0].mxu0
    %v3260 = vadd.f32 %v3207, %v3259
    %v3261 = vpop.f32.mrb[0].mxu0
    %v3262 = vadd.f32 %v3209, %v3261
    %3263 = vdwg.mxu0
    %3264 = vmatprep.subr.bf16.mxu0 %v2225
    %3265 = vmatpush1.bf16.msra.mxu0 %v2224
    %3266 = vmatprep.subr.bf16.mxu0 %v2233
    %3267 = vmatpush1.bf16.msra.mxu0 %v2232
    %3268 = vmatprep.subr.bf16.mxu0 %v2241
    %3269 = vmatpush1.bf16.msra.mxu0 %v2240
    %3270 = vmatprep.subr.bf16.mxu0 %v2249
    %3271 = vmatpush1.bf16.msra.mxu0 %v2248
    %3272 = vmatprep.subr.bf16.mxu0 %v2257
    %3273 = vmatpush1.bf16.msra.mxu0 %v2256
    %3274 = vmatprep.subr.bf16.mxu0 %v2265
    %3275 = vmatpush1.bf16.msra.mxu0 %v2264
    %3276 = vmatprep.subr.bf16.mxu0 %v2273
    %3277 = vmatpush1.bf16.msra.mxu0 %v2272
    %3278 = vmatprep.subr.bf16.mxu0 %v2281
    %3279 = vmatpush1.bf16.msra.mxu0 %v2280
    %3280 = vmatprep.subr.bf16.mxu0 %v2289
    %3281 = vmatpush1.bf16.msra.mxu0 %v2288
    %3282 = vmatprep.subr.bf16.mxu0 %v2297
    %3283 = vmatpush1.bf16.msra.mxu0 %v2296
    %3284 = vmatprep.subr.bf16.mxu0 %v2305
    %3285 = vmatpush1.bf16.msra.mxu0 %v2304
    %3286 = vmatprep.subr.bf16.mxu0 %v2313
    %3287 = vmatpush1.bf16.msra.mxu0 %v2312
    %3288 = vmatprep.subr.bf16.mxu0 %v2321
    %3289 = vmatpush1.bf16.msra.mxu0 %v2320
    %3290 = vmatprep.subr.bf16.mxu0 %v2329
    %3291 = vmatpush1.bf16.msra.mxu0 %v2328
    %3292 = vmatprep.subr.bf16.mxu0 %v2337
    %3293 = vmatpush1.bf16.msra.mxu0 %v2336
    %3294 = vmatprep.subr.bf16.mxu0 %v2345
    %3295 = vmatpush1.bf16.msra.mxu0 %v2344
    %3296 = vmatprep.mubr.bf16.mxu0 %v1149
    %3297 = vmatmul.mubr.bf16.gmra.mrb[0].mxu0 %v1148
    %v3298 = vpop.f32.mrb[0].mxu0
    %v3299 = vadd.f32 %v1425, %v3298
    %v3300 = vpop.f32.mrb[0].mxu0
    %v3301 = vadd.f32 %v1429, %v3300
    %v3302 = vpop.f32.mrb[0].mxu0
    %v3303 = vadd.f32 %v1425, %v3302
    %v3304 = vpop.f32.mrb[0].mxu0
    %v3305 = vadd.f32 %v1429, %v3304
    %3306 = vmatprep.mubr.bf16.mxu0 %v1153
    %3307 = vmatmul.mubr.bf16.gmra.mrb[0].mxu0 %v1152
    %v3308 = vpop.f32.mrb[0].mxu0
    %v3309 = vadd.f32 %v1425, %v3308
    %v3310 = vpop.f32.mrb[0].mxu0
    %v3311 = vadd.f32 %v1429, %v3310
    %v3312 = vpop.f32.mrb[0].mxu0
    %v3313 = vadd.f32 %v1425, %v3312
    %v3314 = vpop.f32.mrb[0].mxu0
    %v3315 = vadd.f32 %v1429, %v3314
    %3316 = vdwg.mxu0
    %3317 = vmatprep.subr.bf16.mxu0 %v2353
    %3318 = vmatpush1.bf16.msra.mxu0 %v2352
    %3319 = vmatprep.subr.bf16.mxu0 %v2361
    %3320 = vmatpush1.bf16.msra.mxu0 %v2360
    %3321 = vmatprep.subr.bf16.mxu0 %v2369
    %3322 = vmatpush1.bf16.msra.mxu0 %v2368
    %3323 = vmatprep.subr.bf16.mxu0 %v2377
    %3324 = vmatpush1.bf16.msra.mxu0 %v2376
    %3325 = vmatprep.subr.bf16.mxu0 %v2385
    %3326 = vmatpush1.bf16.msra.mxu0 %v2384
    %3327 = vmatprep.subr.bf16.mxu0 %v2393
    %3328 = vmatpush1.bf16.msra.mxu0 %v2392
    %3329 = vmatprep.subr.bf16.mxu0 %v2401
    %3330 = vmatpush1.bf16.msra.mxu0 %v2400
    %3331 = vmatprep.subr.bf16.mxu0 %v2409
    %3332 = vmatpush1.bf16.msra.mxu0 %v2408
    %3333 = vmatprep.subr.bf16.mxu0 %v2417
    %3334 = vmatpush1.bf16.msra.mxu0 %v2416
    %3335 = vmatprep.subr.bf16.mxu0 %v2425
    %3336 = vmatpush1.bf16.msra.mxu0 %v2424
    %3337 = vmatprep.subr.bf16.mxu0 %v2433
    %3338 = vmatpush1.bf16.msra.mxu0 %v2432
    %3339 = vmatprep.subr.bf16.mxu0 %v2441
    %3340 = vmatpush1.bf16.msra.mxu0 %v2440
    %3341 = vmatprep.subr.bf16.mxu0 %v2449
    %3342 = vmatpush1.bf16.msra.mxu0 %v2448
    %3343 = vmatprep.subr.bf16.mxu0 %v2457
    %3344 = vmatpush1.bf16.msra.mxu0 %v2456
    %3345 = vmatprep.subr.bf16.mxu0 %v2465
    %3346 = vmatpush1.bf16.msra.mxu0 %v2464
    %3347 = vmatprep.subr.bf16.mxu0 %v2473
    %3348 = vmatpush1.bf16.msra.mxu0 %v2472
    %3349 = vmatprep.mubr.bf16.mxu0 %v1151
    %3350 = vmatmul.mubr.bf16.gmra.mrb[0].mxu0 %v1150
    %v3351 = vpop.f32.mrb[0].mxu0
    %v3352 = vadd.f32 %v3299, %v3351
    %v3353 = vpop.f32.mrb[0].mxu0
    %v3354 = vadd.f32 %v3301, %v3353
    %v3355 = vpop.f32.mrb[0].mxu0
    %v3356 = vadd.f32 %v3303, %v3355
    %v3357 = vpop.f32.mrb[0].mxu0
    %v3358 = vadd.f32 %v3305, %v3357
    %3359 = vmatprep.mubr.bf16.mxu0 %v1155
    %3360 = vmatmul.mubr.bf16.gmra.mrb[0].mxu0 %v1154
    %v3361 = vpop.f32.mrb[0].mxu0
    %v3362 = vadd.f32 %v3309, %v3361
    %v3363 = vpop.f32.mrb[0].mxu0
    %v3364 = vadd.f32 %v3311, %v3363
    %v3365 = vpop.f32.mrb[0].mxu0
    %v3366 = vadd.f32 %v3313, %v3365
    %v3367 = vpop.f32.mrb[0].mxu0
    %v3368 = vadd.f32 %v3315, %v3367
    %3369 = vdwg.mxu0
    %3370 = vmatprep.subr.bf16.mxu0 %v2227
    %3371 = vmatpush1.bf16.msra.mxu0 %v2226
    %3372 = vmatprep.subr.bf16.mxu0 %v2235
    %3373 = vmatpush1.bf16.msra.mxu0 %v2234
    %3374 = vmatprep.subr.bf16.mxu0 %v2243
    %3375 = vmatpush1.bf16.msra.mxu0 %v2242
    %3376 = vmatprep.subr.bf16.mxu0 %v2251
    %3377 = vmatpush1.bf16.msra.mxu0 %v2250
    %3378 = vmatprep.subr.bf16.mxu0 %v2259
    %3379 = vmatpush1.bf16.msra.mxu0 %v2258
    %3380 = vmatprep.subr.bf16.mxu0 %v2267
    %3381 = vmatpush1.bf16.msra.mxu0 %v2266
    %3382 = vmatprep.subr.bf16.mxu0 %v2275
    %3383 = vmatpush1.bf16.msra.mxu0 %v2274
    %3384 = vmatprep.subr.bf16.mxu0 %v2283
    %3385 = vmatpush1.bf16.msra.mxu0 %v2282
    %3386 = vmatprep.subr.bf16.mxu0 %v2291
    %3387 = vmatpush1.bf16.msra.mxu0 %v2290
    %3388 = vmatprep.subr.bf16.mxu0 %v2299
    %3389 = vmatpush1.bf16.msra.mxu0 %v2298
    %3390 = vmatprep.subr.bf16.mxu0 %v2307
    %3391 = vmatpush1.bf16.msra.mxu0 %v2306
    %3392 = vmatprep.subr.bf16.mxu0 %v2315
    %3393 = vmatpush1.bf16.msra.mxu0 %v2314
    %3394 = vmatprep.subr.bf16.mxu0 %v2323
    %3395 = vmatpush1.bf16.msra.mxu0 %v2322
    %3396 = vmatprep.subr.bf16.mxu0 %v2331
    %3397 = vmatpush1.bf16.msra.mxu0 %v2330
    %3398 = vmatprep.subr.bf16.mxu0 %v2339
    %3399 = vmatpush1.bf16.msra.mxu0 %v2338
    %3400 = vmatprep.subr.bf16.mxu0 %v2347
    %3401 = vmatpush1.bf16.msra.mxu0 %v2346
    %3402 = vmatprep.mubr.bf16.mxu0 %v1149
    %3403 = vmatmul.mubr.bf16.gmra.mrb[0].mxu0 %v1148
    %v3404 = vpop.f32.mrb[0].mxu0
    %v3405 = vadd.f32 %v1433, %v3404
    %v3406 = vpop.f32.mrb[0].mxu0
    %v3407 = vadd.f32 %v1437, %v3406
    %v3408 = vpop.f32.mrb[0].mxu0
    %v3409 = vadd.f32 %v1433, %v3408
    %v3410 = vpop.f32.mrb[0].mxu0
    %v3411 = vadd.f32 %v1437, %v3410
    %3412 = vmatprep.mubr.bf16.mxu0 %v1153
    %3413 = vmatmul.mubr.bf16.gmra.mrb[0].mxu0 %v1152
    %v3414 = vpop.f32.mrb[0].mxu0
    %v3415 = vadd.f32 %v1433, %v3414
    %v3416 = vpop.f32.mrb[0].mxu0
    %v3417 = vadd.f32 %v1437, %v3416
    %v3418 = vpop.f32.mrb[0].mxu0
    %v3419 = vadd.f32 %v1433, %v3418
    %v3420 = vpop.f32.mrb[0].mxu0
    %v3421 = vadd.f32 %v1437, %v3420
    %3422 = vdwg.mxu0
    %3423 = vmatprep.subr.bf16.mxu0 %v2355
    %3424 = vmatpush1.bf16.msra.mxu0 %v2354
    %3425 = vmatprep.subr.bf16.mxu0 %v2363
    %3426 = vmatpush1.bf16.msra.mxu0 %v2362
    %3427 = vmatprep.subr.bf16.mxu0 %v2371
    %3428 = vmatpush1.bf16.msra.mxu0 %v2370
    %3429 = vmatprep.subr.bf16.mxu0 %v2379
    %3430 = vmatpush1.bf16.msra.mxu0 %v2378
    %3431 = vmatprep.subr.bf16.mxu0 %v2387
    %3432 = vmatpush1.bf16.msra.mxu0 %v2386
    %3433 = vmatprep.subr.bf16.mxu0 %v2395
    %3434 = vmatpush1.bf16.msra.mxu0 %v2394
    %3435 = vmatprep.subr.bf16.mxu0 %v2403
    %3436 = vmatpush1.bf16.msra.mxu0 %v2402
    %3437 = vmatprep.subr.bf16.mxu0 %v2411
    %3438 = vmatpush1.bf16.msra.mxu0 %v2410
    %3439 = vmatprep.subr.bf16.mxu0 %v2419
    %3440 = vmatpush1.bf16.msra.mxu0 %v2418
    %3441 = vmatprep.subr.bf16.mxu0 %v2427
    %3442 = vmatpush1.bf16.msra.mxu0 %v2426
    %3443 = vmatprep.subr.bf16.mxu0 %v2435
    %3444 = vmatpush1.bf16.msra.mxu0 %v2434
    %3445 = vmatprep.subr.bf16.mxu0 %v2443
    %3446 = vmatpush1.bf16.msra.mxu0 %v2442
    %3447 = vmatprep.subr.bf16.mxu0 %v2451
    %3448 = vmatpush1.bf16.msra.mxu0 %v2450
    %3449 = vmatprep.subr.bf16.mxu0 %v2459
    %3450 = vmatpush1.bf16.msra.mxu0 %v2458
    %3451 = vmatprep.subr.bf16.mxu0 %v2467
    %3452 = vmatpush1.bf16.msra.mxu0 %v2466
    %3453 = vmatprep.subr.bf16.mxu0 %v2475
    %3454 = vmatpush1.bf16.msra.mxu0 %v2474
    %3455 = vmatprep.mubr.bf16.mxu0 %v1151
    %3456 = vmatmul.mubr.bf16.gmra.mrb[0].mxu0 %v1150
    %v3457 = vpop.f32.mrb[0].mxu0
    %v3458 = vadd.f32 %v3405, %v3457
    %v3459 = vpop.f32.mrb[0].mxu0
    %v3460 = vadd.f32 %v3407, %v3459
    %v3461 = vpop.f32.mrb[0].mxu0
    %v3462 = vadd.f32 %v3409, %v3461
    %v3463 = vpop.f32.mrb[0].mxu0
    %v3464 = vadd.f32 %v3411, %v3463
    %3465 = vmatprep.mubr.bf16.mxu0 %v1155
    %3466 = vmatmul.mubr.bf16.gmra.mrb[0].mxu0 %v1154
    %v3467 = vpop.f32.mrb[0].mxu0
    %v3468 = vadd.f32 %v3415, %v3467
    %v3469 = vpop.f32.mrb[0].mxu0
    %v3470 = vadd.f32 %v3417, %v3469
    %v3471 = vpop.f32.mrb[0].mxu0
    %v3472 = vadd.f32 %v3419, %v3471
    %v3473 = vpop.f32.mrb[0].mxu0
    %v3474 = vadd.f32 %v3421, %v3473
    %3475 = vdwg.mxu0
    %3476 = vmatprep.subr.bf16.mxu0 %v2229
    %3477 = vmatpush1.bf16.msra.mxu0 %v2228
    %3478 = vmatprep.subr.bf16.mxu0 %v2237
    %3479 = vmatpush1.bf16.msra.mxu0 %v2236
    %3480 = vmatprep.subr.bf16.mxu0 %v2245
    %3481 = vmatpush1.bf16.msra.mxu0 %v2244
    %3482 = vmatprep.subr.bf16.mxu0 %v2253
    %3483 = vmatpush1.bf16.msra.mxu0 %v2252
    %3484 = vmatprep.subr.bf16.mxu0 %v2261
    %3485 = vmatpush1.bf16.msra.mxu0 %v2260
    %3486 = vmatprep.subr.bf16.mxu0 %v2269
    %3487 = vmatpush1.bf16.msra.mxu0 %v2268
    %3488 = vmatprep.subr.bf16.mxu0 %v2277
    %3489 = vmatpush1.bf16.msra.mxu0 %v2276
    %3490 = vmatprep.subr.bf16.mxu0 %v2285
    %3491 = vmatpush1.bf16.msra.mxu0 %v2284
    %3492 = vmatprep.subr.bf16.mxu0 %v2293
    %3493 = vmatpush1.bf16.msra.mxu0 %v2292
    %3494 = vmatprep.subr.bf16.mxu0 %v2301
    %3495 = vmatpush1.bf16.msra.mxu0 %v2300
    %3496 = vmatprep.subr.bf16.mxu0 %v2309
    %3497 = vmatpush1.bf16.msra.mxu0 %v2308
    %3498 = vmatprep.subr.bf16.mxu0 %v2317
    %3499 = vmatpush1.bf16.msra.mxu0 %v2316
    %3500 = vmatprep.subr.bf16.mxu0 %v2325
    %3501 = vmatpush1.bf16.msra.mxu0 %v2324
    %3502 = vmatprep.subr.bf16.mxu0 %v2333
    %3503 = vmatpush1.bf16.msra.mxu0 %v2332
    %3504 = vmatprep.subr.bf16.mxu0 %v2341
    %3505 = vmatpush1.bf16.msra.mxu0 %v2340
    %3506 = vmatprep.subr.bf16.mxu0 %v2349
    %3507 = vmatpush1.bf16.msra.mxu0 %v2348
    %3508 = vmatprep.mubr.bf16.mxu0 %v1149
    %3509 = vmatmul.mubr.bf16.gmra.mrb[0].mxu0 %v1148
    %v3510 = vpop.f32.mrb[0].mxu0
    %v3511 = vadd.f32 %v1441, %v3510
    %v3512 = vpop.f32.mrb[0].mxu0
    %v3513 = vadd.f32 %v1445, %v3512
    %v3514 = vpop.f32.mrb[0].mxu0
    %v3515 = vadd.f32 %v1441, %v3514
    %v3516 = vpop.f32.mrb[0].mxu0
    %v3517 = vadd.f32 %v1445, %v3516
    %3518 = vmatprep.mubr.bf16.mxu0 %v1153
    %3519 = vmatmul.mubr.bf16.gmra.mrb[0].mxu0 %v1152
    %v3520 = vpop.f32.mrb[0].mxu0
    %v3521 = vadd.f32 %v1441, %v3520
    %v3522 = vpop.f32.mrb[0].mxu0
    %v3523 = vadd.f32 %v1445, %v3522
    %v3524 = vpop.f32.mrb[0].mxu0
    %v3525 = vadd.f32 %v1441, %v3524
    %v3526 = vpop.f32.mrb[0].mxu0
    %v3527 = vadd.f32 %v1445, %v3526
    %3528 = vdwg.mxu0
    %3529 = vmatprep.subr.bf16.mxu0 %v2357
    %3530 = vmatpush1.bf16.msra.mxu0 %v2356
    %3531 = vmatprep.subr.bf16.mxu0 %v2365
    %3532 = vmatpush1.bf16.msra.mxu0 %v2364
    %3533 = vmatprep.subr.bf16.mxu0 %v2373
    %3534 = vmatpush1.bf16.msra.mxu0 %v2372
    %3535 = vmatprep.subr.bf16.mxu0 %v2381
    %3536 = vmatpush1.bf16.msra.mxu0 %v2380
    %3537 = vmatprep.subr.bf16.mxu0 %v2389
    %3538 = vmatpush1.bf16.msra.mxu0 %v2388
    %3539 = vmatprep.subr.bf16.mxu0 %v2397
    %3540 = vmatpush1.bf16.msra.mxu0 %v2396
    %3541 = vmatprep.subr.bf16.mxu0 %v2405
    %3542 = vmatpush1.bf16.msra.mxu0 %v2404
    %3543 = vmatprep.subr.bf16.mxu0 %v2413
    %3544 = vmatpush1.bf16.msra.mxu0 %v2412
    %3545 = vmatprep.subr.bf16.mxu0 %v2421
    %3546 = vmatpush1.bf16.msra.mxu0 %v2420
    %3547 = vmatprep.subr.bf16.mxu0 %v2429
    %3548 = vmatpush1.bf16.msra.mxu0 %v2428
    %3549 = vmatprep.subr.bf16.mxu0 %v2437
    %3550 = vmatpush1.bf16.msra.mxu0 %v2436
    %3551 = vmatprep.subr.bf16.mxu0 %v2445
    %3552 = vmatpush1.bf16.msra.mxu0 %v2444
    %3553 = vmatprep.subr.bf16.mxu0 %v2453
    %3554 = vmatpush1.bf16.msra.mxu0 %v2452
    %3555 = vmatprep.subr.bf16.mxu0 %v2461
    %3556 = vmatpush1.bf16.msra.mxu0 %v2460
    %3557 = vmatprep.subr.bf16.mxu0 %v2469
    %3558 = vmatpush1.bf16.msra.mxu0 %v2468
    %3559 = vmatprep.subr.bf16.mxu0 %v2477
    %3560 = vmatpush1.bf16.msra.mxu0 %v2476
    %3561 = vmatprep.mubr.bf16.mxu0 %v1151
    %3562 = vmatmul.mubr.bf16.gmra.mrb[0].mxu0 %v1150
    %v3563 = vpop.f32.mrb[0].mxu0
    %v3564 = vadd.f32 %v3511, %v3563
    %v3565 = vpop.f32.mrb[0].mxu0
    %v3566 = vadd.f32 %v3513, %v3565
    %v3567 = vpop.f32.mrb[0].mxu0
    %v3568 = vadd.f32 %v3515, %v3567
    %v3569 = vpop.f32.mrb[0].mxu0
    %v3570 = vadd.f32 %v3517, %v3569
    %3571 = vmatprep.mubr.bf16.mxu0 %v1155
    %3572 = vmatmul.mubr.bf16.gmra.mrb[0].mxu0 %v1154
    %v3573 = vpop.f32.mrb[0].mxu0
    %v3574 = vadd.f32 %v3521, %v3573
    %v3575 = vpop.f32.mrb[0].mxu0
    %v3576 = vadd.f32 %v3523, %v3575
    %v3577 = vpop.f32.mrb[0].mxu0
    %v3578 = vadd.f32 %v3525, %v3577
    %v3579 = vpop.f32.mrb[0].mxu0
    %v3580 = vadd.f32 %v3527, %v3579
    %3581 = vdwg.mxu0
    %v3582 = vtanh.pop %v2822
    %v3583 = vtanh.pop %v2824
    %v3584 = vtanh.pop %v2928
    %v3585 = vtanh.pop %v2930
    %v3586 = vtanh.pop %v3034
    %v3587 = vtanh.pop %v3036
    %v3588 = vtanh.pop %v3140
    %v3589 = vtanh.pop %v3142
    %v3590 = vtanh.pop %v2826
    %v3591 = vtanh.pop %v2828
    %v3592 = vtanh.pop %v2932
    %v3593 = vtanh.pop %v2934
    %v3594 = vtanh.pop %v3038
    %v3595 = vtanh.pop %v3040
    %v3596 = vtanh.pop %v3144
    %v3597 = vtanh.pop %v3146
    %v3598 = vtanh.pop %v2832
    %v3599 = vtanh.pop %v2834
    %v3600 = vtanh.pop %v2938
    %v3601 = vtanh.pop %v2940
    %v3602 = vtanh.pop %v3044
    %v3603 = vtanh.pop %v3046
    %v3604 = vtanh.pop %v3150
    %v3605 = vtanh.pop %v3152
    %v3606 = vtanh.pop %v2836
    %v3607 = vtanh.pop %v2838
    %v3608 = vtanh.pop %v2942
    %v3609 = vtanh.pop %v2944
    %v3610 = vtanh.pop %v3048
    %v3611 = vtanh.pop %v3050
    %v3612 = vtanh.pop %v3154
    %v3613 = vtanh.pop %v3156
    %v3614 = vpack.c.bf16 %v3590, %v3582
    %v3615 = vpack.c.bf16 %v3591, %v3583
    %v3616 = vpack.c.bf16 %v3592, %v3584
    %v3617 = vpack.c.bf16 %v3593, %v3585
    %v3618 = vpack.c.bf16 %v3594, %v3586
    %v3619 = vpack.c.bf16 %v3595, %v3587
    %v3620 = vpack.c.bf16 %v3596, %v3588
    %v3621 = vpack.c.bf16 %v3597, %v3589
    %v3622 = vpack.c.bf16 %v3606, %v3598
    %v3623 = vpack.c.bf16 %v3607, %v3599
    %v3624 = vpack.c.bf16 %v3608, %v3600
    %v3625 = vpack.c.bf16 %v3609, %v3601
    %v3626 = vpack.c.bf16 %v3610, %v3602
    %v3627 = vpack.c.bf16 %v3611, %v3603
    %v3628 = vpack.c.bf16 %v3612, %v3604
    %v3629 = vpack.c.bf16 %v3613, %v3605
    %v3630 = vtanh.pop %v3246
    %v3631 = vtanh.pop %v3248
    %v3632 = vtanh.pop %v3352
    %v3633 = vtanh.pop %v3354
    %v3634 = vtanh.pop %v3458
    %v3635 = vtanh.pop %v3460
    %v3636 = vtanh.pop %v3564
    %v3637 = vtanh.pop %v3566
    %v3638 = vtanh.pop %v3250
    %v3639 = vtanh.pop %v3252
    %v3640 = vtanh.pop %v3356
    %v3641 = vtanh.pop %v3358
    %v3642 = vtanh.pop %v3462
    %v3643 = vtanh.pop %v3464
    %v3644 = vtanh.pop %v3568
    %v3645 = vtanh.pop %v3570
    %v3646 = vtanh.pop %v3256
    %v3647 = vtanh.pop %v3258
    %v3648 = vtanh.pop %v3362
    %v3649 = vtanh.pop %v3364
    %v3650 = vtanh.pop %v3468
    %v3651 = vtanh.pop %v3470
    %v3652 = vtanh.pop %v3574
    %v3653 = vtanh.pop %v3576
    %v3654 = vtanh.pop %v3260
    %v3655 = vtanh.pop %v3262
    %v3656 = vtanh.pop %v3366
    %v3657 = vtanh.pop %v3368
    %v3658 = vtanh.pop %v3472
    %v3659 = vtanh.pop %v3474
    %v3660 = vtanh.pop %v3578
    %v3661 = vtanh.pop %v3580
    %v3662 = vpack.c.bf16 %v3638, %v3630
    %v3663 = vpack.c.bf16 %v3639, %v3631
    %v3664 = vpack.c.bf16 %v3640, %v3632
    %v3665 = vpack.c.bf16 %v3641, %v3633
    %v3666 = vpack.c.bf16 %v3642, %v3634
    %v3667 = vpack.c.bf16 %v3643, %v3635
    %v3668 = vpack.c.bf16 %v3644, %v3636
    %v3669 = vpack.c.bf16 %v3645, %v3637
    %v3670 = vpack.c.bf16 %v3654, %v3646
    %v3671 = vpack.c.bf16 %v3655, %v3647
    %v3672 = vpack.c.bf16 %v3656, %v3648
    %v3673 = vpack.c.bf16 %v3657, %v3649
    %v3674 = vpack.c.bf16 %v3658, %v3650
    %v3675 = vpack.c.bf16 %v3659, %v3651
    %v3676 = vpack.c.bf16 %v3660, %v3652
    %v3677 = vpack.c.bf16 %v3661, %v3653
    %v3678 = vld [vmem:[#allocation7] sm:$0xf]
    %v3679 = vld [vmem:[#allocation7 + $0x4] sm:$0xf]
    %v3680 = vld [vmem:[#allocation7 + $0x8] sm:$0xf]
    %v3681 = vld [vmem:[#allocation7 + $0xc] sm:$0xf]
    %v3682 = vld [vmem:[#allocation7 + $0x10] sm:$0xf]
    %v3683 = vld [vmem:[#allocation7 + $0x14] sm:$0xf]
    %v3684 = vld [vmem:[#allocation7 + $0x18] sm:$0xf]
    %v3685 = vld [vmem:[#allocation7 + $0x1c] sm:$0xf]
    %v3686 = vld [vmem:[#allocation7 + $0x20] sm:$0xf]
    %v3687 = vld [vmem:[#allocation7 + $0x24] sm:$0xf]
    %v3688 = vld [vmem:[#allocation7 + $0x28] sm:$0xf]
    %v3689 = vld [vmem:[#allocation7 + $0x2c] sm:$0xf]
    %v3690 = vld [vmem:[#allocation7 + $0x30] sm:$0xf]
    %v3691 = vld [vmem:[#allocation7 + $0x34] sm:$0xf]
    %v3692 = vld [vmem:[#allocation7 + $0x38] sm:$0xf]
    %v3693 = vld [vmem:[#allocation7 + $0x3c] sm:$0xf]
    %v3694 = vld [vmem:[#allocation7 + $0x40] sm:$0xf]
    %v3695 = vld [vmem:[#allocation7 + $0x44] sm:$0xf]
    %v3696 = vld [vmem:[#allocation7 + $0x48] sm:$0xf]
    %v3697 = vld [vmem:[#allocation7 + $0x4c] sm:$0xf]
    %v3698 = vld [vmem:[#allocation7 + $0x50] sm:$0xf]
    %v3699 = vld [vmem:[#allocation7 + $0x54] sm:$0xf]
    %v3700 = vld [vmem:[#allocation7 + $0x58] sm:$0xf]
    %v3701 = vld [vmem:[#allocation7 + $0x5c] sm:$0xf]
    %v3702 = vld [vmem:[#allocation7 + $0x60] sm:$0xf]
    %v3703 = vld [vmem:[#allocation7 + $0x64] sm:$0xf]
    %v3704 = vld [vmem:[#allocation7 + $0x68] sm:$0xf]
    %v3705 = vld [vmem:[#allocation7 + $0x6c] sm:$0xf]
    %v3706 = vld [vmem:[#allocation7 + $0x70] sm:$0xf]
    %v3707 = vld [vmem:[#allocation7 + $0x74] sm:$0xf]
    %v3708 = vld [vmem:[#allocation7 + $0x78] sm:$0xf]
    %v3709 = vld [vmem:[#allocation7 + $0x7c] sm:$0xf]
    %v3710 = vld [vmem:[#allocation7 + $0x80] sm:$0xf]
    %v3711 = vld [vmem:[#allocation7 + $0x84] sm:$0xf]
    %v3712 = vld [vmem:[#allocation7 + $0x88] sm:$0xf]
    %v3713 = vld [vmem:[#allocation7 + $0x8c] sm:$0xf]
    %v3714 = vld [vmem:[#allocation7 + $0x90] sm:$0xf]
    %v3715 = vld [vmem:[#allocation7 + $0x94] sm:$0xf]
    %v3716 = vld [vmem:[#allocation7 + $0x98] sm:$0xf]
    %v3717 = vld [vmem:[#allocation7 + $0x9c] sm:$0xf]
    %v3718 = vld [vmem:[#allocation7 + $0xa0] sm:$0xf]
    %v3719 = vld [vmem:[#allocation7 + $0xa4] sm:$0xf]
    %v3720 = vld [vmem:[#allocation7 + $0xa8] sm:$0xf]
    %v3721 = vld [vmem:[#allocation7 + $0xac] sm:$0xf]
    %v3722 = vld [vmem:[#allocation7 + $0xb0] sm:$0xf]
    %v3723 = vld [vmem:[#allocation7 + $0xb4] sm:$0xf]
    %v3724 = vld [vmem:[#allocation7 + $0xb8] sm:$0xf]
    %v3725 = vld [vmem:[#allocation7 + $0xbc] sm:$0xf]
    %v3726 = vld [vmem:[#allocation7 + $0xc0] sm:$0xf]
    %v3727 = vld [vmem:[#allocation7 + $0xc4] sm:$0xf]
    %v3728 = vld [vmem:[#allocation7 + $0xc8] sm:$0xf]
    %v3729 = vld [vmem:[#allocation7 + $0xcc] sm:$0xf]
    %v3730 = vld [vmem:[#allocation7 + $0xd0] sm:$0xf]
    %v3731 = vld [vmem:[#allocation7 + $0xd4] sm:$0xf]
    %v3732 = vld [vmem:[#allocation7 + $0xd8] sm:$0xf]
    %v3733 = vld [vmem:[#allocation7 + $0xdc] sm:$0xf]
    %v3734 = vld [vmem:[#allocation7 + $0xe0] sm:$0xf]
    %v3735 = vld [vmem:[#allocation7 + $0xe4] sm:$0xf]
    %v3736 = vld [vmem:[#allocation7 + $0xe8] sm:$0xf]
    %v3737 = vld [vmem:[#allocation7 + $0xec] sm:$0xf]
    %v3738 = vld [vmem:[#allocation7 + $0xf0] sm:$0xf]
    %v3739 = vld [vmem:[#allocation7 + $0xf4] sm:$0xf]
    %v3740 = vld [vmem:[#allocation7 + $0xf8] sm:$0xf]
    %v3741 = vld [vmem:[#allocation7 + $0xfc] sm:$0xf]
    %v3742 = vld [vmem:[#allocation7 + $0x100] sm:$0xf]
    %v3743 = vld [vmem:[#allocation7 + $0x104] sm:$0xf]
    %v3744 = vld [vmem:[#allocation7 + $0x108] sm:$0xf]
    %v3745 = vld [vmem:[#allocation7 + $0x10c] sm:$0xf]
    %v3746 = vld [vmem:[#allocation7 + $0x110] sm:$0xf]
    %v3747 = vld [vmem:[#allocation7 + $0x114] sm:$0xf]
    %v3748 = vld [vmem:[#allocation7 + $0x118] sm:$0xf]
    %v3749 = vld [vmem:[#allocation7 + $0x11c] sm:$0xf]
    %v3750 = vld [vmem:[#allocation7 + $0x120] sm:$0xf]
    %v3751 = vld [vmem:[#allocation7 + $0x124] sm:$0xf]
    %v3752 = vld [vmem:[#allocation7 + $0x128] sm:$0xf]
    %v3753 = vld [vmem:[#allocation7 + $0x12c] sm:$0xf]
    %v3754 = vld [vmem:[#allocation7 + $0x130] sm:$0xf]
    %v3755 = vld [vmem:[#allocation7 + $0x134] sm:$0xf]
    %v3756 = vld [vmem:[#allocation7 + $0x138] sm:$0xf]
    %v3757 = vld [vmem:[#allocation7 + $0x13c] sm:$0xf]
    %v3758 = vld [vmem:[#allocation7 + $0x140] sm:$0xf]
    %v3759 = vld [vmem:[#allocation7 + $0x144] sm:$0xf]
    %v3760 = vld [vmem:[#allocation7 + $0x148] sm:$0xf]
    %v3761 = vld [vmem:[#allocation7 + $0x14c] sm:$0xf]
    %v3762 = vld [vmem:[#allocation7 + $0x150] sm:$0xf]
    %v3763 = vld [vmem:[#allocation7 + $0x154] sm:$0xf]
    %v3764 = vld [vmem:[#allocation7 + $0x158] sm:$0xf]
    %v3765 = vld [vmem:[#allocation7 + $0x15c] sm:$0xf]
    %v3766 = vld [vmem:[#allocation7 + $0x160] sm:$0xf]
    %v3767 = vld [vmem:[#allocation7 + $0x164] sm:$0xf]
    %v3768 = vld [vmem:[#allocation7 + $0x168] sm:$0xf]
    %v3769 = vld [vmem:[#allocation7 + $0x16c] sm:$0xf]
    %v3770 = vld [vmem:[#allocation7 + $0x170] sm:$0xf]
    %v3771 = vld [vmem:[#allocation7 + $0x174] sm:$0xf]
    %v3772 = vld [vmem:[#allocation7 + $0x178] sm:$0xf]
    %v3773 = vld [vmem:[#allocation7 + $0x17c] sm:$0xf]
    %v3774 = vld [vmem:[#allocation7 + $0x180] sm:$0xf]
    %v3775 = vld [vmem:[#allocation7 + $0x184] sm:$0xf]
    %v3776 = vld [vmem:[#allocation7 + $0x188] sm:$0xf]
    %v3777 = vld [vmem:[#allocation7 + $0x18c] sm:$0xf]
    %v3778 = vld [vmem:[#allocation7 + $0x190] sm:$0xf]
    %v3779 = vld [vmem:[#allocation7 + $0x194] sm:$0xf]
    %v3780 = vld [vmem:[#allocation7 + $0x198] sm:$0xf]
    %v3781 = vld [vmem:[#allocation7 + $0x19c] sm:$0xf]
    %v3782 = vld [vmem:[#allocation7 + $0x1a0] sm:$0xf]
    %v3783 = vld [vmem:[#allocation7 + $0x1a4] sm:$0xf]
    %v3784 = vld [vmem:[#allocation7 + $0x1a8] sm:$0xf]
    %v3785 = vld [vmem:[#allocation7 + $0x1ac] sm:$0xf]
    %v3786 = vld [vmem:[#allocation7 + $0x1b0] sm:$0xf]
    %v3787 = vld [vmem:[#allocation7 + $0x1b4] sm:$0xf]
    %v3788 = vld [vmem:[#allocation7 + $0x1b8] sm:$0xf]
    %v3789 = vld [vmem:[#allocation7 + $0x1bc] sm:$0xf]
    %v3790 = vld [vmem:[#allocation7 + $0x1c0] sm:$0xf]
    %v3791 = vld [vmem:[#allocation7 + $0x1c4] sm:$0xf]
    %v3792 = vld [vmem:[#allocation7 + $0x1c8] sm:$0xf]
    %v3793 = vld [vmem:[#allocation7 + $0x1cc] sm:$0xf]
    %v3794 = vld [vmem:[#allocation7 + $0x1d0] sm:$0xf]
    %v3795 = vld [vmem:[#allocation7 + $0x1d4] sm:$0xf]
    %v3796 = vld [vmem:[#allocation7 + $0x1d8] sm:$0xf]
    %v3797 = vld [vmem:[#allocation7 + $0x1dc] sm:$0xf]
    %v3798 = vld [vmem:[#allocation7 + $0x1e0] sm:$0xf]
    %v3799 = vld [vmem:[#allocation7 + $0x1e4] sm:$0xf]
    %v3800 = vld [vmem:[#allocation7 + $0x1e8] sm:$0xf]
    %v3801 = vld [vmem:[#allocation7 + $0x1ec] sm:$0xf]
    %v3802 = vld [vmem:[#allocation7 + $0x1f0] sm:$0xf]
    %v3803 = vld [vmem:[#allocation7 + $0x1f4] sm:$0xf]
    %v3804 = vld [vmem:[#allocation7 + $0x1f8] sm:$0xf]
    %v3805 = vld [vmem:[#allocation7 + $0x1fc] sm:$0xf]
    %v3806 = vld [vmem:[%s10] sm:$0x1]
    %v3808 = vlaneseq
    %v3809 = vshrl.u32 %v3808, 7
    %v3810 = vsub.s32 0, %v3809
    %v3811 = vrot.slane %v3806, %v3810
    %v3941 = vunpack.c.l.b16 %v3678
    %v3942 = vunpack.c.l.b16 %v3679
    %v3943 = vunpack.c.l.b16 %v3680
    %v3944 = vunpack.c.l.b16 %v3681
    %v3945 = vunpack.c.l.b16 %v3682
    %v3946 = vunpack.c.l.b16 %v3683
    %v3947 = vunpack.c.l.b16 %v3684
    %v3948 = vunpack.c.l.b16 %v3685
    %v3949 = vunpack.c.l.b16 %v3686
    %v3950 = vunpack.c.l.b16 %v3687
    %v3951 = vunpack.c.l.b16 %v3688
    %v3952 = vunpack.c.l.b16 %v3689
    %v3953 = vunpack.c.l.b16 %v3690
    %v3954 = vunpack.c.l.b16 %v3691
    %v3955 = vunpack.c.l.b16 %v3692
    %v3956 = vunpack.c.l.b16 %v3693
    %v3957 = vunpack.c.l.b16 %v3694
    %v3958 = vunpack.c.l.b16 %v3695
    %v3959 = vunpack.c.l.b16 %v3696
    %v3960 = vunpack.c.l.b16 %v3697
    %v3961 = vunpack.c.l.b16 %v3698
    %v3962 = vunpack.c.l.b16 %v3699
    %v3963 = vunpack.c.l.b16 %v3700
    %v3964 = vunpack.c.l.b16 %v3701
    %v3965 = vunpack.c.l.b16 %v3702
    %v3966 = vunpack.c.l.b16 %v3703
    %v3967 = vunpack.c.l.b16 %v3704
    %v3968 = vunpack.c.l.b16 %v3705
    %v3969 = vunpack.c.l.b16 %v3706
    %v3970 = vunpack.c.l.b16 %v3707
    %v3971 = vunpack.c.l.b16 %v3708
    %v3972 = vunpack.c.l.b16 %v3709
    %v3973 = vunpack.c.l.b16 %v3710
    %v3974 = vunpack.c.l.b16 %v3711
    %v3975 = vunpack.c.l.b16 %v3712
    %v3976 = vunpack.c.l.b16 %v3713
    %v3977 = vunpack.c.l.b16 %v3714
    %v3978 = vunpack.c.l.b16 %v3715
    %v3979 = vunpack.c.l.b16 %v3716
    %v3980 = vunpack.c.l.b16 %v3717
    %v3981 = vunpack.c.l.b16 %v3718
    %v3982 = vunpack.c.l.b16 %v3719
    %v3983 = vunpack.c.l.b16 %v3720
    %v3984 = vunpack.c.l.b16 %v3721
    %v3985 = vunpack.c.l.b16 %v3722
    %v3986 = vunpack.c.l.b16 %v3723
    %v3987 = vunpack.c.l.b16 %v3724
    %v3988 = vunpack.c.l.b16 %v3725
    %v3989 = vunpack.c.l.b16 %v3726
    %v3990 = vunpack.c.l.b16 %v3727
    %v3991 = vunpack.c.l.b16 %v3728
    %v3992 = vunpack.c.l.b16 %v3729
    %v3993 = vunpack.c.l.b16 %v3730
    %v3994 = vunpack.c.l.b16 %v3731
    %v3995 = vunpack.c.l.b16 %v3732
    %v3996 = vunpack.c.l.b16 %v3733
    %v3997 = vunpack.c.l.b16 %v3734
    %v3998 = vunpack.c.l.b16 %v3735
    %v3999 = vunpack.c.l.b16 %v3736
    %v4000 = vunpack.c.l.b16 %v3737
    %v4001 = vunpack.c.l.b16 %v3738
    %v4002 = vunpack.c.l.b16 %v3739
    %v4003 = vunpack.c.l.b16 %v3740
    %v4004 = vunpack.c.l.b16 %v3741
    %v4005 = vunpack.c.l.b16 %v3742
    %v4006 = vunpack.c.l.b16 %v3743
    %v4007 = vunpack.c.l.b16 %v3744
    %v4008 = vunpack.c.l.b16 %v3745
    %v4009 = vunpack.c.l.b16 %v3746
    %v4010 = vunpack.c.l.b16 %v3747
    %v4011 = vunpack.c.l.b16 %v3748
    %v4012 = vunpack.c.l.b16 %v3749
    %v4013 = vunpack.c.l.b16 %v3750
    %v4014 = vunpack.c.l.b16 %v3751
    %v4015 = vunpack.c.l.b16 %v3752
    %v4016 = vunpack.c.l.b16 %v3753
    %v4017 = vunpack.c.l.b16 %v3754
    %v4018 = vunpack.c.l.b16 %v3755
    %v4019 = vunpack.c.l.b16 %v3756
    %v4020 = vunpack.c.l.b16 %v3757
    %v4021 = vunpack.c.l.b16 %v3758
    %v4022 = vunpack.c.l.b16 %v3759
    %v4023 = vunpack.c.l.b16 %v3760
    %v4024 = vunpack.c.l.b16 %v3761
    %v4025 = vunpack.c.l.b16 %v3762
    %v4026 = vunpack.c.l.b16 %v3763
    %v4027 = vunpack.c.l.b16 %v3764
    %v4028 = vunpack.c.l.b16 %v3765
    %v4029 = vunpack.c.l.b16 %v3766
    %v4030 = vunpack.c.l.b16 %v3767
    %v4031 = vunpack.c.l.b16 %v3768
    %v4032 = vunpack.c.l.b16 %v3769
    %v4033 = vunpack.c.l.b16 %v3770
    %v4034 = vunpack.c.l.b16 %v3771
    %v4035 = vunpack.c.l.b16 %v3772
    %v4036 = vunpack.c.l.b16 %v3773
    %v4037 = vunpack.c.l.b16 %v3774
    %v4038 = vunpack.c.l.b16 %v3775
    %v4039 = vunpack.c.l.b16 %v3776
    %v4040 = vunpack.c.l.b16 %v3777
    %v4041 = vunpack.c.l.b16 %v3778
    %v4042 = vunpack.c.l.b16 %v3779
    %v4043 = vunpack.c.l.b16 %v3780
    %v4044 = vunpack.c.l.b16 %v3781
    %v4045 = vunpack.c.l.b16 %v3782
    %v4046 = vunpack.c.l.b16 %v3783
    %v4047 = vunpack.c.l.b16 %v3784
    %v4048 = vunpack.c.l.b16 %v3785
    %v4049 = vunpack.c.l.b16 %v3786
    %v4050 = vunpack.c.l.b16 %v3787
    %v4051 = vunpack.c.l.b16 %v3788
    %v4052 = vunpack.c.l.b16 %v3789
    %v4053 = vunpack.c.l.b16 %v3790
    %v4054 = vunpack.c.l.b16 %v3791
    %v4055 = vunpack.c.l.b16 %v3792
    %v4056 = vunpack.c.l.b16 %v3793
    %v4057 = vunpack.c.l.b16 %v3794
    %v4058 = vunpack.c.l.b16 %v3795
    %v4059 = vunpack.c.l.b16 %v3796
    %v4060 = vunpack.c.l.b16 %v3797
    %v4061 = vunpack.c.l.b16 %v3798
    %v4062 = vunpack.c.l.b16 %v3799
    %v4063 = vunpack.c.l.b16 %v3800
    %v4064 = vunpack.c.l.b16 %v3801
    %v4065 = vunpack.c.l.b16 %v3802
    %v4066 = vunpack.c.l.b16 %v3803
    %v4067 = vunpack.c.l.b16 %v3804
    %v4068 = vunpack.c.l.b16 %v3805
    %v4069 = vpack.c.b16 %v3942, %v3941
    %v4070 = vpack.c.b16 %v3944, %v3943
    %v4071 = vpack.c.b16 %v3946, %v3945
    %v4072 = vpack.c.b16 %v3948, %v3947
    %v4073 = vpack.c.b16 %v3950, %v3949
    %v4074 = vpack.c.b16 %v3952, %v3951
    %v4075 = vpack.c.b16 %v3954, %v3953
    %v4076 = vpack.c.b16 %v3956, %v3955
    %v4077 = vpack.c.b16 %v3958, %v3957
    %v4078 = vpack.c.b16 %v3960, %v3959
    %v4079 = vpack.c.b16 %v3962, %v3961
    %v4080 = vpack.c.b16 %v3964, %v3963
    %v4081 = vpack.c.b16 %v3966, %v3965
    %v4082 = vpack.c.b16 %v3968, %v3967
    %v4083 = vpack.c.b16 %v3970, %v3969
    %v4084 = vpack.c.b16 %v3972, %v3971
    %v4085 = vpack.c.b16 %v3974, %v3973
    %v4086 = vpack.c.b16 %v3976, %v3975
    %v4087 = vpack.c.b16 %v3978, %v3977
    %v4088 = vpack.c.b16 %v3980, %v3979
    %v4089 = vpack.c.b16 %v3982, %v3981
    %v4090 = vpack.c.b16 %v3984, %v3983
    %v4091 = vpack.c.b16 %v3986, %v3985
    %v4092 = vpack.c.b16 %v3988, %v3987
    %v4093 = vpack.c.b16 %v3990, %v3989
    %v4094 = vpack.c.b16 %v3992, %v3991
    %v4095 = vpack.c.b16 %v3994, %v3993
    %v4096 = vpack.c.b16 %v3996, %v3995
    %v4097 = vpack.c.b16 %v3998, %v3997
    %v4098 = vpack.c.b16 %v4000, %v3999
    %v4099 = vpack.c.b16 %v4002, %v4001
    %v4100 = vpack.c.b16 %v4004, %v4003
    %v4101 = vpack.c.b16 %v4006, %v4005
    %v4102 = vpack.c.b16 %v4008, %v4007
    %v4103 = vpack.c.b16 %v4010, %v4009
    %v4104 = vpack.c.b16 %v4012, %v4011
    %v4105 = vpack.c.b16 %v4014, %v4013
    %v4106 = vpack.c.b16 %v4016, %v4015
    %v4107 = vpack.c.b16 %v4018, %v4017
    %v4108 = vpack.c.b16 %v4020, %v4019
    %v4109 = vpack.c.b16 %v4022, %v4021
    %v4110 = vpack.c.b16 %v4024, %v4023
    %v4111 = vpack.c.b16 %v4026, %v4025
    %v4112 = vpack.c.b16 %v4028, %v4027
    %v4113 = vpack.c.b16 %v4030, %v4029
    %v4114 = vpack.c.b16 %v4032, %v4031
    %v4115 = vpack.c.b16 %v4034, %v4033
    %v4116 = vpack.c.b16 %v4036, %v4035
    %v4117 = vpack.c.b16 %v4038, %v4037
    %v4118 = vpack.c.b16 %v4040, %v4039
    %v4119 = vpack.c.b16 %v4042, %v4041
    %v4120 = vpack.c.b16 %v4044, %v4043
    %v4121 = vpack.c.b16 %v4046, %v4045
    %v4122 = vpack.c.b16 %v4048, %v4047
    %v4123 = vpack.c.b16 %v4050, %v4049
    %v4124 = vpack.c.b16 %v4052, %v4051
    %v4125 = vpack.c.b16 %v4054, %v4053
    %v4126 = vpack.c.b16 %v4056, %v4055
    %v4127 = vpack.c.b16 %v4058, %v4057
    %v4128 = vpack.c.b16 %v4060, %v4059
    %v4129 = vpack.c.b16 %v4062, %v4061
    %v4130 = vpack.c.b16 %v4064, %v4063
    %v4131 = vpack.c.b16 %v4066, %v4065
    %v4132 = vpack.c.b16 %v4068, %v4067
    %4197 = vmatprep.subr.bf16.mxu0 0
    %4198 = vmatpush1.bf16.msra.mxu0 %v4069
    %4199 = vmatprep.subr.bf16.mxu0 0
    %4200 = vmatpush1.bf16.msra.mxu0 %v4070
    %4201 = vmatprep.subr.bf16.mxu0 0
    %4202 = vmatpush1.bf16.msra.mxu0 %v4071
    %4203 = vmatprep.subr.bf16.mxu0 0
    %4204 = vmatpush1.bf16.msra.mxu0 %v4072
    %4205 = vmatprep.subr.bf16.mxu0 0
    %4206 = vmatpush1.bf16.msra.mxu0 %v4073
    %4207 = vmatprep.subr.bf16.mxu0 0
    %4208 = vmatpush1.bf16.msra.mxu0 %v4074
    %4209 = vmatprep.subr.bf16.mxu0 0
    %4210 = vmatpush1.bf16.msra.mxu0 %v4075
    %4211 = vmatprep.subr.bf16.mxu0 0
    %4212 = vmatpush1.bf16.msra.mxu0 %v4076
    %4213 = vmatprep.subr.bf16.mxu0 0
    %4214 = vmatpush1.bf16.msra.mxu0 %v4077
    %4215 = vmatprep.subr.bf16.mxu0 0
    %4216 = vmatpush1.bf16.msra.mxu0 %v4078
    %4217 = vmatprep.subr.bf16.mxu0 0
    %4218 = vmatpush1.bf16.msra.mxu0 %v4079
    %4219 = vmatprep.subr.bf16.mxu0 0
    %4220 = vmatpush1.bf16.msra.mxu0 %v4080
    %4221 = vmatprep.subr.bf16.mxu0 0
    %4222 = vmatpush1.bf16.msra.mxu0 %v4081
    %4223 = vmatprep.subr.bf16.mxu0 0
    %4224 = vmatpush1.bf16.msra.mxu0 %v4082
    %4225 = vmatprep.subr.bf16.mxu0 0
    %4226 = vmatpush1.bf16.msra.mxu0 %v4083
    %4227 = vmatprep.subr.bf16.mxu0 0
    %4228 = vmatpush1.bf16.msra.mxu0 %v4084
    %4229 = vmatprep.mubr.bf16.mxu0 %v3615
    %4230 = vmatmul.mubr.bf16.gmra.mrb[0].mxu0 %v3614
    %v4231 = vpop.f32.mrb[0].mxu0
    %v4232 = vadd.f32 %v3811, %v4231
    %v4233 = vpop.f32.mrb[0].mxu0
    %v4234 = vpop.f32.mrb[0].mxu0
    %v4235 = vadd.f32 %v3811, %v4234
    %v4236 = vpop.f32.mrb[0].mxu0
    %4237 = vmatprep.mubr.bf16.mxu0 %v3623
    %4238 = vmatmul.mubr.bf16.gmra.mrb[0].mxu0 %v3622
    %v4239 = vpop.f32.mrb[0].mxu0
    %v4240 = vadd.f32 %v3811, %v4239
    %v4241 = vpop.f32.mrb[0].mxu0
    %v4242 = vpop.f32.mrb[0].mxu0
    %v4243 = vadd.f32 %v3811, %v4242
    %v4244 = vpop.f32.mrb[0].mxu0
    %4245 = vdwg.mxu0
    %4246 = vmatprep.subr.bf16.mxu0 0
    %4247 = vmatpush1.bf16.msra.mxu0 %v4085
    %4248 = vmatprep.subr.bf16.mxu0 0
    %4249 = vmatpush1.bf16.msra.mxu0 %v4086
    %4250 = vmatprep.subr.bf16.mxu0 0
    %4251 = vmatpush1.bf16.msra.mxu0 %v4087
    %4252 = vmatprep.subr.bf16.mxu0 0
    %4253 = vmatpush1.bf16.msra.mxu0 %v4088
    %4254 = vmatprep.subr.bf16.mxu0 0
    %4255 = vmatpush1.bf16.msra.mxu0 %v4089
    %4256 = vmatprep.subr.bf16.mxu0 0
    %4257 = vmatpush1.bf16.msra.mxu0 %v4090
    %4258 = vmatprep.subr.bf16.mxu0 0
    %4259 = vmatpush1.bf16.msra.mxu0 %v4091
    %4260 = vmatprep.subr.bf16.mxu0 0
    %4261 = vmatpush1.bf16.msra.mxu0 %v4092
    %4262 = vmatprep.subr.bf16.mxu0 0
    %4263 = vmatpush1.bf16.msra.mxu0 %v4093
    %4264 = vmatprep.subr.bf16.mxu0 0
    %4265 = vmatpush1.bf16.msra.mxu0 %v4094
    %4266 = vmatprep.subr.bf16.mxu0 0
    %4267 = vmatpush1.bf16.msra.mxu0 %v4095
    %4268 = vmatprep.subr.bf16.mxu0 0
    %4269 = vmatpush1.bf16.msra.mxu0 %v4096
    %4270 = vmatprep.subr.bf16.mxu0 0
    %4271 = vmatpush1.bf16.msra.mxu0 %v4097
    %4272 = vmatprep.subr.bf16.mxu0 0
    %4273 = vmatpush1.bf16.msra.mxu0 %v4098
    %4274 = vmatprep.subr.bf16.mxu0 0
    %4275 = vmatpush1.bf16.msra.mxu0 %v4099
    %4276 = vmatprep.subr.bf16.mxu0 0
    %4277 = vmatpush1.bf16.msra.mxu0 %v4100
    %4278 = vmatprep.mubr.bf16.mxu0 %v3617
    %4279 = vmatmul.mubr.bf16.gmra.mrb[0].mxu0 %v3616
    %v4280 = vpop.f32.mrb[0].mxu0
    %v4281 = vadd.f32 %v4232, %v4280
    %v4282 = vpop.f32.mrb[0].mxu0
    %v4283 = vpop.f32.mrb[0].mxu0
    %v4284 = vadd.f32 %v4235, %v4283
    %v4285 = vpop.f32.mrb[0].mxu0
    %4286 = vmatprep.mubr.bf16.mxu0 %v3625
    %4287 = vmatmul.mubr.bf16.gmra.mrb[0].mxu0 %v3624
    %v4288 = vpop.f32.mrb[0].mxu0
    %v4289 = vadd.f32 %v4240, %v4288
    %v4290 = vpop.f32.mrb[0].mxu0
    %v4291 = vpop.f32.mrb[0].mxu0
    %v4292 = vadd.f32 %v4243, %v4291
    %v4293 = vpop.f32.mrb[0].mxu0
    %4294 = vdwg.mxu0
    %4295 = vmatprep.subr.bf16.mxu0 0
    %4296 = vmatpush1.bf16.msra.mxu0 %v4101
    %4297 = vmatprep.subr.bf16.mxu0 0
    %4298 = vmatpush1.bf16.msra.mxu0 %v4102
    %4299 = vmatprep.subr.bf16.mxu0 0
    %4300 = vmatpush1.bf16.msra.mxu0 %v4103
    %4301 = vmatprep.subr.bf16.mxu0 0
    %4302 = vmatpush1.bf16.msra.mxu0 %v4104
    %4303 = vmatprep.subr.bf16.mxu0 0
    %4304 = vmatpush1.bf16.msra.mxu0 %v4105
    %4305 = vmatprep.subr.bf16.mxu0 0
    %4306 = vmatpush1.bf16.msra.mxu0 %v4106
    %4307 = vmatprep.subr.bf16.mxu0 0
    %4308 = vmatpush1.bf16.msra.mxu0 %v4107
    %4309 = vmatprep.subr.bf16.mxu0 0
    %4310 = vmatpush1.bf16.msra.mxu0 %v4108
    %4311 = vmatprep.subr.bf16.mxu0 0
    %4312 = vmatpush1.bf16.msra.mxu0 %v4109
    %4313 = vmatprep.subr.bf16.mxu0 0
    %4314 = vmatpush1.bf16.msra.mxu0 %v4110
    %4315 = vmatprep.subr.bf16.mxu0 0
    %4316 = vmatpush1.bf16.msra.mxu0 %v4111
    %4317 = vmatprep.subr.bf16.mxu0 0
    %4318 = vmatpush1.bf16.msra.mxu0 %v4112
    %4319 = vmatprep.subr.bf16.mxu0 0
    %4320 = vmatpush1.bf16.msra.mxu0 %v4113
    %4321 = vmatprep.subr.bf16.mxu0 0
    %4322 = vmatpush1.bf16.msra.mxu0 %v4114
    %4323 = vmatprep.subr.bf16.mxu0 0
    %4324 = vmatpush1.bf16.msra.mxu0 %v4115
    %4325 = vmatprep.subr.bf16.mxu0 0
    %4326 = vmatpush1.bf16.msra.mxu0 %v4116
    %4327 = vmatprep.mubr.bf16.mxu0 %v3619
    %4328 = vmatmul.mubr.bf16.gmra.mrb[0].mxu0 %v3618
    %v4329 = vpop.f32.mrb[0].mxu0
    %v4330 = vadd.f32 %v4281, %v4329
    %v4331 = vpop.f32.mrb[0].mxu0
    %v4332 = vpop.f32.mrb[0].mxu0
    %v4333 = vadd.f32 %v4284, %v4332
    %v4334 = vpop.f32.mrb[0].mxu0
    %4335 = vmatprep.mubr.bf16.mxu0 %v3627
    %4336 = vmatmul.mubr.bf16.gmra.mrb[0].mxu0 %v3626
    %v4337 = vpop.f32.mrb[0].mxu0
    %v4338 = vadd.f32 %v4289, %v4337
    %v4339 = vpop.f32.mrb[0].mxu0
    %v4340 = vpop.f32.mrb[0].mxu0
    %v4341 = vadd.f32 %v4292, %v4340
    %v4342 = vpop.f32.mrb[0].mxu0
    %4343 = vdwg.mxu0
    %4344 = vmatprep.subr.bf16.mxu0 0
    %4345 = vmatpush1.bf16.msra.mxu0 %v4117
    %4346 = vmatprep.subr.bf16.mxu0 0
    %4347 = vmatpush1.bf16.msra.mxu0 %v4118
    %4348 = vmatprep.subr.bf16.mxu0 0
    %4349 = vmatpush1.bf16.msra.mxu0 %v4119
    %4350 = vmatprep.subr.bf16.mxu0 0
    %4351 = vmatpush1.bf16.msra.mxu0 %v4120
    %4352 = vmatprep.subr.bf16.mxu0 0
    %4353 = vmatpush1.bf16.msra.mxu0 %v4121
    %4354 = vmatprep.subr.bf16.mxu0 0
    %4355 = vmatpush1.bf16.msra.mxu0 %v4122
    %4356 = vmatprep.subr.bf16.mxu0 0
    %4357 = vmatpush1.bf16.msra.mxu0 %v4123
    %4358 = vmatprep.subr.bf16.mxu0 0
    %4359 = vmatpush1.bf16.msra.mxu0 %v4124
    %4360 = vmatprep.subr.bf16.mxu0 0
    %4361 = vmatpush1.bf16.msra.mxu0 %v4125
    %4362 = vmatprep.subr.bf16.mxu0 0
    %4363 = vmatpush1.bf16.msra.mxu0 %v4126
    %4364 = vmatprep.subr.bf16.mxu0 0
    %4365 = vmatpush1.bf16.msra.mxu0 %v4127
    %4366 = vmatprep.subr.bf16.mxu0 0
    %4367 = vmatpush1.bf16.msra.mxu0 %v4128
    %4368 = vmatprep.subr.bf16.mxu0 0
    %4369 = vmatpush1.bf16.msra.mxu0 %v4129
    %4370 = vmatprep.subr.bf16.mxu0 0
    %4371 = vmatpush1.bf16.msra.mxu0 %v4130
    %4372 = vmatprep.subr.bf16.mxu0 0
    %4373 = vmatpush1.bf16.msra.mxu0 %v4131
    %4374 = vmatprep.subr.bf16.mxu0 0
    %4375 = vmatpush1.bf16.msra.mxu0 %v4132
    %4376 = vmatprep.mubr.bf16.mxu0 %v3621
    %4377 = vmatmul.mubr.bf16.gmra.mrb[0].mxu0 %v3620
    %v4378 = vpop.f32.mrb[0].mxu0
    %v4379 = vadd.f32 %v4330, %v4378
    %v4380 = vpop.f32.mrb[0].mxu0
    %v4381 = vpop.f32.mrb[0].mxu0
    %v4382 = vadd.f32 %v4333, %v4381
    %v4383 = vpop.f32.mrb[0].mxu0
    %4384 = vmatprep.mubr.bf16.mxu0 %v3629
    %4385 = vmatmul.mubr.bf16.gmra.mrb[0].mxu0 %v3628
    %v4386 = vpop.f32.mrb[0].mxu0
    %v4387 = vadd.f32 %v4338, %v4386
    %v4388 = vpop.f32.mrb[0].mxu0
    %v4389 = vpop.f32.mrb[0].mxu0
    %v4390 = vadd.f32 %v4341, %v4389
    %v4391 = vpop.f32.mrb[0].mxu0
    %4392 = vdwg.mxu0
    %4393 = vmatprep.subr.bf16.mxu0 0
    %4394 = vmatpush1.bf16.msra.mxu0 %v4069
    %4395 = vmatprep.subr.bf16.mxu0 0
    %4396 = vmatpush1.bf16.msra.mxu0 %v4070
    %4397 = vmatprep.subr.bf16.mxu0 0
    %4398 = vmatpush1.bf16.msra.mxu0 %v4071
    %4399 = vmatprep.subr.bf16.mxu0 0
    %4400 = vmatpush1.bf16.msra.mxu0 %v4072
    %4401 = vmatprep.subr.bf16.mxu0 0
    %4402 = vmatpush1.bf16.msra.mxu0 %v4073
    %4403 = vmatprep.subr.bf16.mxu0 0
    %4404 = vmatpush1.bf16.msra.mxu0 %v4074
    %4405 = vmatprep.subr.bf16.mxu0 0
    %4406 = vmatpush1.bf16.msra.mxu0 %v4075
    %4407 = vmatprep.subr.bf16.mxu0 0
    %4408 = vmatpush1.bf16.msra.mxu0 %v4076
    %4409 = vmatprep.subr.bf16.mxu0 0
    %4410 = vmatpush1.bf16.msra.mxu0 %v4077
    %4411 = vmatprep.subr.bf16.mxu0 0
    %4412 = vmatpush1.bf16.msra.mxu0 %v4078
    %4413 = vmatprep.subr.bf16.mxu0 0
    %4414 = vmatpush1.bf16.msra.mxu0 %v4079
    %4415 = vmatprep.subr.bf16.mxu0 0
    %4416 = vmatpush1.bf16.msra.mxu0 %v4080
    %4417 = vmatprep.subr.bf16.mxu0 0
    %4418 = vmatpush1.bf16.msra.mxu0 %v4081
    %4419 = vmatprep.subr.bf16.mxu0 0
    %4420 = vmatpush1.bf16.msra.mxu0 %v4082
    %4421 = vmatprep.subr.bf16.mxu0 0
    %4422 = vmatpush1.bf16.msra.mxu0 %v4083
    %4423 = vmatprep.subr.bf16.mxu0 0
    %4424 = vmatpush1.bf16.msra.mxu0 %v4084
    %4425 = vmatprep.mubr.bf16.mxu0 %v3663
    %4426 = vmatmul.mubr.bf16.gmra.mrb[0].mxu0 %v3662
    %v4427 = vpop.f32.mrb[0].mxu0
    %v4428 = vadd.f32 %v3811, %v4427
    %v4429 = vpop.f32.mrb[0].mxu0
    %v4430 = vpop.f32.mrb[0].mxu0
    %v4431 = vadd.f32 %v3811, %v4430
    %v4432 = vpop.f32.mrb[0].mxu0
    %4433 = vmatprep.mubr.bf16.mxu0 %v3671
    %4434 = vmatmul.mubr.bf16.gmra.mrb[0].mxu0 %v3670
    %v4435 = vpop.f32.mrb[0].mxu0
    %v4436 = vadd.f32 %v3811, %v4435
    %v4437 = vpop.f32.mrb[0].mxu0
    %v4438 = vpop.f32.mrb[0].mxu0
    %v4439 = vadd.f32 %v3811, %v4438
    %v4440 = vpop.f32.mrb[0].mxu0
    %4441 = vdwg.mxu0
    %4442 = vmatprep.subr.bf16.mxu0 0
    %4443 = vmatpush1.bf16.msra.mxu0 %v4085
    %4444 = vmatprep.subr.bf16.mxu0 0
    %4445 = vmatpush1.bf16.msra.mxu0 %v4086
    %4446 = vmatprep.subr.bf16.mxu0 0
    %4447 = vmatpush1.bf16.msra.mxu0 %v4087
    %4448 = vmatprep.subr.bf16.mxu0 0
    %4449 = vmatpush1.bf16.msra.mxu0 %v4088
    %4450 = vmatprep.subr.bf16.mxu0 0
    %4451 = vmatpush1.bf16.msra.mxu0 %v4089
    %4452 = vmatprep.subr.bf16.mxu0 0
    %4453 = vmatpush1.bf16.msra.mxu0 %v4090
    %4454 = vmatprep.subr.bf16.mxu0 0
    %4455 = vmatpush1.bf16.msra.mxu0 %v4091
    %4456 = vmatprep.subr.bf16.mxu0 0
    %4457 = vmatpush1.bf16.msra.mxu0 %v4092
    %4458 = vmatprep.subr.bf16.mxu0 0
    %4459 = vmatpush1.bf16.msra.mxu0 %v4093
    %4460 = vmatprep.subr.bf16.mxu0 0
    %4461 = vmatpush1.bf16.msra.mxu0 %v4094
    %4462 = vmatprep.subr.bf16.mxu0 0
    %4463 = vmatpush1.bf16.msra.mxu0 %v4095
    %4464 = vmatprep.subr.bf16.mxu0 0
    %4465 = vmatpush1.bf16.msra.mxu0 %v4096
    %4466 = vmatprep.subr.bf16.mxu0 0
    %4467 = vmatpush1.bf16.msra.mxu0 %v4097
    %4468 = vmatprep.subr.bf16.mxu0 0
    %4469 = vmatpush1.bf16.msra.mxu0 %v4098
    %4470 = vmatprep.subr.bf16.mxu0 0
    %4471 = vmatpush1.bf16.msra.mxu0 %v4099
    %4472 = vmatprep.subr.bf16.mxu0 0
    %4473 = vmatpush1.bf16.msra.mxu0 %v4100
    %4474 = vmatprep.mubr.bf16.mxu0 %v3665
    %4475 = vmatmul.mubr.bf16.gmra.mrb[0].mxu0 %v3664
    %v4476 = vpop.f32.mrb[0].mxu0
    %v4477 = vadd.f32 %v4428, %v4476
    %v4478 = vpop.f32.mrb[0].mxu0
    %v4479 = vpop.f32.mrb[0].mxu0
    %v4480 = vadd.f32 %v4431, %v4479
    %v4481 = vpop.f32.mrb[0].mxu0
    %4482 = vmatprep.mubr.bf16.mxu0 %v3673
    %4483 = vmatmul.mubr.bf16.gmra.mrb[0].mxu0 %v3672
    %v4484 = vpop.f32.mrb[0].mxu0
    %v4485 = vadd.f32 %v4436, %v4484
    %v4486 = vpop.f32.mrb[0].mxu0
    %v4487 = vpop.f32.mrb[0].mxu0
    %v4488 = vadd.f32 %v4439, %v4487
    %v4489 = vpop.f32.mrb[0].mxu0
    %4490 = vdwg.mxu0
    %4491 = vmatprep.subr.bf16.mxu0 0
    %4492 = vmatpush1.bf16.msra.mxu0 %v4101
    %4493 = vmatprep.subr.bf16.mxu0 0
    %4494 = vmatpush1.bf16.msra.mxu0 %v4102
    %4495 = vmatprep.subr.bf16.mxu0 0
    %4496 = vmatpush1.bf16.msra.mxu0 %v4103
    %4497 = vmatprep.subr.bf16.mxu0 0
    %4498 = vmatpush1.bf16.msra.mxu0 %v4104
    %4499 = vmatprep.subr.bf16.mxu0 0
    %4500 = vmatpush1.bf16.msra.mxu0 %v4105
    %4501 = vmatprep.subr.bf16.mxu0 0
    %4502 = vmatpush1.bf16.msra.mxu0 %v4106
    %4503 = vmatprep.subr.bf16.mxu0 0
    %4504 = vmatpush1.bf16.msra.mxu0 %v4107
    %4505 = vmatprep.subr.bf16.mxu0 0
    %4506 = vmatpush1.bf16.msra.mxu0 %v4108
    %4507 = vmatprep.subr.bf16.mxu0 0
    %4508 = vmatpush1.bf16.msra.mxu0 %v4109
    %4509 = vmatprep.subr.bf16.mxu0 0
    %4510 = vmatpush1.bf16.msra.mxu0 %v4110
    %4511 = vmatprep.subr.bf16.mxu0 0
    %4512 = vmatpush1.bf16.msra.mxu0 %v4111
    %4513 = vmatprep.subr.bf16.mxu0 0
    %4514 = vmatpush1.bf16.msra.mxu0 %v4112
    %4515 = vmatprep.subr.bf16.mxu0 0
    %4516 = vmatpush1.bf16.msra.mxu0 %v4113
    %4517 = vmatprep.subr.bf16.mxu0 0
    %4518 = vmatpush1.bf16.msra.mxu0 %v4114
    %4519 = vmatprep.subr.bf16.mxu0 0
    %4520 = vmatpush1.bf16.msra.mxu0 %v4115
    %4521 = vmatprep.subr.bf16.mxu0 0
    %4522 = vmatpush1.bf16.msra.mxu0 %v4116
    %4523 = vmatprep.mubr.bf16.mxu0 %v3667
    %4524 = vmatmul.mubr.bf16.gmra.mrb[0].mxu0 %v3666
    %v4525 = vpop.f32.mrb[0].mxu0
    %v4526 = vadd.f32 %v4477, %v4525
    %v4527 = vpop.f32.mrb[0].mxu0
    %v4528 = vpop.f32.mrb[0].mxu0
    %v4529 = vadd.f32 %v4480, %v4528
    %v4530 = vpop.f32.mrb[0].mxu0
    %4531 = vmatprep.mubr.bf16.mxu0 %v3675
    %4532 = vmatmul.mubr.bf16.gmra.mrb[0].mxu0 %v3674
    %v4533 = vpop.f32.mrb[0].mxu0
    %v4534 = vadd.f32 %v4485, %v4533
    %v4535 = vpop.f32.mrb[0].mxu0
    %v4536 = vpop.f32.mrb[0].mxu0
    %v4537 = vadd.f32 %v4488, %v4536
    %v4538 = vpop.f32.mrb[0].mxu0
    %4539 = vdwg.mxu0
    %4540 = vmatprep.subr.bf16.mxu0 0
    %4541 = vmatpush1.bf16.msra.mxu0 %v4117
    %4542 = vmatprep.subr.bf16.mxu0 0
    %4543 = vmatpush1.bf16.msra.mxu0 %v4118
    %4544 = vmatprep.subr.bf16.mxu0 0
    %4545 = vmatpush1.bf16.msra.mxu0 %v4119
    %4546 = vmatprep.subr.bf16.mxu0 0
    %4547 = vmatpush1.bf16.msra.mxu0 %v4120
    %4548 = vmatprep.subr.bf16.mxu0 0
    %4549 = vmatpush1.bf16.msra.mxu0 %v4121
    %4550 = vmatprep.subr.bf16.mxu0 0
    %4551 = vmatpush1.bf16.msra.mxu0 %v4122
    %4552 = vmatprep.subr.bf16.mxu0 0
    %4553 = vmatpush1.bf16.msra.mxu0 %v4123
    %4554 = vmatprep.subr.bf16.mxu0 0
    %4555 = vmatpush1.bf16.msra.mxu0 %v4124
    %4556 = vmatprep.subr.bf16.mxu0 0
    %4557 = vmatpush1.bf16.msra.mxu0 %v4125
    %4558 = vmatprep.subr.bf16.mxu0 0
    %4559 = vmatpush1.bf16.msra.mxu0 %v4126
    %4560 = vmatprep.subr.bf16.mxu0 0
    %4561 = vmatpush1.bf16.msra.mxu0 %v4127
    %4562 = vmatprep.subr.bf16.mxu0 0
    %4563 = vmatpush1.bf16.msra.mxu0 %v4128
    %4564 = vmatprep.subr.bf16.mxu0 0
    %4565 = vmatpush1.bf16.msra.mxu0 %v4129
    %4566 = vmatprep.subr.bf16.mxu0 0
    %4567 = vmatpush1.bf16.msra.mxu0 %v4130
    %4568 = vmatprep.subr.bf16.mxu0 0
    %4569 = vmatpush1.bf16.msra.mxu0 %v4131
    %4570 = vmatprep.subr.bf16.mxu0 0
    %4571 = vmatpush1.bf16.msra.mxu0 %v4132
    %4572 = vmatprep.mubr.bf16.mxu0 %v3669
    %4573 = vmatmul.mubr.bf16.gmra.mrb[0].mxu0 %v3668
    %v4574 = vpop.f32.mrb[0].mxu0
    %v4575 = vadd.f32 %v4526, %v4574
    %v4576 = vpop.f32.mrb[0].mxu0
    %v4577 = vpop.f32.mrb[0].mxu0
    %v4578 = vadd.f32 %v4529, %v4577
    %v4579 = vpop.f32.mrb[0].mxu0
    %4580 = vmatprep.mubr.bf16.mxu0 %v3677
    %4581 = vmatmul.mubr.bf16.gmra.mrb[0].mxu0 %v3676
    %v4582 = vpop.f32.mrb[0].mxu0
    %v4583 = vadd.f32 %v4534, %v4582
    %v4584 = vpop.f32.mrb[0].mxu0
    %v4585 = vpop.f32.mrb[0].mxu0
    %v4586 = vadd.f32 %v4537, %v4585
    %v4587 = vpop.f32.mrb[0].mxu0
    %4588 = vdwg.mxu0
    %4589 = vst [vmem:[%s11] sm:$0xff] %v4379
    %4590 = vst [vmem:[%s11 + $0x8] sm:$0xff] %v4382
    %4591 = vst [vmem:[%s11 + $0x10] sm:$0xff] %v4387
    %4592 = vst [vmem:[%s11 + $0x18] sm:$0xff] %v4390
    %4593 = vst [vmem:[%s11 + $0x20] sm:$0xff] %v4575
    %4594 = vst [vmem:[%s11 + $0x28] sm:$0xff] %v4578
    %4595 = vst [vmem:[%s11 + $0x30] sm:$0xff] %v4583
    %4596 = vst [vmem:[%s11 + $0x38] sm:$0xff] %v4586
    // Predicated region
    $region62: #{generator_forward.1} parent=1 // pred_check
      _
    $region63: #{generator_forward.1} parent=1 // pred_check_branch
      %4598 = sbr.rel (0) target = $region65
    $region64: #{generator_forward.1} parent=1 // pred_region
      _
    $region65: #{generator_forward.1} parent=1 // pred_fallthru
      _
    // Predicated region
    $region66: #{generator_forward.1} parent=1 // pred_check
      _
    $region67: #{generator_forward.1} parent=1 // pred_check_branch
      %4600 = sbr.rel (0) target = $region69
    $region68: #{generator_forward.1} parent=1 // pred_region
      _
    $region69: #{generator_forward.1} parent=1 // pred_fallthru
      _
    %4601 = vsyncpa [#allocation3], 1
    %4602 = vsyncpa [#allocation5], 1
    %4603 = vsyncpa [#allocation8], 1

</llo_original>
